<compile_context>
chip_gen: v5e
topology: v5e:2x2
jax: 0.10.0
libtpu: 0.0.40
codegen_flags: <defaults>
</compile_context>

<pallas_src>
import functools
import math

import jax
import jax.numpy as jnp
from jax.experimental import pallas as pl
from jax.experimental.pallas import tpu as pltpu


def _mha_topk_kernel(q_ref, k_ref, v_ref,
                     wq_ref, bq_ref, wk_ref, bk_ref, wv_ref, bv_ref,
                     wag_ref, ab_ref, wo_ref, bo_ref, gamma_ref, beta_ref,
                     out_ref,
                     *, nq, nk, h, d_k, d_v, d_model, arr, ln_eps, compute_dtype):
    # q_ref: (B, nq, d_model)   k_ref / v_ref: (B, nk, d_model)
    # wq/wk/wv: (h, d_model, d_k|d_v)  bq/bk/bv: (h, 1, d_k|d_v)   (head-major: ref[j] is a full-tile load)
    # wag: (h, d_v, h) = per-head row blocks of (fc_alpha.weight @ head-block indicator)
    # ab : (1, h)     = nq * (fc_alpha.bias @ head-block indicator)
    # wo : (d_v, d_model)  bo / gamma / beta: (1, d_model)
    B = q_ref.shape[0]
    f32 = jnp.float32
    cdt = compute_dtype
    scale = 1.0 / math.sqrt(d_k)

    q_in = q_ref[...].reshape(B * nq, d_model)          # f32 (also the residual)
    k_in = k_ref[...].reshape(B * nk, d_model)
    v_in = v_ref[...].reshape(B * nk, d_model)
    q_c, k_c, v_c = q_in.astype(cdt), k_in.astype(cdt), v_in.astype(cdt)

    o_heads = []                                        # per-head (B, nq, d_v) f32 values (no scratch stores)
    alpha = jnp.zeros((B, h), f32)

    for j in range(h):                                  # h is small & static -> unrolled
        qh = (jnp.dot(q_c, wq_ref[j].astype(cdt), preferred_element_type=f32)
              + bq_ref[j]).reshape(B, nq, d_k)
        kh = (jnp.dot(k_c, wk_ref[j].astype(cdt), preferred_element_type=f32)
              + bk_ref[j]).reshape(B, nk, d_k)
        vh = (jnp.dot(v_c, wv_ref[j].astype(cdt), preferred_element_type=f32)
              + bv_ref[j]).reshape(B, nk, d_v)

        # scores: batched MXU contraction; f32 accumulation keeps top-k selection stable
        s = jnp.einsum('bqd,bkd->bqk', qh.astype(cdt), kh.astype(cdt),
                       preferred_element_type=f32) * scale          # (B, nq, nk)
        s2 = s.reshape(B * nq, nk)

        # --- top-k mask via per-row threshold: O(arr[j]*nk), no nk^2 intermediate ---
        kk = arr[j]
        if kk >= nk:
            masked = s2                                 # keep everything
        else:
            work = s2
            for _ in range(kk - 1):                     # strip the current max (and exact ties)
                cur = jnp.max(work, axis=-1, keepdims=True)
                work = jnp.where(work == cur, -jnp.inf, work)
            thresh = jnp.max(work, axis=-1, keepdims=True)   # kk-th largest (no ties)
            masked = jnp.where(s2 >= thresh, s2, 0.0)   # att * attmask (non-top-k scores -> 0)

        # softmax over nk, including the zeroed entries (matches the PyTorch module)
        sm = jnp.max(masked, axis=-1, keepdims=True)
        p = jnp.exp(masked - sm)
        attw = p / jnp.sum(p, axis=-1, keepdims=True)
        # TODO(synk): attention dropout (p=0.1) is identity in eval mode and is not implemented.

        o_j = jnp.einsum('bqk,bkd->bqd', attw.reshape(B, nq, nk).astype(cdt), vh.astype(cdt),
                         preferred_element_type=f32)                 # (B, nq, d_v)
        o_heads.append(o_j)

        # fc_alpha is linear: fold (sum over q) and (sum over head-j out-block) into a
        # tiny (d_v, h) matmul -> no dyn readback, no big fc_alpha matmul.
        s_j = jnp.sum(o_j, axis=1)                                   # (B, d_v)
        alpha = alpha + jnp.dot(s_j, wag_ref[j], preferred_element_type=f32)

    alpha = alpha + ab_ref[...]                                      # + nq * (ba @ G)
    am = jnp.max(alpha, axis=-1, keepdims=True)
    ap = jnp.exp(alpha - am)
    soft_alpha = ap / jnp.sum(ap, axis=-1, keepdims=True)            # (B, h)

    out_dyn = jnp.zeros((B, nq, d_v), f32)
    for j in range(h):
        w_j = soft_alpha[:, j:j + 1][:, :, None]                     # (B, 1, 1)
        out_dyn = out_dyn + o_heads[j] * w_j

    # fc_o: d_v -> d_model
    o = jnp.dot(out_dyn.reshape(B * nq, d_v).astype(cdt), wo_ref[...].astype(cdt),
                preferred_element_type=f32) + bo_ref[...]            # (B*nq, d_model)

    # residual + LayerNorm (module dropout = identity in eval), f32 throughout
    x = q_in + o
    mu = jnp.mean(x, axis=-1, keepdims=True)
    xc = x - mu
    var = jnp.mean(xc * xc, axis=-1, keepdims=True)
    y = xc * jax.lax.rsqrt(var + ln_eps)
    y = y * gamma_ref[...] + beta_ref[...]

    out_ref[...] = y.reshape(B, nq, d_model).astype(out_ref.dtype)


# ---------------- VMEM budgeting / tiling heuristics ----------------

def _lane(n):
    return -(-n // 128) * 128


def _sub(n):
    return -(-n // 8) * 8


def _per_batch_vmem_bytes(nq, nk, d_model, h, d_k, d_v):
    """Rough per-batch-element VMEM bytes (f32, lane/sublane padded)."""
    tiles = 2 * (_sub(nq) * _lane(d_model)          # q tile (double-buffered)
                 + 2 * _sub(nk) * _lane(d_model)    # k, v tiles
                 + _sub(nq) * _lane(d_model))       # out tile
    live = (3 * _sub(nq) * _lane(nk)                # scores + top-k work + softmax temps
            + h * _sub(nq) * _lane(d_v)             # per-head outputs held as values
            + 2 * _sub(nq) * _lane(d_model)
            + 2 * _sub(nk) * _lane(d_model))
    return 4 * (tiles + live)


def _weight_vmem_bytes(d_model, h, d_k, d_v):
    w = (2 * h * _sub(d_model) * _lane(d_k)         # wq, wk
         + h * _sub(d_model) * _lane(d_v)           # wv
         + h * _sub(d_v) * _lane(h)                 # waG
         + _sub(d_v) * _lane(d_model)               # wo
         + 8 * _lane(max(d_model, h * max(d_k, d_v))))   # biases / gamma / beta
    # TODO(synk): constant-index blocks are still double-buffered by the pipeline; a
    #             pl.Buffered(1) pipeline_mode or a one-shot prologue DMA would halve this.
    return 4 * 2 * w


def _pick_b_tile(bs, nq, nk, d_model, h, d_k, d_v, budget_bytes=24 * 1024 * 1024):
    """Largest batch tile that (a) leaves >=2 (ideally >=4) grid steps for pipelining /
    v7x dual-TC sharding and (b) fits a conservative VMEM budget (v7x has 64 MiB)."""
    per_b = _per_batch_vmem_bytes(nq, nk, d_model, h, d_k, d_v)
    fixed = _weight_vmem_bytes(d_model, h, d_k, d_v)
    target_steps = 1 if bs == 1 else min(bs, 4)
    best = 1
    for t in range(1, bs + 1):
        if bs % t:
            continue
        if bs // t < target_steps:
            continue
        if fixed + t * per_b <= budget_bytes:
            best = max(best, t)
    return best


def _vmem_limit_bytes(b_tile, nq, nk, d_model, h, d_k, d_v):
    need = (_weight_vmem_bytes(d_model, h, d_k, d_v)
            + b_tile * _per_batch_vmem_bytes(nq, nk, d_model, h, d_k, d_v))
    return int(min(max(2 * need, 32 * 1024 * 1024), 48 * 1024 * 1024))


# ---------------- wrapper ----------------

def mha_topk(queries, keys, values, params, *, d_k, d_v, h, arr,
             b_tile=None, compute_dtype=jnp.float32):
    """MultiHeadAttention_TOPK forward (eval mode).

    params = (wq, bq, wk, bk, wv, bv, wa, ba, wo, bo, gamma, beta), weights in (in, out)
    layout, biases (1, out).  compute_dtype=jnp.bfloat16 casts MXU operands to bf16
    (f32 accumulation; top-k compare / softmax / LayerNorm stay f32).
    """
    # TODO(synk): attention_mask / attention_weights / stateful running-keys paths are
    #             not implemented (default-None, non-stateful inference path only).
    bs, nq, d_model = queries.shape
    nk = keys.shape[1]
    assert d_k == d_v, "module's fc_alpha reshape requires d_k == d_v"
    assert all(int(a) <= nk for a in arr[:h]), "top-k sizes must be <= nk"

    wq, bq, wk, bk, wv, bv, wa, ba, wo, bo, gamma, beta = params

    # ---- one-time wrapper-side weight re-layout / folding (pure layout + linear algebra) ----
    wq3 = wq.reshape(d_model, h, d_k).transpose(1, 0, 2)    # (h, d_model, d_k)
    wk3 = wk.reshape(d_model, h, d_k).transpose(1, 0, 2)
    wv3 = wv.reshape(d_model, h, d_v).transpose(1, 0, 2)
    bq3 = bq.reshape(h, 1, d_k)
    bk3 = bk.reshape(h, 1, d_k)
    bv3 = bv.reshape(h, 1, d_v)
    # fc_alpha is linear and alpha only needs per-head out-block sums of its output, summed
    # over queries:  alpha = sum_q(out_cat) @ (wa @ G) + nq * (ba @ G), G = block indicator.
    # Exact block-column sums (plain f32 adds, no matmul rounding):
    waG = wa.reshape(h * d_v, h, d_k).sum(axis=-1).reshape(h, d_v, h)   # (h, d_v, h)
    ab = float(nq) * ba.reshape(h, d_k).sum(axis=-1).reshape(1, h)      # (1, h)

    if b_tile is None:
        b_tile = _pick_b_tile(bs, nq, nk, d_model, h, d_k, d_v)
    assert bs % b_tile == 0

    kernel = functools.partial(
        _mha_topk_kernel, nq=nq, nk=nk, h=h, d_k=d_k, d_v=d_v, d_model=d_model,
        arr=tuple(int(a) for a in arr[:h]), ln_eps=1e-5, compute_dtype=compute_dtype)

    def const_spec(a):
        shape = a.shape
        return pl.BlockSpec(shape, lambda b: (0,) * len(shape))

    out = pl.pallas_call(
        kernel,
        out_shape=jax.ShapeDtypeStruct((bs, nq, d_model), jnp.float32),
        grid=(bs // b_tile,),
        in_specs=[
            pl.BlockSpec((b_tile, nq, d_model), lambda b: (b, 0, 0)),
            pl.BlockSpec((b_tile, nk, d_model), lambda b: (b, 0, 0)),
            pl.BlockSpec((b_tile, nk, d_model), lambda b: (b, 0, 0)),
            const_spec(wq3), const_spec(bq3), const_spec(wk3), const_spec(bk3),
            const_spec(wv3), const_spec(bv3), const_spec(waG), const_spec(ab),
            const_spec(wo), const_spec(bo), const_spec(gamma), const_spec(beta),
        ],
        out_specs=pl.BlockSpec((b_tile, nq, d_model), lambda b: (b, 0, 0)),
        compiler_params=pltpu.CompilerParams(
            dimension_semantics=("parallel",),
            vmem_limit_bytes=_vmem_limit_bytes(b_tile, nq, nk, d_model, h, d_k, d_v)),
    )(queries, keys, values, wq3, bq3, wk3, bk3, wv3, bv3, waG, ab, wo, bo, gamma, beta)
    return out


# ---------------- params / reference ----------------

def _xavier_uniform(key, fan_out, fan_in):
    limit = math.sqrt(6.0 / (fan_in + fan_out))
    return jax.random.uniform(key, (fan_out, fan_in), jnp.float32, -limit, limit)


def init_params(key, d_model, d_k, d_v, h):
    k1, k2, k3, k4, k5, k6 = jax.random.split(key, 6)
    wq_t = _xavier_uniform(k1, h * d_k, d_model)     # PyTorch (out, in) layout
    wk_t = _xavier_uniform(k2, h * d_k, d_model)
    wv_t = _xavier_uniform(k3, h * d_v, d_model)
    wo_t = _xavier_uniform(k4, d_model, d_v)         # fc_o: Linear(d_v, d_model)
    wa_t = _xavier_uniform(k5, h * d_k, h * d_k)     # fc_alpha (torch default init differs; forward-equivalent)
    ba = jax.random.uniform(k6, (1, h * d_k), jnp.float32, -0.1, 0.1)
    # kernel wrapper wants (in, out) weights and 2-D biases
    return (
        wq_t.T, jnp.zeros((1, h * d_k), jnp.float32),
        wk_t.T, jnp.zeros((1, h * d_k), jnp.float32),
        wv_t.T, jnp.zeros((1, h * d_v), jnp.float32),
        wa_t.T, ba,
        wo_t.T, jnp.zeros((1, d_model), jnp.float32),
        jnp.ones((1, d_model), jnp.float32), jnp.zeros((1, d_model), jnp.float32),
    )


def reference(queries, keys, values, params, *, d_k, d_v, h, arr):
    """Plain-JAX replica of the PyTorch forward (eval mode) for verification."""
    wq, bq, wk, bk, wv, bv, wa, ba, wo, bo, gamma, beta = params
    bs, nq, d_model = queries.shape
    nk = keys.shape[1]
    HP = jax.lax.Precision.HIGHEST
    scale = 1.0 / math.sqrt(d_k)

    q = jnp.einsum('bnd,de->bne', queries, wq, precision=HP) + bq
    k = jnp.einsum('bnd,de->bne', keys, wk, precision=HP) + bk
    v = jnp.einsum('bnd,de->bne', values, wv, precision=HP) + bv
    qh = q.reshape(bs, nq, h, d_k).transpose(0, 2, 1, 3)             # b h q d
    kh = k.reshape(bs, nk, h, d_k).transpose(0, 2, 1, 3)             # b h k d
    vh = v.reshape(bs, nk, h, d_v).transpose(0, 2, 1, 3)             # b h k d
    att = jnp.einsum('bhqd,bhkd->bhqk', qh, kh, precision=HP) * scale
    masks = []
    for i in range(h):
        _, idx = jax.lax.top_k(att[:, i], int(arr[i]))               # (b, nq, k_i)
        m = jnp.sum(jax.nn.one_hot(idx, nk, dtype=att.dtype), axis=-2)
        masks.append(m)
    attmask = jnp.stack(masks, axis=1)                               # (b, h, nq, nk)
    att = att * attmask
    att = jax.nn.softmax(att, axis=-1)
    dyn = jnp.einsum('bhqk,bhkd->bhqd', att, vh, precision=HP)       # b h q dv
    out_cat = dyn.transpose(0, 2, 1, 3).reshape(bs, nq, h * d_v)
    dr = jnp.einsum('bne,ef->bnf', out_cat, wa, precision=HP) + ba
    dr = dr.reshape(bs, nq, h, d_v).transpose(0, 2, 1, 3)
    alpha = jnp.sum(dr, axis=(2, 3))                                 # (b, h)
    soft_alpha = jax.nn.softmax(alpha, axis=-1)
    outd = jnp.sum(dyn * soft_alpha[:, :, None, None], axis=1)       # (b, nq, dv)
    out = jnp.einsum('bnd,de->bne', outd, wo, precision=HP) + bo
    out = queries + out
    mu = jnp.mean(out, -1, keepdims=True)
    var = jnp.mean((out - mu) ** 2, -1, keepdims=True)
    out = (out - mu) / jnp.sqrt(var + 1e-5) * gamma + beta
    return out


if __name__ == "__main__":
    d_model, d_k, d_v, h = 32, 8, 8, 4
    bs, nq, nk = 2, 8, 32
    arr = (1, 9, 16, 25)      # first h entries of the module's default arr; requires nk >= 25

    root = jax.random.PRNGKey(0)
    kp_, kq_, kk_, kv_ = jax.random.split(root, 4)
    params = init_params(kp_, d_model, d_k, d_v, h)

    queries = jax.random.normal(kq_, (bs, nq, d_model), jnp.float32)
    keys = jax.random.normal(kk_, (bs, nk, d_model), jnp.float32)
    values = jax.random.normal(kv_, (bs, nk, d_model), jnp.float32)

    # f32 path: bit-stable top-k selection -> tight check against the plain-JAX reference.
    out = mha_topk(queries, keys, values, params, d_k=d_k, d_v=d_v, h=h, arr=arr)
    out = jax.block_until_ready(out)
    out_ref = reference(queries, keys, values, params, d_k=d_k, d_v=d_v, h=h, arr=arr)
    assert out.shape == (bs, nq, d_model)
    assert jnp.allclose(out, out_ref, atol=2e-3, rtol=2e-3), \
        float(jnp.max(jnp.abs(out - out_ref)))

    # bf16 MXU-operand path (f32 accumulation / top-k / softmax / LayerNorm).  Sanity check
    # only: bf16-rounded scores can legitimately flip top-k picks near the k-th boundary,
    # so it is not bit-comparable to the f32 reference.
    out_bf16 = mha_topk(queries, keys, values, params, d_k=d_k, d_v=d_v, h=h, arr=arr,
                        compute_dtype=jnp.bfloat16)
    out_bf16 = jax.block_until_ready(out_bf16)
    assert out_bf16.shape == (bs, nq, d_model)
    assert bool(jnp.all(jnp.isfinite(out_bf16)))

    print("KERNEL_OK")
</pallas_src>

<mosaic_0001>
module attributes {stable_mosaic.version = 11 : i64} {
  func.func @_mha_topk_kernel(%arg0: i32, %arg1: memref<1x8x32xf32, #tpu.memory_space<vmem>>, %arg2: memref<1x32x32xf32, #tpu.memory_space<vmem>>, %arg3: memref<1x32x32xf32, #tpu.memory_space<vmem>>, %arg4: memref<4x32x8xf32, #tpu.memory_space<vmem>>, %arg5: memref<4x1x8xf32, #tpu.memory_space<vmem>>, %arg6: memref<4x32x8xf32, #tpu.memory_space<vmem>>, %arg7: memref<4x1x8xf32, #tpu.memory_space<vmem>>, %arg8: memref<4x32x8xf32, #tpu.memory_space<vmem>>, %arg9: memref<4x1x8xf32, #tpu.memory_space<vmem>>, %arg10: memref<4x8x4xf32, #tpu.memory_space<vmem>>, %arg11: memref<1x4xf32, #tpu.memory_space<vmem>>, %arg12: memref<8x32xf32, #tpu.memory_space<vmem>>, %arg13: memref<1x32xf32, #tpu.memory_space<vmem>>, %arg14: memref<1x32xf32, #tpu.memory_space<vmem>>, %arg15: memref<1x32xf32, #tpu.memory_space<vmem>>, %arg16: memref<1x8x32xf32, #tpu.memory_space<vmem>>) attributes {dimension_semantics = [#tpu.dimension_semantics<parallel>], iteration_bounds = array<i64: 2>, scalar_prefetch = 0 : i64, scratch_operands = 0 : i64, tpu.core_type = #tpu.core_type<tc>, window_params = [{transform_indices = @transform_0, window_bounds = array<i64: 1, 8, 32>}, {transform_indices = @transform_1, window_bounds = array<i64: 1, 32, 32>}, {transform_indices = @transform_2, window_bounds = array<i64: 1, 32, 32>}, {pipeline_mode = #tpu.pipeline_mode<synchronous>, transform_indices = @transform_3, window_bounds = array<i64: 4, 32, 8>}, {pipeline_mode = #tpu.pipeline_mode<synchronous>, transform_indices = @transform_4, window_bounds = array<i64: 4, 1, 8>}, {pipeline_mode = #tpu.pipeline_mode<synchronous>, transform_indices = @transform_5, window_bounds = array<i64: 4, 32, 8>}, {pipeline_mode = #tpu.pipeline_mode<synchronous>, transform_indices = @transform_6, window_bounds = array<i64: 4, 1, 8>}, {pipeline_mode = #tpu.pipeline_mode<synchronous>, transform_indices = @transform_7, window_bounds = array<i64: 4, 32, 8>}, {pipeline_mode = #tpu.pipeline_mode<synchronous>, transform_indices = @transform_8, window_bounds = array<i64: 4, 1, 8>}, {pipeline_mode = #tpu.pipeline_mode<synchronous>, transform_indices = @transform_9, window_bounds = array<i64: 4, 8, 4>}, {pipeline_mode = #tpu.pipeline_mode<synchronous>, transform_indices = @transform_10, window_bounds = array<i64: 1, 4>}, {pipeline_mode = #tpu.pipeline_mode<synchronous>, transform_indices = @transform_11, window_bounds = array<i64: 8, 32>}, {pipeline_mode = #tpu.pipeline_mode<synchronous>, transform_indices = @transform_12, window_bounds = array<i64: 1, 32>}, {pipeline_mode = #tpu.pipeline_mode<synchronous>, transform_indices = @transform_13, window_bounds = array<i64: 1, 32>}, {pipeline_mode = #tpu.pipeline_mode<synchronous>, transform_indices = @transform_14, window_bounds = array<i64: 1, 32>}, {transform_indices = @transform_15, window_bounds = array<i64: 1, 8, 32>}]} {
    %c0 = arith.constant 0 : index
    %c0_0 = arith.constant 0 : index
    %c0_1 = arith.constant 0 : index
    %0 = vector.load %arg1[%c0, %c0_0, %c0_1] : memref<1x8x32xf32, #tpu.memory_space<vmem>>, vector<1x8x32xf32>
    %1 = vector.shape_cast %0 : vector<1x8x32xf32> to vector<8x32xf32>
    %c0_2 = arith.constant 0 : index
    %c0_3 = arith.constant 0 : index
    %c0_4 = arith.constant 0 : index
    %2 = vector.load %arg2[%c0_2, %c0_3, %c0_4] : memref<1x32x32xf32, #tpu.memory_space<vmem>>, vector<1x32x32xf32>
    %3 = vector.shape_cast %2 : vector<1x32x32xf32> to vector<32x32xf32>
    %c0_5 = arith.constant 0 : index
    %c0_6 = arith.constant 0 : index
    %c0_7 = arith.constant 0 : index
    %4 = vector.load %arg3[%c0_5, %c0_6, %c0_7] : memref<1x32x32xf32, #tpu.memory_space<vmem>>, vector<1x32x32xf32>
    %5 = vector.shape_cast %4 : vector<1x32x32xf32> to vector<32x32xf32>
    %cst = arith.constant 0.000000e+00 : f32
    %6 = vector.broadcast %cst : f32 to vector<1x4xf32>
    %c0_8 = arith.constant 0 : index
    %c0_9 = arith.constant 0 : index
    %c0_10 = arith.constant 0 : index
    %7 = vector.load %arg4[%c0_8, %c0_9, %c0_10] : memref<4x32x8xf32, #tpu.memory_space<vmem>>, vector<1x32x8xf32>
    %8 = vector.shape_cast %7 : vector<1x32x8xf32> to vector<32x8xf32>
    %cst_11 = arith.constant dense<0.000000e+00> : vector<8x8xf32>
    %9 = tpu.matmul %1, %8, %cst_11 {dimension_numbers = #tpu.dot_dimension_numbers<[1], [0], [0], [1], [0, 0, 1, 1], [], []>} : vector<8x32xf32>, vector<32x8xf32>, vector<8x8xf32> -> vector<8x8xf32>
    %c0_12 = arith.constant 0 : index
    %c0_13 = arith.constant 0 : index
    %c0_14 = arith.constant 0 : index
    %10 = vector.load %arg5[%c0_12, %c0_13, %c0_14] : memref<4x1x8xf32, #tpu.memory_space<vmem>>, vector<1x1x8xf32>
    %11 = vector.shape_cast %10 : vector<1x1x8xf32> to vector<1x8xf32>
    %12 = vector.broadcast %11 : vector<1x8xf32> to vector<8x8xf32>
    %13 = arith.addf %9, %12 : vector<8x8xf32>
    %14 = vector.shape_cast %13 : vector<8x8xf32> to vector<1x8x8xf32>
    %c0_15 = arith.constant 0 : index
    %c0_16 = arith.constant 0 : index
    %c0_17 = arith.constant 0 : index
    %15 = vector.load %arg6[%c0_15, %c0_16, %c0_17] : memref<4x32x8xf32, #tpu.memory_space<vmem>>, vector<1x32x8xf32>
    %16 = vector.shape_cast %15 : vector<1x32x8xf32> to vector<32x8xf32>
    %cst_18 = arith.constant dense<0.000000e+00> : vector<32x8xf32>
    %17 = tpu.matmul %3, %16, %cst_18 {dimension_numbers = #tpu.dot_dimension_numbers<[1], [0], [0], [1], [0, 0, 1, 1], [], []>} : vector<32x32xf32>, vector<32x8xf32>, vector<32x8xf32> -> vector<32x8xf32>
    %c0_19 = arith.constant 0 : index
    %c0_20 = arith.constant 0 : index
    %c0_21 = arith.constant 0 : index
    %18 = vector.load %arg7[%c0_19, %c0_20, %c0_21] : memref<4x1x8xf32, #tpu.memory_space<vmem>>, vector<1x1x8xf32>
    %19 = vector.shape_cast %18 : vector<1x1x8xf32> to vector<1x8xf32>
    %20 = vector.broadcast %19 : vector<1x8xf32> to vector<32x8xf32>
    %21 = arith.addf %17, %20 : vector<32x8xf32>
    %22 = vector.shape_cast %21 : vector<32x8xf32> to vector<1x32x8xf32>
    %c0_22 = arith.constant 0 : index
    %c0_23 = arith.constant 0 : index
    %c0_24 = arith.constant 0 : index
    %23 = vector.load %arg8[%c0_22, %c0_23, %c0_24] : memref<4x32x8xf32, #tpu.memory_space<vmem>>, vector<1x32x8xf32>
    %24 = vector.shape_cast %23 : vector<1x32x8xf32> to vector<32x8xf32>
    %cst_25 = arith.constant dense<0.000000e+00> : vector<32x8xf32>
    %25 = tpu.matmul %5, %24, %cst_25 {dimension_numbers = #tpu.dot_dimension_numbers<[1], [0], [0], [1], [0, 0, 1, 1], [], []>} : vector<32x32xf32>, vector<32x8xf32>, vector<32x8xf32> -> vector<32x8xf32>
    %c0_26 = arith.constant 0 : index
    %c0_27 = arith.constant 0 : index
    %c0_28 = arith.constant 0 : index
    %26 = vector.load %arg9[%c0_26, %c0_27, %c0_28] : memref<4x1x8xf32, #tpu.memory_space<vmem>>, vector<1x1x8xf32>
    %27 = vector.shape_cast %26 : vector<1x1x8xf32> to vector<1x8xf32>
    %28 = vector.broadcast %27 : vector<1x8xf32> to vector<32x8xf32>
    %29 = arith.addf %25, %28 : vector<32x8xf32>
    %30 = vector.shape_cast %29 : vector<32x8xf32> to vector<1x32x8xf32>
    "tpu.trace_start"() <{level = 10 : i32, message = "bqd,bkd->bqk"}> : () -> ()
    %cst_29 = arith.constant dense<0.000000e+00> : vector<1x8x32xf32>
    %31 = tpu.matmul %14, %22, %cst_29 {dimension_numbers = #tpu.dot_dimension_numbers<[2], [2], [1], [1], [0, 0, 0, 1, 1, 1], [0], [0]>} : vector<1x8x8xf32>, vector<1x32x8xf32>, vector<1x8x32xf32> -> vector<1x8x32xf32>
    "tpu.trace_stop"() : () -> ()
    %cst_30 = arith.constant 0.353553385 : f32
    %32 = vector.broadcast %cst_30 : f32 to vector<1x8x32xf32>
    %33 = arith.mulf %31, %32 : vector<1x8x32xf32>
    %34 = vector.shape_cast %33 : vector<1x8x32xf32> to vector<8x32xf32>
    %cst_31 = arith.constant dense<0xFF800000> : vector<8xf32>
    %35 = vector.multi_reduction <maximumf>, %34, %cst_31 [1] : vector<8x32xf32> to vector<8xf32>
    %36 = vector.shape_cast %35 : vector<8xf32> to vector<8x1xf32>
    %37 = vector.broadcast %36 : vector<8x1xf32> to vector<8x32xf32>
    %38 = arith.cmpf oge, %34, %37 : vector<8x32xf32>
    %cst_32 = arith.constant 0.000000e+00 : f32
    %39 = vector.broadcast %cst_32 : f32 to vector<8x32xf32>
    %40 = arith.select %38, %34, %39 : vector<8x32xi1>, vector<8x32xf32>
    %cst_33 = arith.constant dense<0xFF800000> : vector<8xf32>
    %41 = vector.multi_reduction <maximumf>, %40, %cst_33 [1] : vector<8x32xf32> to vector<8xf32>
    %42 = vector.shape_cast %41 : vector<8xf32> to vector<8x1xf32>
    %43 = vector.broadcast %42 : vector<8x1xf32> to vector<8x32xf32>
    %44 = arith.subf %40, %43 : vector<8x32xf32>
    %45 = math.exp %44 : vector<8x32xf32>
    %cst_34 = arith.constant dense<0.000000e+00> : vector<8xf32>
    %46 = vector.multi_reduction <add>, %45, %cst_34 [1] : vector<8x32xf32> to vector<8xf32>
    %47 = vector.shape_cast %46 : vector<8xf32> to vector<8x1xf32>
    %48 = vector.broadcast %47 : vector<8x1xf32> to vector<8x32xf32>
    %49 = arith.divf %45, %48 : vector<8x32xf32>
    %50 = vector.shape_cast %49 : vector<8x32xf32> to vector<1x8x32xf32>
    "tpu.trace_start"() <{level = 10 : i32, message = "bqk,bkd->bqd"}> : () -> ()
    %cst_35 = arith.constant dense<0.000000e+00> : vector<1x8x8xf32>
    %51 = tpu.matmul %50, %30, %cst_35 {dimension_numbers = #tpu.dot_dimension_numbers<[2], [1], [1], [2], [0, 0, 0, 1, 1, 2], [0], [0]>} : vector<1x8x32xf32>, vector<1x32x8xf32>, vector<1x8x8xf32> -> vector<1x8x8xf32>
    "tpu.trace_stop"() : () -> ()
    %cst_36 = arith.constant dense<0.000000e+00> : vector<1x8xf32>
    %52 = vector.multi_reduction <add>, %51, %cst_36 [1] : vector<1x8x8xf32> to vector<1x8xf32>
    %c0_37 = arith.constant 0 : index
    %c0_38 = arith.constant 0 : index
    %c0_39 = arith.constant 0 : index
    %53 = vector.load %arg10[%c0_37, %c0_38, %c0_39] : memref<4x8x4xf32, #tpu.memory_space<vmem>>, vector<1x8x4xf32>
    %54 = vector.shape_cast %53 : vector<1x8x4xf32> to vector<8x4xf32>
    %cst_40 = arith.constant dense<0.000000e+00> : vector<1x4xf32>
    %55 = tpu.matmul %52, %54, %cst_40 {dimension_numbers = #tpu.dot_dimension_numbers<[1], [0], [0], [1], [0, 0, 1, 1], [], []>} : vector<1x8xf32>, vector<8x4xf32>, vector<1x4xf32> -> vector<1x4xf32>
    %56 = arith.addf %6, %55 : vector<1x4xf32>
    %c1 = arith.constant 1 : index
    %c0_41 = arith.constant 0 : index
    %c0_42 = arith.constant 0 : index
    %57 = vector.load %arg4[%c1, %c0_41, %c0_42] : memref<4x32x8xf32, #tpu.memory_space<vmem>>, vector<1x32x8xf32>
    %58 = vector.shape_cast %57 : vector<1x32x8xf32> to vector<32x8xf32>
    %cst_43 = arith.constant dense<0.000000e+00> : vector<8x8xf32>
    %59 = tpu.matmul %1, %58, %cst_43 {dimension_numbers = #tpu.dot_dimension_numbers<[1], [0], [0], [1], [0, 0, 1, 1], [], []>} : vector<8x32xf32>, vector<32x8xf32>, vector<8x8xf32> -> vector<8x8xf32>
    %c1_44 = arith.constant 1 : index
    %c0_45 = arith.constant 0 : index
    %c0_46 = arith.constant 0 : index
    %60 = vector.load %arg5[%c1_44, %c0_45, %c0_46] : memref<4x1x8xf32, #tpu.memory_space<vmem>>, vector<1x1x8xf32>
    %61 = vector.shape_cast %60 : vector<1x1x8xf32> to vector<1x8xf32>
    %62 = vector.broadcast %61 : vector<1x8xf32> to vector<8x8xf32>
    %63 = arith.addf %59, %62 : vector<8x8xf32>
    %64 = vector.shape_cast %63 : vector<8x8xf32> to vector<1x8x8xf32>
    %c1_47 = arith.constant 1 : index
    %c0_48 = arith.constant 0 : index
    %c0_49 = arith.constant 0 : index
    %65 = vector.load %arg6[%c1_47, %c0_48, %c0_49] : memref<4x32x8xf32, #tpu.memory_space<vmem>>, vector<1x32x8xf32>
    %66 = vector.shape_cast %65 : vector<1x32x8xf32> to vector<32x8xf32>
    %cst_50 = arith.constant dense<0.000000e+00> : vector<32x8xf32>
    %67 = tpu.matmul %3, %66, %cst_50 {dimension_numbers = #tpu.dot_dimension_numbers<[1], [0], [0], [1], [0, 0, 1, 1], [], []>} : vector<32x32xf32>, vector<32x8xf32>, vector<32x8xf32> -> vector<32x8xf32>
    %c1_51 = arith.constant 1 : index
    %c0_52 = arith.constant 0 : index
    %c0_53 = arith.constant 0 : index
    %68 = vector.load %arg7[%c1_51, %c0_52, %c0_53] : memref<4x1x8xf32, #tpu.memory_space<vmem>>, vector<1x1x8xf32>
    %69 = vector.shape_cast %68 : vector<1x1x8xf32> to vector<1x8xf32>
    %70 = vector.broadcast %69 : vector<1x8xf32> to vector<32x8xf32>
    %71 = arith.addf %67, %70 : vector<32x8xf32>
    %72 = vector.shape_cast %71 : vector<32x8xf32> to vector<1x32x8xf32>
    %c1_54 = arith.constant 1 : index
    %c0_55 = arith.constant 0 : index
    %c0_56 = arith.constant 0 : index
    %73 = vector.load %arg8[%c1_54, %c0_55, %c0_56] : memref<4x32x8xf32, #tpu.memory_space<vmem>>, vector<1x32x8xf32>
    %74 = vector.shape_cast %73 : vector<1x32x8xf32> to vector<32x8xf32>
    %cst_57 = arith.constant dense<0.000000e+00> : vector<32x8xf32>
    %75 = tpu.matmul %5, %74, %cst_57 {dimension_numbers = #tpu.dot_dimension_numbers<[1], [0], [0], [1], [0, 0, 1, 1], [], []>} : vector<32x32xf32>, vector<32x8xf32>, vector<32x8xf32> -> vector<32x8xf32>
    %c1_58 = arith.constant 1 : index
    %c0_59 = arith.constant 0 : index
    %c0_60 = arith.constant 0 : index
    %76 = vector.load %arg9[%c1_58, %c0_59, %c0_60] : memref<4x1x8xf32, #tpu.memory_space<vmem>>, vector<1x1x8xf32>
    %77 = vector.shape_cast %76 : vector<1x1x8xf32> to vector<1x8xf32>
    %78 = vector.broadcast %77 : vector<1x8xf32> to vector<32x8xf32>
    %79 = arith.addf %75, %78 : vector<32x8xf32>
    %80 = vector.shape_cast %79 : vector<32x8xf32> to vector<1x32x8xf32>
    "tpu.trace_start"() <{level = 10 : i32, message = "bqd,bkd->bqk"}> : () -> ()
    %cst_61 = arith.constant dense<0.000000e+00> : vector<1x8x32xf32>
    %81 = tpu.matmul %64, %72, %cst_61 {dimension_numbers = #tpu.dot_dimension_numbers<[2], [2], [1], [1], [0, 0, 0, 1, 1, 1], [0], [0]>} : vector<1x8x8xf32>, vector<1x32x8xf32>, vector<1x8x32xf32> -> vector<1x8x32xf32>
    "tpu.trace_stop"() : () -> ()
    %cst_62 = arith.constant 0.353553385 : f32
    %82 = vector.broadcast %cst_62 : f32 to vector<1x8x32xf32>
    %83 = arith.mulf %81, %82 : vector<1x8x32xf32>
    %84 = vector.shape_cast %83 : vector<1x8x32xf32> to vector<8x32xf32>
    %cst_63 = arith.constant dense<0xFF800000> : vector<8xf32>
    %85 = vector.multi_reduction <maximumf>, %84, %cst_63 [1] : vector<8x32xf32> to vector<8xf32>
    %86 = vector.shape_cast %85 : vector<8xf32> to vector<8x1xf32>
    %87 = vector.broadcast %86 : vector<8x1xf32> to vector<8x32xf32>
    %88 = arith.cmpf oeq, %84, %87 : vector<8x32xf32>
    %cst_64 = arith.constant 0xFF800000 : f32
    %89 = vector.broadcast %cst_64 : f32 to vector<8x32xf32>
    %90 = arith.select %88, %89, %84 : vector<8x32xi1>, vector<8x32xf32>
    %cst_65 = arith.constant dense<0xFF800000> : vector<8xf32>
    %91 = vector.multi_reduction <maximumf>, %90, %cst_65 [1] : vector<8x32xf32> to vector<8xf32>
    %92 = vector.shape_cast %91 : vector<8xf32> to vector<8x1xf32>
    %93 = vector.broadcast %92 : vector<8x1xf32> to vector<8x32xf32>
    %94 = arith.cmpf oeq, %90, %93 : vector<8x32xf32>
    %cst_66 = arith.constant 0xFF800000 : f32
    %95 = vector.broadcast %cst_66 : f32 to vector<8x32xf32>
    %96 = arith.select %94, %95, %90 : vector<8x32xi1>, vector<8x32xf32>
    %cst_67 = arith.constant dense<0xFF800000> : vector<8xf32>
    %97 = vector.multi_reduction <maximumf>, %96, %cst_67 [1] : vector<8x32xf32> to vector<8xf32>
    %98 = vector.shape_cast %97 : vector<8xf32> to vector<8x1xf32>
    %99 = vector.broadcast %98 : vector<8x1xf32> to vector<8x32xf32>
    %100 = arith.cmpf oeq, %96, %99 : vector<8x32xf32>
    %cst_68 = arith.constant 0xFF800000 : f32
    %101 = vector.broadcast %cst_68 : f32 to vector<8x32xf32>
    %102 = arith.select %100, %101, %96 : vector<8x32xi1>, vector<8x32xf32>
    %cst_69 = arith.constant dense<0xFF800000> : vector<8xf32>
    %103 = vector.multi_reduction <maximumf>, %102, %cst_69 [1] : vector<8x32xf32> to vector<8xf32>
    %104 = vector.shape_cast %103 : vector<8xf32> to vector<8x1xf32>
    %105 = vector.broadcast %104 : vector<8x1xf32> to vector<8x32xf32>
    %106 = arith.cmpf oeq, %102, %105 : vector<8x32xf32>
    %cst_70 = arith.constant 0xFF800000 : f32
    %107 = vector.broadcast %cst_70 : f32 to vector<8x32xf32>
    %108 = arith.select %106, %107, %102 : vector<8x32xi1>, vector<8x32xf32>
    %cst_71 = arith.constant dense<0xFF800000> : vector<8xf32>
    %109 = vector.multi_reduction <maximumf>, %108, %cst_71 [1] : vector<8x32xf32> to vector<8xf32>
    %110 = vector.shape_cast %109 : vector<8xf32> to vector<8x1xf32>
    %111 = vector.broadcast %110 : vector<8x1xf32> to vector<8x32xf32>
    %112 = arith.cmpf oeq, %108, %111 : vector<8x32xf32>
    %cst_72 = arith.constant 0xFF800000 : f32
    %113 = vector.broadcast %cst_72 : f32 to vector<8x32xf32>
    %114 = arith.select %112, %113, %108 : vector<8x32xi1>, vector<8x32xf32>
    %cst_73 = arith.constant dense<0xFF800000> : vector<8xf32>
    %115 = vector.multi_reduction <maximumf>, %114, %cst_73 [1] : vector<8x32xf32> to vector<8xf32>
    %116 = vector.shape_cast %115 : vector<8xf32> to vector<8x1xf32>
    %117 = vector.broadcast %116 : vector<8x1xf32> to vector<8x32xf32>
    %118 = arith.cmpf oeq, %114, %117 : vector<8x32xf32>
    %cst_74 = arith.constant 0xFF800000 : f32
    %119 = vector.broadcast %cst_74 : f32 to vector<8x32xf32>
    %120 = arith.select %118, %119, %114 : vector<8x32xi1>, vector<8x32xf32>
    %cst_75 = arith.constant dense<0xFF800000> : vector<8xf32>
    %121 = vector.multi_reduction <maximumf>, %120, %cst_75 [1] : vector<8x32xf32> to vector<8xf32>
    %122 = vector.shape_cast %121 : vector<8xf32> to vector<8x1xf32>
    %123 = vector.broadcast %122 : vector<8x1xf32> to vector<8x32xf32>
    %124 = arith.cmpf oeq, %120, %123 : vector<8x32xf32>
    %cst_76 = arith.constant 0xFF800000 : f32
    %125 = vector.broadcast %cst_76 : f32 to vector<8x32xf32>
    %126 = arith.select %124, %125, %120 : vector<8x32xi1>, vector<8x32xf32>
    %cst_77 = arith.constant dense<0xFF800000> : vector<8xf32>
    %127 = vector.multi_reduction <maximumf>, %126, %cst_77 [1] : vector<8x32xf32> to vector<8xf32>
    %128 = vector.shape_cast %127 : vector<8xf32> to vector<8x1xf32>
    %129 = vector.broadcast %128 : vector<8x1xf32> to vector<8x32xf32>
    %130 = arith.cmpf oeq, %126, %129 : vector<8x32xf32>
    %cst_78 = arith.constant 0xFF800000 : f32
    %131 = vector.broadcast %cst_78 : f32 to vector<8x32xf32>
    %132 = arith.select %130, %131, %126 : vector<8x32xi1>, vector<8x32xf32>
    %cst_79 = arith.constant dense<0xFF800000> : vector<8xf32>
    %133 = vector.multi_reduction <maximumf>, %132, %cst_79 [1] : vector<8x32xf32> to vector<8xf32>
    %134 = vector.shape_cast %133 : vector<8xf32> to vector<8x1xf32>
    %135 = vector.broadcast %134 : vector<8x1xf32> to vector<8x32xf32>
    %136 = arith.cmpf oge, %84, %135 : vector<8x32xf32>
    %cst_80 = arith.constant 0.000000e+00 : f32
    %137 = vector.broadcast %cst_80 : f32 to vector<8x32xf32>
    %138 = arith.select %136, %84, %137 : vector<8x32xi1>, vector<8x32xf32>
    %cst_81 = arith.constant dense<0xFF800000> : vector<8xf32>
    %139 = vector.multi_reduction <maximumf>, %138, %cst_81 [1] : vector<8x32xf32> to vector<8xf32>
    %140 = vector.shape_cast %139 : vector<8xf32> to vector<8x1xf32>
    %141 = vector.broadcast %140 : vector<8x1xf32> to vector<8x32xf32>
    %142 = arith.subf %138, %141 : vector<8x32xf32>
    %143 = math.exp %142 : vector<8x32xf32>
    %cst_82 = arith.constant dense<0.000000e+00> : vector<8xf32>
    %144 = vector.multi_reduction <add>, %143, %cst_82 [1] : vector<8x32xf32> to vector<8xf32>
    %145 = vector.shape_cast %144 : vector<8xf32> to vector<8x1xf32>
    %146 = vector.broadcast %145 : vector<8x1xf32> to vector<8x32xf32>
    %147 = arith.divf %143, %146 : vector<8x32xf32>
    %148 = vector.shape_cast %147 : vector<8x32xf32> to vector<1x8x32xf32>
    "tpu.trace_start"() <{level = 10 : i32, message = "bqk,bkd->bqd"}> : () -> ()
    %cst_83 = arith.constant dense<0.000000e+00> : vector<1x8x8xf32>
    %149 = tpu.matmul %148, %80, %cst_83 {dimension_numbers = #tpu.dot_dimension_numbers<[2], [1], [1], [2], [0, 0, 0, 1, 1, 2], [0], [0]>} : vector<1x8x32xf32>, vector<1x32x8xf32>, vector<1x8x8xf32> -> vector<1x8x8xf32>
    "tpu.trace_stop"() : () -> ()
    %cst_84 = arith.constant dense<0.000000e+00> : vector<1x8xf32>
    %150 = vector.multi_reduction <add>, %149, %cst_84 [1] : vector<1x8x8xf32> to vector<1x8xf32>
    %c1_85 = arith.constant 1 : index
    %c0_86 = arith.constant 0 : index
    %c0_87 = arith.constant 0 : index
    %151 = vector.load %arg10[%c1_85, %c0_86, %c0_87] : memref<4x8x4xf32, #tpu.memory_space<vmem>>, vector<1x8x4xf32>
    %152 = vector.shape_cast %151 : vector<1x8x4xf32> to vector<8x4xf32>
    %cst_88 = arith.constant dense<0.000000e+00> : vector<1x4xf32>
    %153 = tpu.matmul %150, %152, %cst_88 {dimension_numbers = #tpu.dot_dimension_numbers<[1], [0], [0], [1], [0, 0, 1, 1], [], []>} : vector<1x8xf32>, vector<8x4xf32>, vector<1x4xf32> -> vector<1x4xf32>
    %154 = arith.addf %56, %153 : vector<1x4xf32>
    %c2 = arith.constant 2 : index
    %c0_89 = arith.constant 0 : index
    %c0_90 = arith.constant 0 : index
    %155 = vector.load %arg4[%c2, %c0_89, %c0_90] : memref<4x32x8xf32, #tpu.memory_space<vmem>>, vector<1x32x8xf32>
    %156 = vector.shape_cast %155 : vector<1x32x8xf32> to vector<32x8xf32>
    %cst_91 = arith.constant dense<0.000000e+00> : vector<8x8xf32>
    %157 = tpu.matmul %1, %156, %cst_91 {dimension_numbers = #tpu.dot_dimension_numbers<[1], [0], [0], [1], [0, 0, 1, 1], [], []>} : vector<8x32xf32>, vector<32x8xf32>, vector<8x8xf32> -> vector<8x8xf32>
    %c2_92 = arith.constant 2 : index
    %c0_93 = arith.constant 0 : index
    %c0_94 = arith.constant 0 : index
    %158 = vector.load %arg5[%c2_92, %c0_93, %c0_94] : memref<4x1x8xf32, #tpu.memory_space<vmem>>, vector<1x1x8xf32>
    %159 = vector.shape_cast %158 : vector<1x1x8xf32> to vector<1x8xf32>
    %160 = vector.broadcast %159 : vector<1x8xf32> to vector<8x8xf32>
    %161 = arith.addf %157, %160 : vector<8x8xf32>
    %162 = vector.shape_cast %161 : vector<8x8xf32> to vector<1x8x8xf32>
    %c2_95 = arith.constant 2 : index
    %c0_96 = arith.constant 0 : index
    %c0_97 = arith.constant 0 : index
    %163 = vector.load %arg6[%c2_95, %c0_96, %c0_97] : memref<4x32x8xf32, #tpu.memory_space<vmem>>, vector<1x32x8xf32>
    %164 = vector.shape_cast %163 : vector<1x32x8xf32> to vector<32x8xf32>
    %cst_98 = arith.constant dense<0.000000e+00> : vector<32x8xf32>
    %165 = tpu.matmul %3, %164, %cst_98 {dimension_numbers = #tpu.dot_dimension_numbers<[1], [0], [0], [1], [0, 0, 1, 1], [], []>} : vector<32x32xf32>, vector<32x8xf32>, vector<32x8xf32> -> vector<32x8xf32>
    %c2_99 = arith.constant 2 : index
    %c0_100 = arith.constant 0 : index
    %c0_101 = arith.constant 0 : index
    %166 = vector.load %arg7[%c2_99, %c0_100, %c0_101] : memref<4x1x8xf32, #tpu.memory_space<vmem>>, vector<1x1x8xf32>
    %167 = vector.shape_cast %166 : vector<1x1x8xf32> to vector<1x8xf32>
    %168 = vector.broadcast %167 : vector<1x8xf32> to vector<32x8xf32>
    %169 = arith.addf %165, %168 : vector<32x8xf32>
    %170 = vector.shape_cast %169 : vector<32x8xf32> to vector<1x32x8xf32>
    %c2_102 = arith.constant 2 : index
    %c0_103 = arith.constant 0 : index
    %c0_104 = arith.constant 0 : index
    %171 = vector.load %arg8[%c2_102, %c0_103, %c0_104] : memref<4x32x8xf32, #tpu.memory_space<vmem>>, vector<1x32x8xf32>
    %172 = vector.shape_cast %171 : vector<1x32x8xf32> to vector<32x8xf32>
    %cst_105 = arith.constant dense<0.000000e+00> : vector<32x8xf32>
    %173 = tpu.matmul %5, %172, %cst_105 {dimension_numbers = #tpu.dot_dimension_numbers<[1], [0], [0], [1], [0, 0, 1, 1], [], []>} : vector<32x32xf32>, vector<32x8xf32>, vector<32x8xf32> -> vector<32x8xf32>
    %c2_106 = arith.constant 2 : index
    %c0_107 = arith.constant 0 : index
    %c0_108 = arith.constant 0 : index
    %174 = vector.load %arg9[%c2_106, %c0_107, %c0_108] : memref<4x1x8xf32, #tpu.memory_space<vmem>>, vector<1x1x8xf32>
    %175 = vector.shape_cast %174 : vector<1x1x8xf32> to vector<1x8xf32>
    %176 = vector.broadcast %175 : vector<1x8xf32> to vector<32x8xf32>
    %177 = arith.addf %173, %176 : vector<32x8xf32>
    %178 = vector.shape_cast %177 : vector<32x8xf32> to vector<1x32x8xf32>
    "tpu.trace_start"() <{level = 10 : i32, message = "bqd,bkd->bqk"}> : () -> ()
    %cst_109 = arith.constant dense<0.000000e+00> : vector<1x8x32xf32>
    %179 = tpu.matmul %162, %170, %cst_109 {dimension_numbers = #tpu.dot_dimension_numbers<[2], [2], [1], [1], [0, 0, 0, 1, 1, 1], [0], [0]>} : vector<1x8x8xf32>, vector<1x32x8xf32>, vector<1x8x32xf32> -> vector<1x8x32xf32>
    "tpu.trace_stop"() : () -> ()
    %cst_110 = arith.constant 0.353553385 : f32
    %180 = vector.broadcast %cst_110 : f32 to vector<1x8x32xf32>
    %181 = arith.mulf %179, %180 : vector<1x8x32xf32>
    %182 = vector.shape_cast %181 : vector<1x8x32xf32> to vector<8x32xf32>
    %cst_111 = arith.constant dense<0xFF800000> : vector<8xf32>
    %183 = vector.multi_reduction <maximumf>, %182, %cst_111 [1] : vector<8x32xf32> to vector<8xf32>
    %184 = vector.shape_cast %183 : vector<8xf32> to vector<8x1xf32>
    %185 = vector.broadcast %184 : vector<8x1xf32> to vector<8x32xf32>
    %186 = arith.cmpf oeq, %182, %185 : vector<8x32xf32>
    %cst_112 = arith.constant 0xFF800000 : f32
    %187 = vector.broadcast %cst_112 : f32 to vector<8x32xf32>
    %188 = arith.select %186, %187, %182 : vector<8x32xi1>, vector<8x32xf32>
    %cst_113 = arith.constant dense<0xFF800000> : vector<8xf32>
    %189 = vector.multi_reduction <maximumf>, %188, %cst_113 [1] : vector<8x32xf32> to vector<8xf32>
    %190 = vector.shape_cast %189 : vector<8xf32> to vector<8x1xf32>
    %191 = vector.broadcast %190 : vector<8x1xf32> to vector<8x32xf32>
    %192 = arith.cmpf oeq, %188, %191 : vector<8x32xf32>
    %cst_114 = arith.constant 0xFF800000 : f32
    %193 = vector.broadcast %cst_114 : f32 to vector<8x32xf32>
    %194 = arith.select %192, %193, %188 : vector<8x32xi1>, vector<8x32xf32>
    %cst_115 = arith.constant dense<0xFF800000> : vector<8xf32>
    %195 = vector.multi_reduction <maximumf>, %194, %cst_115 [1] : vector<8x32xf32> to vector<8xf32>
    %196 = vector.shape_cast %195 : vector<8xf32> to vector<8x1xf32>
    %197 = vector.broadcast %196 : vector<8x1xf32> to vector<8x32xf32>
    %198 = arith.cmpf oeq, %194, %197 : vector<8x32xf32>
    %cst_116 = arith.constant 0xFF800000 : f32
    %199 = vector.broadcast %cst_116 : f32 to vector<8x32xf32>
    %200 = arith.select %198, %199, %194 : vector<8x32xi1>, vector<8x32xf32>
    %cst_117 = arith.constant dense<0xFF800000> : vector<8xf32>
    %201 = vector.multi_reduction <maximumf>, %200, %cst_117 [1] : vector<8x32xf32> to vector<8xf32>
    %202 = vector.shape_cast %201 : vector<8xf32> to vector<8x1xf32>
    %203 = vector.broadcast %202 : vector<8x1xf32> to vector<8x32xf32>
    %204 = arith.cmpf oeq, %200, %203 : vector<8x32xf32>
    %cst_118 = arith.constant 0xFF800000 : f32
    %205 = vector.broadcast %cst_118 : f32 to vector<8x32xf32>
    %206 = arith.select %204, %205, %200 : vector<8x32xi1>, vector<8x32xf32>
    %cst_119 = arith.constant dense<0xFF800000> : vector<8xf32>
    %207 = vector.multi_reduction <maximumf>, %206, %cst_119 [1] : vector<8x32xf32> to vector<8xf32>
    %208 = vector.shape_cast %207 : vector<8xf32> to vector<8x1xf32>
    %209 = vector.broadcast %208 : vector<8x1xf32> to vector<8x32xf32>
    %210 = arith.cmpf oeq, %206, %209 : vector<8x32xf32>
    %cst_120 = arith.constant 0xFF800000 : f32
    %211 = vector.broadcast %cst_120 : f32 to vector<8x32xf32>
    %212 = arith.select %210, %211, %206 : vector<8x32xi1>, vector<8x32xf32>
    %cst_121 = arith.constant dense<0xFF800000> : vector<8xf32>
    %213 = vector.multi_reduction <maximumf>, %212, %cst_121 [1] : vector<8x32xf32> to vector<8xf32>
    %214 = vector.shape_cast %213 : vector<8xf32> to vector<8x1xf32>
    %215 = vector.broadcast %214 : vector<8x1xf32> to vector<8x32xf32>
    %216 = arith.cmpf oeq, %212, %215 : vector<8x32xf32>
    %cst_122 = arith.constant 0xFF800000 : f32
    %217 = vector.broadcast %cst_122 : f32 to vector<8x32xf32>
    %218 = arith.select %216, %217, %212 : vector<8x32xi1>, vector<8x32xf32>
    %cst_123 = arith.constant dense<0xFF800000> : vector<8xf32>
    %219 = vector.multi_reduction <maximumf>, %218, %cst_123 [1] : vector<8x32xf32> to vector<8xf32>
    %220 = vector.shape_cast %219 : vector<8xf32> to vector<8x1xf32>
    %221 = vector.broadcast %220 : vector<8x1xf32> to vector<8x32xf32>
    %222 = arith.cmpf oeq, %218, %221 : vector<8x32xf32>
    %cst_124 = arith.constant 0xFF800000 : f32
    %223 = vector.broadcast %cst_124 : f32 to vector<8x32xf32>
    %224 = arith.select %222, %223, %218 : vector<8x32xi1>, vector<8x32xf32>
    %cst_125 = arith.constant dense<0xFF800000> : vector<8xf32>
    %225 = vector.multi_reduction <maximumf>, %224, %cst_125 [1] : vector<8x32xf32> to vector<8xf32>
    %226 = vector.shape_cast %225 : vector<8xf32> to vector<8x1xf32>
    %227 = vector.broadcast %226 : vector<8x1xf32> to vector<8x32xf32>
    %228 = arith.cmpf oeq, %224, %227 : vector<8x32xf32>
    %cst_126 = arith.constant 0xFF800000 : f32
    %229 = vector.broadcast %cst_126 : f32 to vector<8x32xf32>
    %230 = arith.select %228, %229, %224 : vector<8x32xi1>, vector<8x32xf32>
    %cst_127 = arith.constant dense<0xFF800000> : vector<8xf32>
    %231 = vector.multi_reduction <maximumf>, %230, %cst_127 [1] : vector<8x32xf32> to vector<8xf32>
    %232 = vector.shape_cast %231 : vector<8xf32> to vector<8x1xf32>
    %233 = vector.broadcast %232 : vector<8x1xf32> to vector<8x32xf32>
    %234 = arith.cmpf oeq, %230, %233 : vector<8x32xf32>
    %cst_128 = arith.constant 0xFF800000 : f32
    %235 = vector.broadcast %cst_128 : f32 to vector<8x32xf32>
    %236 = arith.select %234, %235, %230 : vector<8x32xi1>, vector<8x32xf32>
    %cst_129 = arith.constant dense<0xFF800000> : vector<8xf32>
    %237 = vector.multi_reduction <maximumf>, %236, %cst_129 [1] : vector<8x32xf32> to vector<8xf32>
    %238 = vector.shape_cast %237 : vector<8xf32> to vector<8x1xf32>
    %239 = vector.broadcast %238 : vector<8x1xf32> to vector<8x32xf32>
    %240 = arith.cmpf oeq, %236, %239 : vector<8x32xf32>
    %cst_130 = arith.constant 0xFF800000 : f32
    %241 = vector.broadcast %cst_130 : f32 to vector<8x32xf32>
    %242 = arith.select %240, %241, %236 : vector<8x32xi1>, vector<8x32xf32>
    %cst_131 = arith.constant dense<0xFF800000> : vector<8xf32>
    %243 = vector.multi_reduction <maximumf>, %242, %cst_131 [1] : vector<8x32xf32> to vector<8xf32>
    %244 = vector.shape_cast %243 : vector<8xf32> to vector<8x1xf32>
    %245 = vector.broadcast %244 : vector<8x1xf32> to vector<8x32xf32>
    %246 = arith.cmpf oeq, %242, %245 : vector<8x32xf32>
    %cst_132 = arith.constant 0xFF800000 : f32
    %247 = vector.broadcast %cst_132 : f32 to vector<8x32xf32>
    %248 = arith.select %246, %247, %242 : vector<8x32xi1>, vector<8x32xf32>
    %cst_133 = arith.constant dense<0xFF800000> : vector<8xf32>
    %249 = vector.multi_reduction <maximumf>, %248, %cst_133 [1] : vector<8x32xf32> to vector<8xf32>
    %250 = vector.shape_cast %249 : vector<8xf32> to vector<8x1xf32>
    %251 = vector.broadcast %250 : vector<8x1xf32> to vector<8x32xf32>
    %252 = arith.cmpf oeq, %248, %251 : vector<8x32xf32>
    %cst_134 = arith.constant 0xFF800000 : f32
    %253 = vector.broadcast %cst_134 : f32 to vector<8x32xf32>
    %254 = arith.select %252, %253, %248 : vector<8x32xi1>, vector<8x32xf32>
    %cst_135 = arith.constant dense<0xFF800000> : vector<8xf32>
    %255 = vector.multi_reduction <maximumf>, %254, %cst_135 [1] : vector<8x32xf32> to vector<8xf32>
    %256 = vector.shape_cast %255 : vector<8xf32> to vector<8x1xf32>
    %257 = vector.broadcast %256 : vector<8x1xf32> to vector<8x32xf32>
    %258 = arith.cmpf oeq, %254, %257 : vector<8x32xf32>
    %cst_136 = arith.constant 0xFF800000 : f32
    %259 = vector.broadcast %cst_136 : f32 to vector<8x32xf32>
    %260 = arith.select %258, %259, %254 : vector<8x32xi1>, vector<8x32xf32>
    %cst_137 = arith.constant dense<0xFF800000> : vector<8xf32>
    %261 = vector.multi_reduction <maximumf>, %260, %cst_137 [1] : vector<8x32xf32> to vector<8xf32>
    %262 = vector.shape_cast %261 : vector<8xf32> to vector<8x1xf32>
    %263 = vector.broadcast %262 : vector<8x1xf32> to vector<8x32xf32>
    %264 = arith.cmpf oeq, %260, %263 : vector<8x32xf32>
    %cst_138 = arith.constant 0xFF800000 : f32
    %265 = vector.broadcast %cst_138 : f32 to vector<8x32xf32>
    %266 = arith.select %264, %265, %260 : vector<8x32xi1>, vector<8x32xf32>
    %cst_139 = arith.constant dense<0xFF800000> : vector<8xf32>
    %267 = vector.multi_reduction <maximumf>, %266, %cst_139 [1] : vector<8x32xf32> to vector<8xf32>
    %268 = vector.shape_cast %267 : vector<8xf32> to vector<8x1xf32>
    %269 = vector.broadcast %268 : vector<8x1xf32> to vector<8x32xf32>
    %270 = arith.cmpf oeq, %266, %269 : vector<8x32xf32>
    %cst_140 = arith.constant 0xFF800000 : f32
    %271 = vector.broadcast %cst_140 : f32 to vector<8x32xf32>
    %272 = arith.select %270, %271, %266 : vector<8x32xi1>, vector<8x32xf32>
    %cst_141 = arith.constant dense<0xFF800000> : vector<8xf32>
    %273 = vector.multi_reduction <maximumf>, %272, %cst_141 [1] : vector<8x32xf32> to vector<8xf32>
    %274 = vector.shape_cast %273 : vector<8xf32> to vector<8x1xf32>
    %275 = vector.broadcast %274 : vector<8x1xf32> to vector<8x32xf32>
    %276 = arith.cmpf oge, %182, %275 : vector<8x32xf32>
    %cst_142 = arith.constant 0.000000e+00 : f32
    %277 = vector.broadcast %cst_142 : f32 to vector<8x32xf32>
    %278 = arith.select %276, %182, %277 : vector<8x32xi1>, vector<8x32xf32>
    %cst_143 = arith.constant dense<0xFF800000> : vector<8xf32>
    %279 = vector.multi_reduction <maximumf>, %278, %cst_143 [1] : vector<8x32xf32> to vector<8xf32>
    %280 = vector.shape_cast %279 : vector<8xf32> to vector<8x1xf32>
    %281 = vector.broadcast %280 : vector<8x1xf32> to vector<8x32xf32>
    %282 = arith.subf %278, %281 : vector<8x32xf32>
    %283 = math.exp %282 : vector<8x32xf32>
    %cst_144 = arith.constant dense<0.000000e+00> : vector<8xf32>
    %284 = vector.multi_reduction <add>, %283, %cst_144 [1] : vector<8x32xf32> to vector<8xf32>
    %285 = vector.shape_cast %284 : vector<8xf32> to vector<8x1xf32>
    %286 = vector.broadcast %285 : vector<8x1xf32> to vector<8x32xf32>
    %287 = arith.divf %283, %286 : vector<8x32xf32>
    %288 = vector.shape_cast %287 : vector<8x32xf32> to vector<1x8x32xf32>
    "tpu.trace_start"() <{level = 10 : i32, message = "bqk,bkd->bqd"}> : () -> ()
    %cst_145 = arith.constant dense<0.000000e+00> : vector<1x8x8xf32>
    %289 = tpu.matmul %288, %178, %cst_145 {dimension_numbers = #tpu.dot_dimension_numbers<[2], [1], [1], [2], [0, 0, 0, 1, 1, 2], [0], [0]>} : vector<1x8x32xf32>, vector<1x32x8xf32>, vector<1x8x8xf32> -> vector<1x8x8xf32>
    "tpu.trace_stop"() : () -> ()
    %cst_146 = arith.constant dense<0.000000e+00> : vector<1x8xf32>
    %290 = vector.multi_reduction <add>, %289, %cst_146 [1] : vector<1x8x8xf32> to vector<1x8xf32>
    %c2_147 = arith.constant 2 : index
    %c0_148 = arith.constant 0 : index
    %c0_149 = arith.constant 0 : index
    %291 = vector.load %arg10[%c2_147, %c0_148, %c0_149] : memref<4x8x4xf32, #tpu.memory_space<vmem>>, vector<1x8x4xf32>
    %292 = vector.shape_cast %291 : vector<1x8x4xf32> to vector<8x4xf32>
    %cst_150 = arith.constant dense<0.000000e+00> : vector<1x4xf32>
    %293 = tpu.matmul %290, %292, %cst_150 {dimension_numbers = #tpu.dot_dimension_numbers<[1], [0], [0], [1], [0, 0, 1, 1], [], []>} : vector<1x8xf32>, vector<8x4xf32>, vector<1x4xf32> -> vector<1x4xf32>
    %294 = arith.addf %154, %293 : vector<1x4xf32>
    %c3 = arith.constant 3 : index
    %c0_151 = arith.constant 0 : index
    %c0_152 = arith.constant 0 : index
    %295 = vector.load %arg4[%c3, %c0_151, %c0_152] : memref<4x32x8xf32, #tpu.memory_space<vmem>>, vector<1x32x8xf32>
    %296 = vector.shape_cast %295 : vector<1x32x8xf32> to vector<32x8xf32>
    %cst_153 = arith.constant dense<0.000000e+00> : vector<8x8xf32>
    %297 = tpu.matmul %1, %296, %cst_153 {dimension_numbers = #tpu.dot_dimension_numbers<[1], [0], [0], [1], [0, 0, 1, 1], [], []>} : vector<8x32xf32>, vector<32x8xf32>, vector<8x8xf32> -> vector<8x8xf32>
    %c3_154 = arith.constant 3 : index
    %c0_155 = arith.constant 0 : index
    %c0_156 = arith.constant 0 : index
    %298 = vector.load %arg5[%c3_154, %c0_155, %c0_156] : memref<4x1x8xf32, #tpu.memory_space<vmem>>, vector<1x1x8xf32>
    %299 = vector.shape_cast %298 : vector<1x1x8xf32> to vector<1x8xf32>
    %300 = vector.broadcast %299 : vector<1x8xf32> to vector<8x8xf32>
    %301 = arith.addf %297, %300 : vector<8x8xf32>
    %302 = vector.shape_cast %301 : vector<8x8xf32> to vector<1x8x8xf32>
    %c3_157 = arith.constant 3 : index
    %c0_158 = arith.constant 0 : index
    %c0_159 = arith.constant 0 : index
    %303 = vector.load %arg6[%c3_157, %c0_158, %c0_159] : memref<4x32x8xf32, #tpu.memory_space<vmem>>, vector<1x32x8xf32>
    %304 = vector.shape_cast %303 : vector<1x32x8xf32> to vector<32x8xf32>
    %cst_160 = arith.constant dense<0.000000e+00> : vector<32x8xf32>
    %305 = tpu.matmul %3, %304, %cst_160 {dimension_numbers = #tpu.dot_dimension_numbers<[1], [0], [0], [1], [0, 0, 1, 1], [], []>} : vector<32x32xf32>, vector<32x8xf32>, vector<32x8xf32> -> vector<32x8xf32>
    %c3_161 = arith.constant 3 : index
    %c0_162 = arith.constant 0 : index
    %c0_163 = arith.constant 0 : index
    %306 = vector.load %arg7[%c3_161, %c0_162, %c0_163] : memref<4x1x8xf32, #tpu.memory_space<vmem>>, vector<1x1x8xf32>
    %307 = vector.shape_cast %306 : vector<1x1x8xf32> to vector<1x8xf32>
    %308 = vector.broadcast %307 : vector<1x8xf32> to vector<32x8xf32>
    %309 = arith.addf %305, %308 : vector<32x8xf32>
    %310 = vector.shape_cast %309 : vector<32x8xf32> to vector<1x32x8xf32>
    %c3_164 = arith.constant 3 : index
    %c0_165 = arith.constant 0 : index
    %c0_166 = arith.constant 0 : index
    %311 = vector.load %arg8[%c3_164, %c0_165, %c0_166] : memref<4x32x8xf32, #tpu.memory_space<vmem>>, vector<1x32x8xf32>
    %312 = vector.shape_cast %311 : vector<1x32x8xf32> to vector<32x8xf32>
    %cst_167 = arith.constant dense<0.000000e+00> : vector<32x8xf32>
    %313 = tpu.matmul %5, %312, %cst_167 {dimension_numbers = #tpu.dot_dimension_numbers<[1], [0], [0], [1], [0, 0, 1, 1], [], []>} : vector<32x32xf32>, vector<32x8xf32>, vector<32x8xf32> -> vector<32x8xf32>
    %c3_168 = arith.constant 3 : index
    %c0_169 = arith.constant 0 : index
    %c0_170 = arith.constant 0 : index
    %314 = vector.load %arg9[%c3_168, %c0_169, %c0_170] : memref<4x1x8xf32, #tpu.memory_space<vmem>>, vector<1x1x8xf32>
    %315 = vector.shape_cast %314 : vector<1x1x8xf32> to vector<1x8xf32>
    %316 = vector.broadcast %315 : vector<1x8xf32> to vector<32x8xf32>
    %317 = arith.addf %313, %316 : vector<32x8xf32>
    %318 = vector.shape_cast %317 : vector<32x8xf32> to vector<1x32x8xf32>
    "tpu.trace_start"() <{level = 10 : i32, message = "bqd,bkd->bqk"}> : () -> ()
    %cst_171 = arith.constant dense<0.000000e+00> : vector<1x8x32xf32>
    %319 = tpu.matmul %302, %310, %cst_171 {dimension_numbers = #tpu.dot_dimension_numbers<[2], [2], [1], [1], [0, 0, 0, 1, 1, 1], [0], [0]>} : vector<1x8x8xf32>, vector<1x32x8xf32>, vector<1x8x32xf32> -> vector<1x8x32xf32>
    "tpu.trace_stop"() : () -> ()
    %cst_172 = arith.constant 0.353553385 : f32
    %320 = vector.broadcast %cst_172 : f32 to vector<1x8x32xf32>
    %321 = arith.mulf %319, %320 : vector<1x8x32xf32>
    %322 = vector.shape_cast %321 : vector<1x8x32xf32> to vector<8x32xf32>
    %cst_173 = arith.constant dense<0xFF800000> : vector<8xf32>
    %323 = vector.multi_reduction <maximumf>, %322, %cst_173 [1] : vector<8x32xf32> to vector<8xf32>
    %324 = vector.shape_cast %323 : vector<8xf32> to vector<8x1xf32>
    %325 = vector.broadcast %324 : vector<8x1xf32> to vector<8x32xf32>
    %326 = arith.cmpf oeq, %322, %325 : vector<8x32xf32>
    %cst_174 = arith.constant 0xFF800000 : f32
    %327 = vector.broadcast %cst_174 : f32 to vector<8x32xf32>
    %328 = arith.select %326, %327, %322 : vector<8x32xi1>, vector<8x32xf32>
    %cst_175 = arith.constant dense<0xFF800000> : vector<8xf32>
    %329 = vector.multi_reduction <maximumf>, %328, %cst_175 [1] : vector<8x32xf32> to vector<8xf32>
    %330 = vector.shape_cast %329 : vector<8xf32> to vector<8x1xf32>
    %331 = vector.broadcast %330 : vector<8x1xf32> to vector<8x32xf32>
    %332 = arith.cmpf oeq, %328, %331 : vector<8x32xf32>
    %cst_176 = arith.constant 0xFF800000 : f32
    %333 = vector.broadcast %cst_176 : f32 to vector<8x32xf32>
    %334 = arith.select %332, %333, %328 : vector<8x32xi1>, vector<8x32xf32>
    %cst_177 = arith.constant dense<0xFF800000> : vector<8xf32>
    %335 = vector.multi_reduction <maximumf>, %334, %cst_177 [1] : vector<8x32xf32> to vector<8xf32>
    %336 = vector.shape_cast %335 : vector<8xf32> to vector<8x1xf32>
    %337 = vector.broadcast %336 : vector<8x1xf32> to vector<8x32xf32>
    %338 = arith.cmpf oeq, %334, %337 : vector<8x32xf32>
    %cst_178 = arith.constant 0xFF800000 : f32
    %339 = vector.broadcast %cst_178 : f32 to vector<8x32xf32>
    %340 = arith.select %338, %339, %334 : vector<8x32xi1>, vector<8x32xf32>
    %cst_179 = arith.constant dense<0xFF800000> : vector<8xf32>
    %341 = vector.multi_reduction <maximumf>, %340, %cst_179 [1] : vector<8x32xf32> to vector<8xf32>
    %342 = vector.shape_cast %341 : vector<8xf32> to vector<8x1xf32>
    %343 = vector.broadcast %342 : vector<8x1xf32> to vector<8x32xf32>
    %344 = arith.cmpf oeq, %340, %343 : vector<8x32xf32>
    %cst_180 = arith.constant 0xFF800000 : f32
    %345 = vector.broadcast %cst_180 : f32 to vector<8x32xf32>
    %346 = arith.select %344, %345, %340 : vector<8x32xi1>, vector<8x32xf32>
    %cst_181 = arith.constant dense<0xFF800000> : vector<8xf32>
    %347 = vector.multi_reduction <maximumf>, %346, %cst_181 [1] : vector<8x32xf32> to vector<8xf32>
    %348 = vector.shape_cast %347 : vector<8xf32> to vector<8x1xf32>
    %349 = vector.broadcast %348 : vector<8x1xf32> to vector<8x32xf32>
    %350 = arith.cmpf oeq, %346, %349 : vector<8x32xf32>
    %cst_182 = arith.constant 0xFF800000 : f32
    %351 = vector.broadcast %cst_182 : f32 to vector<8x32xf32>
    %352 = arith.select %350, %351, %346 : vector<8x32xi1>, vector<8x32xf32>
    %cst_183 = arith.constant dense<0xFF800000> : vector<8xf32>
    %353 = vector.multi_reduction <maximumf>, %352, %cst_183 [1] : vector<8x32xf32> to vector<8xf32>
    %354 = vector.shape_cast %353 : vector<8xf32> to vector<8x1xf32>
    %355 = vector.broadcast %354 : vector<8x1xf32> to vector<8x32xf32>
    %356 = arith.cmpf oeq, %352, %355 : vector<8x32xf32>
    %cst_184 = arith.constant 0xFF800000 : f32
    %357 = vector.broadcast %cst_184 : f32 to vector<8x32xf32>
    %358 = arith.select %356, %357, %352 : vector<8x32xi1>, vector<8x32xf32>
    %cst_185 = arith.constant dense<0xFF800000> : vector<8xf32>
    %359 = vector.multi_reduction <maximumf>, %358, %cst_185 [1] : vector<8x32xf32> to vector<8xf32>
    %360 = vector.shape_cast %359 : vector<8xf32> to vector<8x1xf32>
    %361 = vector.broadcast %360 : vector<8x1xf32> to vector<8x32xf32>
    %362 = arith.cmpf oeq, %358, %361 : vector<8x32xf32>
    %cst_186 = arith.constant 0xFF800000 : f32
    %363 = vector.broadcast %cst_186 : f32 to vector<8x32xf32>
    %364 = arith.select %362, %363, %358 : vector<8x32xi1>, vector<8x32xf32>
    %cst_187 = arith.constant dense<0xFF800000> : vector<8xf32>
    %365 = vector.multi_reduction <maximumf>, %364, %cst_187 [1] : vector<8x32xf32> to vector<8xf32>
    %366 = vector.shape_cast %365 : vector<8xf32> to vector<8x1xf32>
    %367 = vector.broadcast %366 : vector<8x1xf32> to vector<8x32xf32>
    %368 = arith.cmpf oeq, %364, %367 : vector<8x32xf32>
    %cst_188 = arith.constant 0xFF800000 : f32
    %369 = vector.broadcast %cst_188 : f32 to vector<8x32xf32>
    %370 = arith.select %368, %369, %364 : vector<8x32xi1>, vector<8x32xf32>
    %cst_189 = arith.constant dense<0xFF800000> : vector<8xf32>
    %371 = vector.multi_reduction <maximumf>, %370, %cst_189 [1] : vector<8x32xf32> to vector<8xf32>
    %372 = vector.shape_cast %371 : vector<8xf32> to vector<8x1xf32>
    %373 = vector.broadcast %372 : vector<8x1xf32> to vector<8x32xf32>
    %374 = arith.cmpf oeq, %370, %373 : vector<8x32xf32>
    %cst_190 = arith.constant 0xFF800000 : f32
    %375 = vector.broadcast %cst_190 : f32 to vector<8x32xf32>
    %376 = arith.select %374, %375, %370 : vector<8x32xi1>, vector<8x32xf32>
    %cst_191 = arith.constant dense<0xFF800000> : vector<8xf32>
    %377 = vector.multi_reduction <maximumf>, %376, %cst_191 [1] : vector<8x32xf32> to vector<8xf32>
    %378 = vector.shape_cast %377 : vector<8xf32> to vector<8x1xf32>
    %379 = vector.broadcast %378 : vector<8x1xf32> to vector<8x32xf32>
    %380 = arith.cmpf oeq, %376, %379 : vector<8x32xf32>
    %cst_192 = arith.constant 0xFF800000 : f32
    %381 = vector.broadcast %cst_192 : f32 to vector<8x32xf32>
    %382 = arith.select %380, %381, %376 : vector<8x32xi1>, vector<8x32xf32>
    %cst_193 = arith.constant dense<0xFF800000> : vector<8xf32>
    %383 = vector.multi_reduction <maximumf>, %382, %cst_193 [1] : vector<8x32xf32> to vector<8xf32>
    %384 = vector.shape_cast %383 : vector<8xf32> to vector<8x1xf32>
    %385 = vector.broadcast %384 : vector<8x1xf32> to vector<8x32xf32>
    %386 = arith.cmpf oeq, %382, %385 : vector<8x32xf32>
    %cst_194 = arith.constant 0xFF800000 : f32
    %387 = vector.broadcast %cst_194 : f32 to vector<8x32xf32>
    %388 = arith.select %386, %387, %382 : vector<8x32xi1>, vector<8x32xf32>
    %cst_195 = arith.constant dense<0xFF800000> : vector<8xf32>
    %389 = vector.multi_reduction <maximumf>, %388, %cst_195 [1] : vector<8x32xf32> to vector<8xf32>
    %390 = vector.shape_cast %389 : vector<8xf32> to vector<8x1xf32>
    %391 = vector.broadcast %390 : vector<8x1xf32> to vector<8x32xf32>
    %392 = arith.cmpf oeq, %388, %391 : vector<8x32xf32>
    %cst_196 = arith.constant 0xFF800000 : f32
    %393 = vector.broadcast %cst_196 : f32 to vector<8x32xf32>
    %394 = arith.select %392, %393, %388 : vector<8x32xi1>, vector<8x32xf32>
    %cst_197 = arith.constant dense<0xFF800000> : vector<8xf32>
    %395 = vector.multi_reduction <maximumf>, %394, %cst_197 [1] : vector<8x32xf32> to vector<8xf32>
    %396 = vector.shape_cast %395 : vector<8xf32> to vector<8x1xf32>
    %397 = vector.broadcast %396 : vector<8x1xf32> to vector<8x32xf32>
    %398 = arith.cmpf oeq, %394, %397 : vector<8x32xf32>
    %cst_198 = arith.constant 0xFF800000 : f32
    %399 = vector.broadcast %cst_198 : f32 to vector<8x32xf32>
    %400 = arith.select %398, %399, %394 : vector<8x32xi1>, vector<8x32xf32>
    %cst_199 = arith.constant dense<0xFF800000> : vector<8xf32>
    %401 = vector.multi_reduction <maximumf>, %400, %cst_199 [1] : vector<8x32xf32> to vector<8xf32>
    %402 = vector.shape_cast %401 : vector<8xf32> to vector<8x1xf32>
    %403 = vector.broadcast %402 : vector<8x1xf32> to vector<8x32xf32>
    %404 = arith.cmpf oeq, %400, %403 : vector<8x32xf32>
    %cst_200 = arith.constant 0xFF800000 : f32
    %405 = vector.broadcast %cst_200 : f32 to vector<8x32xf32>
    %406 = arith.select %404, %405, %400 : vector<8x32xi1>, vector<8x32xf32>
    %cst_201 = arith.constant dense<0xFF800000> : vector<8xf32>
    %407 = vector.multi_reduction <maximumf>, %406, %cst_201 [1] : vector<8x32xf32> to vector<8xf32>
    %408 = vector.shape_cast %407 : vector<8xf32> to vector<8x1xf32>
    %409 = vector.broadcast %408 : vector<8x1xf32> to vector<8x32xf32>
    %410 = arith.cmpf oeq, %406, %409 : vector<8x32xf32>
    %cst_202 = arith.constant 0xFF800000 : f32
    %411 = vector.broadcast %cst_202 : f32 to vector<8x32xf32>
    %412 = arith.select %410, %411, %406 : vector<8x32xi1>, vector<8x32xf32>
    %cst_203 = arith.constant dense<0xFF800000> : vector<8xf32>
    %413 = vector.multi_reduction <maximumf>, %412, %cst_203 [1] : vector<8x32xf32> to vector<8xf32>
    %414 = vector.shape_cast %413 : vector<8xf32> to vector<8x1xf32>
    %415 = vector.broadcast %414 : vector<8x1xf32> to vector<8x32xf32>
    %416 = arith.cmpf oeq, %412, %415 : vector<8x32xf32>
    %cst_204 = arith.constant 0xFF800000 : f32
    %417 = vector.broadcast %cst_204 : f32 to vector<8x32xf32>
    %418 = arith.select %416, %417, %412 : vector<8x32xi1>, vector<8x32xf32>
    %cst_205 = arith.constant dense<0xFF800000> : vector<8xf32>
    %419 = vector.multi_reduction <maximumf>, %418, %cst_205 [1] : vector<8x32xf32> to vector<8xf32>
    %420 = vector.shape_cast %419 : vector<8xf32> to vector<8x1xf32>
    %421 = vector.broadcast %420 : vector<8x1xf32> to vector<8x32xf32>
    %422 = arith.cmpf oeq, %418, %421 : vector<8x32xf32>
    %cst_206 = arith.constant 0xFF800000 : f32
    %423 = vector.broadcast %cst_206 : f32 to vector<8x32xf32>
    %424 = arith.select %422, %423, %418 : vector<8x32xi1>, vector<8x32xf32>
    %cst_207 = arith.constant dense<0xFF800000> : vector<8xf32>
    %425 = vector.multi_reduction <maximumf>, %424, %cst_207 [1] : vector<8x32xf32> to vector<8xf32>
    %426 = vector.shape_cast %425 : vector<8xf32> to vector<8x1xf32>
    %427 = vector.broadcast %426 : vector<8x1xf32> to vector<8x32xf32>
    %428 = arith.cmpf oeq, %424, %427 : vector<8x32xf32>
    %cst_208 = arith.constant 0xFF800000 : f32
    %429 = vector.broadcast %cst_208 : f32 to vector<8x32xf32>
    %430 = arith.select %428, %429, %424 : vector<8x32xi1>, vector<8x32xf32>
    %cst_209 = arith.constant dense<0xFF800000> : vector<8xf32>
    %431 = vector.multi_reduction <maximumf>, %430, %cst_209 [1] : vector<8x32xf32> to vector<8xf32>
    %432 = vector.shape_cast %431 : vector<8xf32> to vector<8x1xf32>
    %433 = vector.broadcast %432 : vector<8x1xf32> to vector<8x32xf32>
    %434 = arith.cmpf oeq, %430, %433 : vector<8x32xf32>
    %cst_210 = arith.constant 0xFF800000 : f32
    %435 = vector.broadcast %cst_210 : f32 to vector<8x32xf32>
    %436 = arith.select %434, %435, %430 : vector<8x32xi1>, vector<8x32xf32>
    %cst_211 = arith.constant dense<0xFF800000> : vector<8xf32>
    %437 = vector.multi_reduction <maximumf>, %436, %cst_211 [1] : vector<8x32xf32> to vector<8xf32>
    %438 = vector.shape_cast %437 : vector<8xf32> to vector<8x1xf32>
    %439 = vector.broadcast %438 : vector<8x1xf32> to vector<8x32xf32>
    %440 = arith.cmpf oeq, %436, %439 : vector<8x32xf32>
    %cst_212 = arith.constant 0xFF800000 : f32
    %441 = vector.broadcast %cst_212 : f32 to vector<8x32xf32>
    %442 = arith.select %440, %441, %436 : vector<8x32xi1>, vector<8x32xf32>
    %cst_213 = arith.constant dense<0xFF800000> : vector<8xf32>
    %443 = vector.multi_reduction <maximumf>, %442, %cst_213 [1] : vector<8x32xf32> to vector<8xf32>
    %444 = vector.shape_cast %443 : vector<8xf32> to vector<8x1xf32>
    %445 = vector.broadcast %444 : vector<8x1xf32> to vector<8x32xf32>
    %446 = arith.cmpf oeq, %442, %445 : vector<8x32xf32>
    %cst_214 = arith.constant 0xFF800000 : f32
    %447 = vector.broadcast %cst_214 : f32 to vector<8x32xf32>
    %448 = arith.select %446, %447, %442 : vector<8x32xi1>, vector<8x32xf32>
    %cst_215 = arith.constant dense<0xFF800000> : vector<8xf32>
    %449 = vector.multi_reduction <maximumf>, %448, %cst_215 [1] : vector<8x32xf32> to vector<8xf32>
    %450 = vector.shape_cast %449 : vector<8xf32> to vector<8x1xf32>
    %451 = vector.broadcast %450 : vector<8x1xf32> to vector<8x32xf32>
    %452 = arith.cmpf oeq, %448, %451 : vector<8x32xf32>
    %cst_216 = arith.constant 0xFF800000 : f32
    %453 = vector.broadcast %cst_216 : f32 to vector<8x32xf32>
    %454 = arith.select %452, %453, %448 : vector<8x32xi1>, vector<8x32xf32>
    %cst_217 = arith.constant dense<0xFF800000> : vector<8xf32>
    %455 = vector.multi_reduction <maximumf>, %454, %cst_217 [1] : vector<8x32xf32> to vector<8xf32>
    %456 = vector.shape_cast %455 : vector<8xf32> to vector<8x1xf32>
    %457 = vector.broadcast %456 : vector<8x1xf32> to vector<8x32xf32>
    %458 = arith.cmpf oeq, %454, %457 : vector<8x32xf32>
    %cst_218 = arith.constant 0xFF800000 : f32
    %459 = vector.broadcast %cst_218 : f32 to vector<8x32xf32>
    %460 = arith.select %458, %459, %454 : vector<8x32xi1>, vector<8x32xf32>
    %cst_219 = arith.constant dense<0xFF800000> : vector<8xf32>
    %461 = vector.multi_reduction <maximumf>, %460, %cst_219 [1] : vector<8x32xf32> to vector<8xf32>
    %462 = vector.shape_cast %461 : vector<8xf32> to vector<8x1xf32>
    %463 = vector.broadcast %462 : vector<8x1xf32> to vector<8x32xf32>
    %464 = arith.cmpf oeq, %460, %463 : vector<8x32xf32>
    %cst_220 = arith.constant 0xFF800000 : f32
    %465 = vector.broadcast %cst_220 : f32 to vector<8x32xf32>
    %466 = arith.select %464, %465, %460 : vector<8x32xi1>, vector<8x32xf32>
    %cst_221 = arith.constant dense<0xFF800000> : vector<8xf32>
    %467 = vector.multi_reduction <maximumf>, %466, %cst_221 [1] : vector<8x32xf32> to vector<8xf32>
    %468 = vector.shape_cast %467 : vector<8xf32> to vector<8x1xf32>
    %469 = vector.broadcast %468 : vector<8x1xf32> to vector<8x32xf32>
    %470 = arith.cmpf oge, %322, %469 : vector<8x32xf32>
    %cst_222 = arith.constant 0.000000e+00 : f32
    %471 = vector.broadcast %cst_222 : f32 to vector<8x32xf32>
    %472 = arith.select %470, %322, %471 : vector<8x32xi1>, vector<8x32xf32>
    %cst_223 = arith.constant dense<0xFF800000> : vector<8xf32>
    %473 = vector.multi_reduction <maximumf>, %472, %cst_223 [1] : vector<8x32xf32> to vector<8xf32>
    %474 = vector.shape_cast %473 : vector<8xf32> to vector<8x1xf32>
    %475 = vector.broadcast %474 : vector<8x1xf32> to vector<8x32xf32>
    %476 = arith.subf %472, %475 : vector<8x32xf32>
    %477 = math.exp %476 : vector<8x32xf32>
    %cst_224 = arith.constant dense<0.000000e+00> : vector<8xf32>
    %478 = vector.multi_reduction <add>, %477, %cst_224 [1] : vector<8x32xf32> to vector<8xf32>
    %479 = vector.shape_cast %478 : vector<8xf32> to vector<8x1xf32>
    %480 = vector.broadcast %479 : vector<8x1xf32> to vector<8x32xf32>
    %481 = arith.divf %477, %480 : vector<8x32xf32>
    %482 = vector.shape_cast %481 : vector<8x32xf32> to vector<1x8x32xf32>
    "tpu.trace_start"() <{level = 10 : i32, message = "bqk,bkd->bqd"}> : () -> ()
    %cst_225 = arith.constant dense<0.000000e+00> : vector<1x8x8xf32>
    %483 = tpu.matmul %482, %318, %cst_225 {dimension_numbers = #tpu.dot_dimension_numbers<[2], [1], [1], [2], [0, 0, 0, 1, 1, 2], [0], [0]>} : vector<1x8x32xf32>, vector<1x32x8xf32>, vector<1x8x8xf32> -> vector<1x8x8xf32>
    "tpu.trace_stop"() : () -> ()
    %cst_226 = arith.constant dense<0.000000e+00> : vector<1x8xf32>
    %484 = vector.multi_reduction <add>, %483, %cst_226 [1] : vector<1x8x8xf32> to vector<1x8xf32>
    %c3_227 = arith.constant 3 : index
    %c0_228 = arith.constant 0 : index
    %c0_229 = arith.constant 0 : index
    %485 = vector.load %arg10[%c3_227, %c0_228, %c0_229] : memref<4x8x4xf32, #tpu.memory_space<vmem>>, vector<1x8x4xf32>
    %486 = vector.shape_cast %485 : vector<1x8x4xf32> to vector<8x4xf32>
    %cst_230 = arith.constant dense<0.000000e+00> : vector<1x4xf32>
    %487 = tpu.matmul %484, %486, %cst_230 {dimension_numbers = #tpu.dot_dimension_numbers<[1], [0], [0], [1], [0, 0, 1, 1], [], []>} : vector<1x8xf32>, vector<8x4xf32>, vector<1x4xf32> -> vector<1x4xf32>
    %488 = arith.addf %294, %487 : vector<1x4xf32>
    %c0_231 = arith.constant 0 : index
    %c0_232 = arith.constant 0 : index
    %489 = vector.load %arg11[%c0_231, %c0_232] : memref<1x4xf32, #tpu.memory_space<vmem>>, vector<1x4xf32>
    %490 = arith.addf %488, %489 : vector<1x4xf32>
    %cst_233 = arith.constant dense<0xFF800000> : vector<1xf32>
    %491 = vector.multi_reduction <maximumf>, %490, %cst_233 [1] : vector<1x4xf32> to vector<1xf32>
    %492 = vector.shape_cast %491 : vector<1xf32> to vector<1x1xf32>
    %493 = vector.broadcast %492 : vector<1x1xf32> to vector<1x4xf32>
    %494 = arith.subf %490, %493 : vector<1x4xf32>
    %495 = math.exp %494 : vector<1x4xf32>
    %cst_234 = arith.constant dense<0.000000e+00> : vector<1xf32>
    %496 = vector.multi_reduction <add>, %495, %cst_234 [1] : vector<1x4xf32> to vector<1xf32>
    %497 = vector.shape_cast %496 : vector<1xf32> to vector<1x1xf32>
    %498 = vector.broadcast %497 : vector<1x1xf32> to vector<1x4xf32>
    %499 = arith.divf %495, %498 : vector<1x4xf32>
    %cst_235 = arith.constant 0.000000e+00 : f32
    %500 = vector.broadcast %cst_235 : f32 to vector<1x8x8xf32>
    %501 = vector.extract_strided_slice %499 {offsets = [0, 0], sizes = [1, 1], strides = [1, 1]} : vector<1x4xf32> to vector<1x1xf32>
    %502 = vector.shape_cast %501 : vector<1x1xf32> to vector<1x1x1xf32>
    %503 = vector.broadcast %502 : vector<1x1x1xf32> to vector<1x8x8xf32>
    %504 = arith.mulf %51, %503 : vector<1x8x8xf32>
    %505 = arith.addf %500, %504 : vector<1x8x8xf32>
    %506 = vector.extract_strided_slice %499 {offsets = [0, 1], sizes = [1, 1], strides = [1, 1]} : vector<1x4xf32> to vector<1x1xf32>
    %507 = vector.shape_cast %506 : vector<1x1xf32> to vector<1x1x1xf32>
    %508 = vector.broadcast %507 : vector<1x1x1xf32> to vector<1x8x8xf32>
    %509 = arith.mulf %149, %508 : vector<1x8x8xf32>
    %510 = arith.addf %505, %509 : vector<1x8x8xf32>
    %511 = vector.extract_strided_slice %499 {offsets = [0, 2], sizes = [1, 1], strides = [1, 1]} : vector<1x4xf32> to vector<1x1xf32>
    %512 = vector.shape_cast %511 : vector<1x1xf32> to vector<1x1x1xf32>
    %513 = vector.broadcast %512 : vector<1x1x1xf32> to vector<1x8x8xf32>
    %514 = arith.mulf %289, %513 : vector<1x8x8xf32>
    %515 = arith.addf %510, %514 : vector<1x8x8xf32>
    %516 = vector.extract_strided_slice %499 {offsets = [0, 3], sizes = [1, 1], strides = [1, 1]} : vector<1x4xf32> to vector<1x1xf32>
    %517 = vector.shape_cast %516 : vector<1x1xf32> to vector<1x1x1xf32>
    %518 = vector.broadcast %517 : vector<1x1x1xf32> to vector<1x8x8xf32>
    %519 = arith.mulf %483, %518 : vector<1x8x8xf32>
    %520 = arith.addf %515, %519 : vector<1x8x8xf32>
    %521 = vector.shape_cast %520 : vector<1x8x8xf32> to vector<8x8xf32>
    %c0_236 = arith.constant 0 : index
    %c0_237 = arith.constant 0 : index
    %522 = vector.load %arg12[%c0_236, %c0_237] : memref<8x32xf32, #tpu.memory_space<vmem>>, vector<8x32xf32>
    %cst_238 = arith.constant dense<0.000000e+00> : vector<8x32xf32>
    %523 = tpu.matmul %521, %522, %cst_238 {dimension_numbers = #tpu.dot_dimension_numbers<[1], [0], [0], [1], [0, 0, 1, 1], [], []>} : vector<8x8xf32>, vector<8x32xf32>, vector<8x32xf32> -> vector<8x32xf32>
    %c0_239 = arith.constant 0 : index
    %c0_240 = arith.constant 0 : index
    %524 = vector.load %arg13[%c0_239, %c0_240] : memref<1x32xf32, #tpu.memory_space<vmem>>, vector<1x32xf32>
    %525 = vector.broadcast %524 : vector<1x32xf32> to vector<8x32xf32>
    %526 = arith.addf %523, %525 : vector<8x32xf32>
    %527 = arith.addf %1, %526 : vector<8x32xf32>
    %cst_241 = arith.constant dense<0.000000e+00> : vector<8xf32>
    %528 = vector.multi_reduction <add>, %527, %cst_241 [1] : vector<8x32xf32> to vector<8xf32>
    %529 = vector.shape_cast %528 : vector<8xf32> to vector<8x1xf32>
    %cst_242 = arith.constant 3.200000e+01 : f32
    %530 = vector.broadcast %cst_242 : f32 to vector<8x1xf32>
    %531 = arith.divf %529, %530 : vector<8x1xf32>
    %532 = vector.broadcast %531 : vector<8x1xf32> to vector<8x32xf32>
    %533 = arith.subf %527, %532 : vector<8x32xf32>
    %534 = arith.mulf %533, %533 : vector<8x32xf32>
    %cst_243 = arith.constant dense<0.000000e+00> : vector<8xf32>
    %535 = vector.multi_reduction <add>, %534, %cst_243 [1] : vector<8x32xf32> to vector<8xf32>
    %536 = vector.shape_cast %535 : vector<8xf32> to vector<8x1xf32>
    %cst_244 = arith.constant 3.200000e+01 : f32
    %537 = vector.broadcast %cst_244 : f32 to vector<8x1xf32>
    %538 = arith.divf %536, %537 : vector<8x1xf32>
    %cst_245 = arith.constant 9.99999974E-6 : f32
    %539 = vector.broadcast %cst_245 : f32 to vector<8x1xf32>
    %540 = arith.addf %538, %539 : vector<8x1xf32>
    %541 = math.rsqrt %540 : vector<8x1xf32>
    %542 = vector.broadcast %541 : vector<8x1xf32> to vector<8x32xf32>
    %543 = arith.mulf %533, %542 : vector<8x32xf32>
    %c0_246 = arith.constant 0 : index
    %c0_247 = arith.constant 0 : index
    %544 = vector.load %arg14[%c0_246, %c0_247] : memref<1x32xf32, #tpu.memory_space<vmem>>, vector<1x32xf32>
    %545 = vector.broadcast %544 : vector<1x32xf32> to vector<8x32xf32>
    %546 = arith.mulf %543, %545 : vector<8x32xf32>
    %c0_248 = arith.constant 0 : index
    %c0_249 = arith.constant 0 : index
    %547 = vector.load %arg15[%c0_248, %c0_249] : memref<1x32xf32, #tpu.memory_space<vmem>>, vector<1x32xf32>
    %548 = vector.broadcast %547 : vector<1x32xf32> to vector<8x32xf32>
    %549 = arith.addf %546, %548 : vector<8x32xf32>
    %550 = vector.shape_cast %549 : vector<8x32xf32> to vector<1x8x32xf32>
    %c0_250 = arith.constant 0 : index
    %c0_251 = arith.constant 0 : index
    %c0_252 = arith.constant 0 : index
    %551 = vector.load %arg16[%c0_250, %c0_251, %c0_252] : memref<1x8x32xf32, #tpu.memory_space<vmem>>, vector<1x8x32xf32>
    tpu.vector_store %arg16[%c0_250, %c0_251, %c0_252], %550 {strides = array<i32>} : memref<1x8x32xf32, #tpu.memory_space<vmem>>, vector<1x8x32xf32>,
    return
  }
  func.func @transform_0(%arg0: i32) -> (i32, i32, i32) {
    %c0_i32 = arith.constant 0 : i32
    %c0_i32_0 = arith.constant 0 : i32
    %c0_i32_1 = arith.constant 0 : i32
    return %arg0, %c0_i32, %c0_i32_0 : i32, i32, i32
  }
  func.func @transform_1(%arg0: i32) -> (i32, i32, i32) {
    %c0_i32 = arith.constant 0 : i32
    %c0_i32_0 = arith.constant 0 : i32
    %c0_i32_1 = arith.constant 0 : i32
    return %arg0, %c0_i32, %c0_i32_0 : i32, i32, i32
  }
  func.func @transform_2(%arg0: i32) -> (i32, i32, i32) {
    %c0_i32 = arith.constant 0 : i32
    %c0_i32_0 = arith.constant 0 : i32
    %c0_i32_1 = arith.constant 0 : i32
    return %arg0, %c0_i32, %c0_i32_0 : i32, i32, i32
  }
  func.func @transform_3(%arg0: i32) -> (i32, i32, i32) {
    %c0_i32 = arith.constant 0 : i32
    %c0_i32_0 = arith.constant 0 : i32
    %c0_i32_1 = arith.constant 0 : i32
    %c0_i32_2 = arith.constant 0 : i32
    return %c0_i32, %c0_i32_0, %c0_i32_1 : i32, i32, i32
  }
  func.func @transform_4(%arg0: i32) -> (i32, i32, i32) {
    %c0_i32 = arith.constant 0 : i32
    %c0_i32_0 = arith.constant 0 : i32
    %c0_i32_1 = arith.constant 0 : i32
    %c0_i32_2 = arith.constant 0 : i32
    return %c0_i32, %c0_i32_0, %c0_i32_1 : i32, i32, i32
  }
  func.func @transform_5(%arg0: i32) -> (i32, i32, i32) {
    %c0_i32 = arith.constant 0 : i32
    %c0_i32_0 = arith.constant 0 : i32
    %c0_i32_1 = arith.constant 0 : i32
    %c0_i32_2 = arith.constant 0 : i32
    return %c0_i32, %c0_i32_0, %c0_i32_1 : i32, i32, i32
  }
  func.func @transform_6(%arg0: i32) -> (i32, i32, i32) {
    %c0_i32 = arith.constant 0 : i32
    %c0_i32_0 = arith.constant 0 : i32
    %c0_i32_1 = arith.constant 0 : i32
    %c0_i32_2 = arith.constant 0 : i32
    return %c0_i32, %c0_i32_0, %c0_i32_1 : i32, i32, i32
  }
  func.func @transform_7(%arg0: i32) -> (i32, i32, i32) {
    %c0_i32 = arith.constant 0 : i32
    %c0_i32_0 = arith.constant 0 : i32
    %c0_i32_1 = arith.constant 0 : i32
    %c0_i32_2 = arith.constant 0 : i32
    return %c0_i32, %c0_i32_0, %c0_i32_1 : i32, i32, i32
  }
  func.func @transform_8(%arg0: i32) -> (i32, i32, i32) {
    %c0_i32 = arith.constant 0 : i32
    %c0_i32_0 = arith.constant 0 : i32
    %c0_i32_1 = arith.constant 0 : i32
    %c0_i32_2 = arith.constant 0 : i32
    return %c0_i32, %c0_i32_0, %c0_i32_1 : i32, i32, i32
  }
  func.func @transform_9(%arg0: i32) -> (i32, i32, i32) {
    %c0_i32 = arith.constant 0 : i32
    %c0_i32_0 = arith.constant 0 : i32
    %c0_i32_1 = arith.constant 0 : i32
    %c0_i32_2 = arith.constant 0 : i32
    return %c0_i32, %c0_i32_0, %c0_i32_1 : i32, i32, i32
  }
  func.func @transform_10(%arg0: i32) -> (i32, i32) {
    %c0_i32 = arith.constant 0 : i32
    %c0_i32_0 = arith.constant 0 : i32
    %c0_i32_1 = arith.constant 0 : i32
    return %c0_i32, %c0_i32_0 : i32, i32
  }
  func.func @transform_11(%arg0: i32) -> (i32, i32) {
    %c0_i32 = arith.constant 0 : i32
    %c0_i32_0 = arith.constant 0 : i32
    %c0_i32_1 = arith.constant 0 : i32
    return %c0_i32, %c0_i32_0 : i32, i32
  }
  func.func @transform_12(%arg0: i32) -> (i32, i32) {
    %c0_i32 = arith.constant 0 : i32
    %c0_i32_0 = arith.constant 0 : i32
    %c0_i32_1 = arith.constant 0 : i32
    return %c0_i32, %c0_i32_0 : i32, i32
  }
  func.func @transform_13(%arg0: i32) -> (i32, i32) {
    %c0_i32 = arith.constant 0 : i32
    %c0_i32_0 = arith.constant 0 : i32
    %c0_i32_1 = arith.constant 0 : i32
    return %c0_i32, %c0_i32_0 : i32, i32
  }
  func.func @transform_14(%arg0: i32) -> (i32, i32) {
    %c0_i32 = arith.constant 0 : i32
    %c0_i32_0 = arith.constant 0 : i32
    %c0_i32_1 = arith.constant 0 : i32
    return %c0_i32, %c0_i32_0 : i32, i32
  }
  func.func @transform_15(%arg0: i32) -> (i32, i32, i32) {
    %c0_i32 = arith.constant 0 : i32
    %c0_i32_0 = arith.constant 0 : i32
    %c0_i32_1 = arith.constant 0 : i32
    return %arg0, %c0_i32, %c0_i32_0 : i32, i32, i32
  }
}

</mosaic_0001>

<llo_original>
// kernel: tpu_custom_call.1
$region0: #{tpu_custom_call.1}
  #allocation0 [shape = 'u32[]', space=smem, size = 0x4, offset = 0x4, fixed_abs, tag = 'smem constant byte address 0x4 - core index']
  #allocation1 [shape = 'u32[72,128]{1,0:T(1,128)}', space=vmem, size = 0x9000, scoped, tag = 'internal scratch']
  %s0 = inlined_call_operand.vmem [shape: f32[2,8,32], index: 0, kind: input, shape index: {}]
  %s1 = inlined_call_operand.vmem [shape: f32[2,32,32], index: 1, kind: input, shape index: {}]
  %s2 = inlined_call_operand.vmem [shape: f32[2,32,32], index: 2, kind: input, shape index: {}]
  %s3 = inlined_call_operand.vmem [shape: f32[4,32,8], index: 3, kind: input, shape index: {}]
  %s4 = inlined_call_operand.vmem [shape: f32[4,1,8], index: 4, kind: input, shape index: {}]
  %s5 = inlined_call_operand.vmem [shape: f32[4,32,8], index: 5, kind: input, shape index: {}]
  %s6 = inlined_call_operand.vmem [shape: f32[4,1,8], index: 6, kind: input, shape index: {}]
  %s7 = inlined_call_operand.vmem [shape: f32[4,32,8], index: 7, kind: input, shape index: {}]
  %s8 = inlined_call_operand.vmem [shape: f32[4,1,8], index: 8, kind: input, shape index: {}]
  %s9 = inlined_call_operand.vmem [shape: f32[4,8,4], index: 9, kind: input, shape index: {}]
  %s10 = inlined_call_operand.vmem [shape: f32[1,4], index: 10, kind: input, shape index: {}]
  %s11 = inlined_call_operand.vmem [shape: f32[8,32], index: 11, kind: input, shape index: {}]
  %s12 = inlined_call_operand.vmem [shape: f32[1,32], index: 12, kind: input, shape index: {}]
  %s13 = inlined_call_operand.vmem [shape: f32[1,32], index: 13, kind: input, shape index: {}]
  %s14 = inlined_call_operand.vmem [shape: f32[1,32], index: 14, kind: input, shape index: {}]
  %s15 = inlined_call_operand.hbm [shape: f32[2,8,32], index: 15, kind: output, shape index: {}]
  %s16 = sld [smem:[#allocation0]]
  $region93: #{tpu_custom_call.1} parent=0
    _
  %s18 = ssub.s32 1, %s16
  %s19 = scalar_select 0, %s18, %s16
  $region1: #{tpu_custom_call.1} parent=0
    #allocation2 [shape = 'u8[8192]{0}', space=vmem, size = 0x2000, scoped, tag = 'output window, operand 0']
    #allocation3 [shape = 's32[2]{0}', space=sflag, size = 0x8, scoped, tag = 'scoped memory for tpu_custom_call.1']
    %20 = vsyncpa [#allocation3], 0
    %s21 = scalar_lea.sflag [#allocation3], 1
    %22 = vsyncpa %s21, 0
    loop: start=0, step=1, limit=4
    $region2: #{tpu_custom_call.1} parent=1 // loop_pre_header
      _
    $region3: #{tpu_custom_call.1} parent=1 // loop_header
      %s24 = sphi 0, %s28
      %p25 = scmp.ge.s32.totalorder %s24, 4
      %s34 = sphi 0, %s36
      %s37 = sphi 0, %s34
      %s38 = sphi 0, %s37
      %s54 = sphi 0, %s38
      %s60 = sphi 0, %s62
      %s63 = sphi 0, %s60
      %s64 = sphi 0, %s63
      %s80 = sphi 0, %s64
      %s86 = sphi 0, %s88
      %s89 = sphi 0, %s86
      %s90 = sphi 0, %s89
      %s106 = sphi 0, %s90
      %s110 = sphi 0, %s110
      %s112 = sphi 0, %s110
      %s113 = sphi 0, %s112
      %s127 = sphi 0, %s113
      %s131 = sphi 0, %s131
      %s133 = sphi 0, %s131
      %s134 = sphi 0, %s133
      %s148 = sphi 0, %s134
      %s152 = sphi 0, %s152
      %s154 = sphi 0, %s152
      %s155 = sphi 0, %s154
      %s169 = sphi 0, %s155
      %s173 = sphi 0, %s173
      %s175 = sphi 0, %s173
      %s176 = sphi 0, %s175
      %s190 = sphi 0, %s176
      %s194 = sphi 0, %s194
      %s196 = sphi 0, %s194
      %s197 = sphi 0, %s196
      %s211 = sphi 0, %s197
      %s215 = sphi 0, %s215
      %s217 = sphi 0, %s215
      %s218 = sphi 0, %s217
      %s232 = sphi 0, %s218
      %s236 = sphi 0, %s236
      %s238 = sphi 0, %s236
      %s239 = sphi 0, %s238
      %s253 = sphi 0, %s239
      %s257 = sphi 0, %s257
      %s259 = sphi 0, %s257
      %s260 = sphi 0, %s259
      %s274 = sphi 0, %s260
      %s278 = sphi 0, %s278
      %s280 = sphi 0, %s278
      %s281 = sphi 0, %s280
      %s295 = sphi 0, %s281
      %s299 = sphi 0, %s299
      %s301 = sphi 0, %s299
      %s302 = sphi 0, %s301
      %s316 = sphi 0, %s302
      %s320 = sphi 0, %s320
      %s322 = sphi 0, %s320
      %s323 = sphi 0, %s322
      %s337 = sphi 0, %s323
      %s341 = sphi 0, %s341
      %s343 = sphi 0, %s341
      %s344 = sphi 0, %s343
      %s358 = sphi 0, %s344
      %s364 = sphi 0, %s366
      %s367 = sphi 0, %s364
      %s368 = sphi 0, %s367
      %s384 = sphi 0, %s368
    $region4: #{tpu_custom_call.1} parent=1 // loop_header_branch
      %27 = sbr.rel (%p25) target = $region8
    $region5: #{tpu_custom_call.1} parent=1 // loop_body
      %s29 = ssub.s32 %s24, 1
      %s30 = ssub.s32 %s24, 2
      %s31 = sadd.s32 %s24, 1
      %s32 = ssub.s32 %s24, %s31
      %p33 = scmp.eq.s32.totalorder %s32, 0
      %s35 = sadd.s32 %s34, 1
      %s36 = scalar_select %p33, %s34, %s35
      %p39 = pneg %p33
      %p40 = scmp.eq.s32.totalorder %s24, 1
      %p41 = por %p39, %p40
      %p42 = scmp.ne.s32.totalorder %s34, %s37
      %p43 = scmp.eq.s32.totalorder %s24, 0
      %p44 = por %p42, %p43
      %p45 = scmp.ne.s32.totalorder %s34, %s37
      %p46 = scmp.eq.s32.totalorder %s29, 1
      %p47 = por %p45, %p46
      %p48 = scmp.ne.s32.totalorder %s37, %s38
      %p49 = scmp.eq.s32.totalorder %s29, 0
      %p50 = por %p48, %p49
      %p51 = scmp.ne.s32.totalorder %s37, %s38
      %p52 = scmp.eq.s32.totalorder %s30, 1
      %p53 = por %p51, %p52
      %p55 = scmp.ne.s32.totalorder %s38, %s54
      %p56 = scmp.eq.s32.totalorder %s30, 0
      %p57 = por %p55, %p56
      %s58 = ssub.s32 %s24, %s31
      %p59 = scmp.eq.s32.totalorder %s58, 0
      %s61 = sadd.s32 %s60, 1
      %s62 = scalar_select %p59, %s60, %s61
      %p65 = pneg %p59
      %p66 = scmp.eq.s32.totalorder %s24, 1
      %p67 = por %p65, %p66
      %p68 = scmp.ne.s32.totalorder %s60, %s63
      %p69 = scmp.eq.s32.totalorder %s24, 0
      %p70 = por %p68, %p69
      %p71 = scmp.ne.s32.totalorder %s60, %s63
      %p72 = scmp.eq.s32.totalorder %s29, 1
      %p73 = por %p71, %p72
      %p74 = scmp.ne.s32.totalorder %s63, %s64
      %p75 = scmp.eq.s32.totalorder %s29, 0
      %p76 = por %p74, %p75
      %p77 = scmp.ne.s32.totalorder %s63, %s64
      %p78 = scmp.eq.s32.totalorder %s30, 1
      %p79 = por %p77, %p78
      %p81 = scmp.ne.s32.totalorder %s64, %s80
      %p82 = scmp.eq.s32.totalorder %s30, 0
      %p83 = por %p81, %p82
      %s84 = ssub.s32 %s24, %s31
      %p85 = scmp.eq.s32.totalorder %s84, 0
      %s87 = sadd.s32 %s86, 1
      %s88 = scalar_select %p85, %s86, %s87
      %p91 = pneg %p85
      %p92 = scmp.eq.s32.totalorder %s24, 1
      %p93 = por %p91, %p92
      %p94 = scmp.ne.s32.totalorder %s86, %s89
      %p95 = scmp.eq.s32.totalorder %s24, 0
      %p96 = por %p94, %p95
      %p97 = scmp.ne.s32.totalorder %s86, %s89
      %p98 = scmp.eq.s32.totalorder %s29, 1
      %p99 = por %p97, %p98
      %p100 = scmp.ne.s32.totalorder %s89, %s90
      %p101 = scmp.eq.s32.totalorder %s29, 0
      %p102 = por %p100, %p101
      %p103 = scmp.ne.s32.totalorder %s89, %s90
      %p104 = scmp.eq.s32.totalorder %s30, 1
      %p105 = por %p103, %p104
      %p107 = scmp.ne.s32.totalorder %s90, %s106
      %p108 = scmp.eq.s32.totalorder %s30, 0
      %p109 = por %p107, %p108
      %s111 = sadd.s32 %s110, 1
      %p114 = scmp.eq.s32.totalorder %s24, 1
      %p115 = scmp.ne.s32.totalorder %s110, %s112
      %p116 = scmp.eq.s32.totalorder %s24, 0
      %p117 = por %p115, %p116
      %p118 = scmp.ne.s32.totalorder %s110, %s112
      %p119 = scmp.eq.s32.totalorder %s29, 1
      %p120 = por %p118, %p119
      %p121 = scmp.ne.s32.totalorder %s112, %s113
      %p122 = scmp.eq.s32.totalorder %s29, 0
      %p123 = por %p121, %p122
      %p124 = scmp.ne.s32.totalorder %s112, %s113
      %p125 = scmp.eq.s32.totalorder %s30, 1
      %p126 = por %p124, %p125
      %p128 = scmp.ne.s32.totalorder %s113, %s127
      %p129 = scmp.eq.s32.totalorder %s30, 0
      %p130 = por %p128, %p129
      %s132 = sadd.s32 %s131, 1
      %p135 = scmp.eq.s32.totalorder %s24, 1
      %p136 = scmp.ne.s32.totalorder %s131, %s133
      %p137 = scmp.eq.s32.totalorder %s24, 0
      %p138 = por %p136, %p137
      %p139 = scmp.ne.s32.totalorder %s131, %s133
      %p140 = scmp.eq.s32.totalorder %s29, 1
      %p141 = por %p139, %p140
      %p142 = scmp.ne.s32.totalorder %s133, %s134
      %p143 = scmp.eq.s32.totalorder %s29, 0
      %p144 = por %p142, %p143
      %p145 = scmp.ne.s32.totalorder %s133, %s134
      %p146 = scmp.eq.s32.totalorder %s30, 1
      %p147 = por %p145, %p146
      %p149 = scmp.ne.s32.totalorder %s134, %s148
      %p150 = scmp.eq.s32.totalorder %s30, 0
      %p151 = por %p149, %p150
      %s153 = sadd.s32 %s152, 1
      %p156 = scmp.eq.s32.totalorder %s24, 1
      %p157 = scmp.ne.s32.totalorder %s152, %s154
      %p158 = scmp.eq.s32.totalorder %s24, 0
      %p159 = por %p157, %p158
      %p160 = scmp.ne.s32.totalorder %s152, %s154
      %p161 = scmp.eq.s32.totalorder %s29, 1
      %p162 = por %p160, %p161
      %p163 = scmp.ne.s32.totalorder %s154, %s155
      %p164 = scmp.eq.s32.totalorder %s29, 0
      %p165 = por %p163, %p164
      %p166 = scmp.ne.s32.totalorder %s154, %s155
      %p167 = scmp.eq.s32.totalorder %s30, 1
      %p168 = por %p166, %p167
      %p170 = scmp.ne.s32.totalorder %s155, %s169
      %p171 = scmp.eq.s32.totalorder %s30, 0
      %p172 = por %p170, %p171
      %s174 = sadd.s32 %s173, 1
      %p177 = scmp.eq.s32.totalorder %s24, 1
      %p178 = scmp.ne.s32.totalorder %s173, %s175
      %p179 = scmp.eq.s32.totalorder %s24, 0
      %p180 = por %p178, %p179
      %p181 = scmp.ne.s32.totalorder %s173, %s175
      %p182 = scmp.eq.s32.totalorder %s29, 1
      %p183 = por %p181, %p182
      %p184 = scmp.ne.s32.totalorder %s175, %s176
      %p185 = scmp.eq.s32.totalorder %s29, 0
      %p186 = por %p184, %p185
      %p187 = scmp.ne.s32.totalorder %s175, %s176
      %p188 = scmp.eq.s32.totalorder %s30, 1
      %p189 = por %p187, %p188
      %p191 = scmp.ne.s32.totalorder %s176, %s190
      %p192 = scmp.eq.s32.totalorder %s30, 0
      %p193 = por %p191, %p192
      %s195 = sadd.s32 %s194, 1
      %p198 = scmp.eq.s32.totalorder %s24, 1
      %p199 = scmp.ne.s32.totalorder %s194, %s196
      %p200 = scmp.eq.s32.totalorder %s24, 0
      %p201 = por %p199, %p200
      %p202 = scmp.ne.s32.totalorder %s194, %s196
      %p203 = scmp.eq.s32.totalorder %s29, 1
      %p204 = por %p202, %p203
      %p205 = scmp.ne.s32.totalorder %s196, %s197
      %p206 = scmp.eq.s32.totalorder %s29, 0
      %p207 = por %p205, %p206
      %p208 = scmp.ne.s32.totalorder %s196, %s197
      %p209 = scmp.eq.s32.totalorder %s30, 1
      %p210 = por %p208, %p209
      %p212 = scmp.ne.s32.totalorder %s197, %s211
      %p213 = scmp.eq.s32.totalorder %s30, 0
      %p214 = por %p212, %p213
      %s216 = sadd.s32 %s215, 1
      %p219 = scmp.eq.s32.totalorder %s24, 1
      %p220 = scmp.ne.s32.totalorder %s215, %s217
      %p221 = scmp.eq.s32.totalorder %s24, 0
      %p222 = por %p220, %p221
      %p223 = scmp.ne.s32.totalorder %s215, %s217
      %p224 = scmp.eq.s32.totalorder %s29, 1
      %p225 = por %p223, %p224
      %p226 = scmp.ne.s32.totalorder %s217, %s218
      %p227 = scmp.eq.s32.totalorder %s29, 0
      %p228 = por %p226, %p227
      %p229 = scmp.ne.s32.totalorder %s217, %s218
      %p230 = scmp.eq.s32.totalorder %s30, 1
      %p231 = por %p229, %p230
      %p233 = scmp.ne.s32.totalorder %s218, %s232
      %p234 = scmp.eq.s32.totalorder %s30, 0
      %p235 = por %p233, %p234
      %s237 = sadd.s32 %s236, 1
      %p240 = scmp.eq.s32.totalorder %s24, 1
      %p241 = scmp.ne.s32.totalorder %s236, %s238
      %p242 = scmp.eq.s32.totalorder %s24, 0
      %p243 = por %p241, %p242
      %p244 = scmp.ne.s32.totalorder %s236, %s238
      %p245 = scmp.eq.s32.totalorder %s29, 1
      %p246 = por %p244, %p245
      %p247 = scmp.ne.s32.totalorder %s238, %s239
      %p248 = scmp.eq.s32.totalorder %s29, 0
      %p249 = por %p247, %p248
      %p250 = scmp.ne.s32.totalorder %s238, %s239
      %p251 = scmp.eq.s32.totalorder %s30, 1
      %p252 = por %p250, %p251
      %p254 = scmp.ne.s32.totalorder %s239, %s253
      %p255 = scmp.eq.s32.totalorder %s30, 0
      %p256 = por %p254, %p255
      %s258 = sadd.s32 %s257, 1
      %p261 = scmp.eq.s32.totalorder %s24, 1
      %p262 = scmp.ne.s32.totalorder %s257, %s259
      %p263 = scmp.eq.s32.totalorder %s24, 0
      %p264 = por %p262, %p263
      %p265 = scmp.ne.s32.totalorder %s257, %s259
      %p266 = scmp.eq.s32.totalorder %s29, 1
      %p267 = por %p265, %p266
      %p268 = scmp.ne.s32.totalorder %s259, %s260
      %p269 = scmp.eq.s32.totalorder %s29, 0
      %p270 = por %p268, %p269
      %p271 = scmp.ne.s32.totalorder %s259, %s260
      %p272 = scmp.eq.s32.totalorder %s30, 1
      %p273 = por %p271, %p272
      %p275 = scmp.ne.s32.totalorder %s260, %s274
      %p276 = scmp.eq.s32.totalorder %s30, 0
      %p277 = por %p275, %p276
      %s279 = sadd.s32 %s278, 1
      %p282 = scmp.eq.s32.totalorder %s24, 1
      %p283 = scmp.ne.s32.totalorder %s278, %s280
      %p284 = scmp.eq.s32.totalorder %s24, 0
      %p285 = por %p283, %p284
      %p286 = scmp.ne.s32.totalorder %s278, %s280
      %p287 = scmp.eq.s32.totalorder %s29, 1
      %p288 = por %p286, %p287
      %p289 = scmp.ne.s32.totalorder %s280, %s281
      %p290 = scmp.eq.s32.totalorder %s29, 0
      %p291 = por %p289, %p290
      %p292 = scmp.ne.s32.totalorder %s280, %s281
      %p293 = scmp.eq.s32.totalorder %s30, 1
      %p294 = por %p292, %p293
      %p296 = scmp.ne.s32.totalorder %s281, %s295
      %p297 = scmp.eq.s32.totalorder %s30, 0
      %p298 = por %p296, %p297
      %s300 = sadd.s32 %s299, 1
      %p303 = scmp.eq.s32.totalorder %s24, 1
      %p304 = scmp.ne.s32.totalorder %s299, %s301
      %p305 = scmp.eq.s32.totalorder %s24, 0
      %p306 = por %p304, %p305
      %p307 = scmp.ne.s32.totalorder %s299, %s301
      %p308 = scmp.eq.s32.totalorder %s29, 1
      %p309 = por %p307, %p308
      %p310 = scmp.ne.s32.totalorder %s301, %s302
      %p311 = scmp.eq.s32.totalorder %s29, 0
      %p312 = por %p310, %p311
      %p313 = scmp.ne.s32.totalorder %s301, %s302
      %p314 = scmp.eq.s32.totalorder %s30, 1
      %p315 = por %p313, %p314
      %p317 = scmp.ne.s32.totalorder %s302, %s316
      %p318 = scmp.eq.s32.totalorder %s30, 0
      %p319 = por %p317, %p318
      %s321 = sadd.s32 %s320, 1
      %p324 = scmp.eq.s32.totalorder %s24, 1
      %p325 = scmp.ne.s32.totalorder %s320, %s322
      %p326 = scmp.eq.s32.totalorder %s24, 0
      %p327 = por %p325, %p326
      %p328 = scmp.ne.s32.totalorder %s320, %s322
      %p329 = scmp.eq.s32.totalorder %s29, 1
      %p330 = por %p328, %p329
      %p331 = scmp.ne.s32.totalorder %s322, %s323
      %p332 = scmp.eq.s32.totalorder %s29, 0
      %p333 = por %p331, %p332
      %p334 = scmp.ne.s32.totalorder %s322, %s323
      %p335 = scmp.eq.s32.totalorder %s30, 1
      %p336 = por %p334, %p335
      %p338 = scmp.ne.s32.totalorder %s323, %s337
      %p339 = scmp.eq.s32.totalorder %s30, 0
      %p340 = por %p338, %p339
      %s342 = sadd.s32 %s341, 1
      %p345 = scmp.eq.s32.totalorder %s24, 1
      %p346 = scmp.ne.s32.totalorder %s341, %s343
      %p347 = scmp.eq.s32.totalorder %s24, 0
      %p348 = por %p346, %p347
      %p349 = scmp.ne.s32.totalorder %s341, %s343
      %p350 = scmp.eq.s32.totalorder %s29, 1
      %p351 = por %p349, %p350
      %p352 = scmp.ne.s32.totalorder %s343, %s344
      %p353 = scmp.eq.s32.totalorder %s29, 0
      %p354 = por %p352, %p353
      %p355 = scmp.ne.s32.totalorder %s343, %s344
      %p356 = scmp.eq.s32.totalorder %s30, 1
      %p357 = por %p355, %p356
      %p359 = scmp.ne.s32.totalorder %s344, %s358
      %p360 = scmp.eq.s32.totalorder %s30, 0
      %p361 = por %p359, %p360
      %s362 = ssub.s32 %s24, %s31
      %p363 = scmp.eq.s32.totalorder %s362, 0
      %s365 = sadd.s32 %s364, 1
      %s366 = scalar_select %p363, %s364, %s365
      %p369 = pneg %p363
      %p370 = scmp.eq.s32.totalorder %s24, 1
      %p371 = por %p369, %p370
      %p372 = scmp.ne.s32.totalorder %s364, %s367
      %p373 = scmp.eq.s32.totalorder %s24, 0
      %p374 = por %p372, %p373
      %p375 = scmp.ne.s32.totalorder %s364, %s367
      %p376 = scmp.eq.s32.totalorder %s29, 1
      %p377 = por %p375, %p376
      %p378 = scmp.ne.s32.totalorder %s367, %s368
      %p379 = scmp.eq.s32.totalorder %s29, 0
      %p380 = por %p378, %p379
      %p381 = scmp.ne.s32.totalorder %s367, %s368
      %p382 = scmp.eq.s32.totalorder %s30, 1
      %p383 = por %p381, %p382
      %p385 = scmp.ne.s32.totalorder %s368, %s384
      %p386 = scmp.eq.s32.totalorder %s30, 0
      %p387 = por %p385, %p386
      %p388 = scmp.le.s32.totalorder 1, %s24
      %p389 = scmp.lt.s32.totalorder %s24, 3
      %p390 = pnand %p388, %p389
      %p391 = pneg %p390
      // Predicated region
      $region9: #{tpu_custom_call.1} parent=5 // pred_check
        _
      $region10: #{tpu_custom_call.1} parent=5 // pred_check_branch
        %393 = sbr.rel (%p390) target = $region12
      $region11: #{tpu_custom_call.1} parent=5 // pred_region
        %s394 = ssub.s32 %s24, 1
        // Predicated region
        $region13: #{tpu_custom_call.1} parent=11 // pred_check
          %p395 = pneg %p123
        $region14: #{tpu_custom_call.1} parent=11 // pred_check_branch
          %397 = sbr.rel (%p395) target = $region16
        $region15: #{tpu_custom_call.1} parent=11 // pred_region
          _
        $region16: #{tpu_custom_call.1} parent=11 // pred_fallthru
          _
        // Predicated region
        $region17: #{tpu_custom_call.1} parent=11 // pred_check
          %p398 = pneg %p144
        $region18: #{tpu_custom_call.1} parent=11 // pred_check_branch
          %400 = sbr.rel (%p398) target = $region20
        $region19: #{tpu_custom_call.1} parent=11 // pred_region
          _
        $region20: #{tpu_custom_call.1} parent=11 // pred_fallthru
          _
        // Predicated region
        $region21: #{tpu_custom_call.1} parent=11 // pred_check
          %p401 = pneg %p165
        $region22: #{tpu_custom_call.1} parent=11 // pred_check_branch
          %403 = sbr.rel (%p401) target = $region24
        $region23: #{tpu_custom_call.1} parent=11 // pred_region
          _
        $region24: #{tpu_custom_call.1} parent=11 // pred_fallthru
          _
        // Predicated region
        $region25: #{tpu_custom_call.1} parent=11 // pred_check
          %p404 = pneg %p186
        $region26: #{tpu_custom_call.1} parent=11 // pred_check_branch
          %406 = sbr.rel (%p404) target = $region28
        $region27: #{tpu_custom_call.1} parent=11 // pred_region
          _
        $region28: #{tpu_custom_call.1} parent=11 // pred_fallthru
          _
        // Predicated region
        $region29: #{tpu_custom_call.1} parent=11 // pred_check
          %p407 = pneg %p207
        $region30: #{tpu_custom_call.1} parent=11 // pred_check_branch
          %409 = sbr.rel (%p407) target = $region32
        $region31: #{tpu_custom_call.1} parent=11 // pred_region
          _
        $region32: #{tpu_custom_call.1} parent=11 // pred_fallthru
          _
        // Predicated region
        $region33: #{tpu_custom_call.1} parent=11 // pred_check
          %p410 = pneg %p228
        $region34: #{tpu_custom_call.1} parent=11 // pred_check_branch
          %412 = sbr.rel (%p410) target = $region36
        $region35: #{tpu_custom_call.1} parent=11 // pred_region
          _
        $region36: #{tpu_custom_call.1} parent=11 // pred_fallthru
          _
        // Predicated region
        $region37: #{tpu_custom_call.1} parent=11 // pred_check
          %p413 = pneg %p249
        $region38: #{tpu_custom_call.1} parent=11 // pred_check_branch
          %415 = sbr.rel (%p413) target = $region40
        $region39: #{tpu_custom_call.1} parent=11 // pred_region
          _
        $region40: #{tpu_custom_call.1} parent=11 // pred_fallthru
          _
        // Predicated region
        $region41: #{tpu_custom_call.1} parent=11 // pred_check
          %p416 = pneg %p270
        $region42: #{tpu_custom_call.1} parent=11 // pred_check_branch
          %418 = sbr.rel (%p416) target = $region44
        $region43: #{tpu_custom_call.1} parent=11 // pred_region
          _
        $region44: #{tpu_custom_call.1} parent=11 // pred_fallthru
          _
        // Predicated region
        $region45: #{tpu_custom_call.1} parent=11 // pred_check
          %p419 = pneg %p291
        $region46: #{tpu_custom_call.1} parent=11 // pred_check_branch
          %421 = sbr.rel (%p419) target = $region48
        $region47: #{tpu_custom_call.1} parent=11 // pred_region
          _
        $region48: #{tpu_custom_call.1} parent=11 // pred_fallthru
          _
        // Predicated region
        $region49: #{tpu_custom_call.1} parent=11 // pred_check
          %p422 = pneg %p312
        $region50: #{tpu_custom_call.1} parent=11 // pred_check_branch
          %424 = sbr.rel (%p422) target = $region52
        $region51: #{tpu_custom_call.1} parent=11 // pred_region
          _
        $region52: #{tpu_custom_call.1} parent=11 // pred_fallthru
          _
        // Predicated region
        $region53: #{tpu_custom_call.1} parent=11 // pred_check
          %p425 = pneg %p333
        $region54: #{tpu_custom_call.1} parent=11 // pred_check_branch
          %427 = sbr.rel (%p425) target = $region56
        $region55: #{tpu_custom_call.1} parent=11 // pred_region
          _
        $region56: #{tpu_custom_call.1} parent=11 // pred_fallthru
          _
        // Predicated region
        $region57: #{tpu_custom_call.1} parent=11 // pred_check
          %p428 = pneg %p354
        $region58: #{tpu_custom_call.1} parent=11 // pred_check_branch
          %430 = sbr.rel (%p428) target = $region60
        $region59: #{tpu_custom_call.1} parent=11 // pred_region
          _
        $region60: #{tpu_custom_call.1} parent=11 // pred_fallthru
          _
      $region12: #{tpu_custom_call.1} parent=5 // pred_fallthru
        _
      %p431 = scmp.lt.s32.totalorder %s24, 2
      // Predicated region
      $region61: #{tpu_custom_call.1} parent=5 // pred_check
        %p432 = pneg %p431
      $region62: #{tpu_custom_call.1} parent=5 // pred_check_branch
        %434 = sbr.rel (%p432) target = $region64
      $region63: #{tpu_custom_call.1} parent=5 // pred_region
        // Predicated region
        $region65: #{tpu_custom_call.1} parent=63 // pred_check
          %p435 = pneg %p44
        $region66: #{tpu_custom_call.1} parent=63 // pred_check_branch
          %437 = sbr.rel (%p435) target = $region68
        $region67: #{tpu_custom_call.1} parent=63 // pred_region
          %p438 = scmp.lt.s32.totalorder %s24, 1
          %s439 = scalar_select %p438, %s24, 1
          %s440 = smul.addr %s439, 8
          %s441 = scalar_lea.vmem %s0, %s440
        $region68: #{tpu_custom_call.1} parent=63 // pred_fallthru
          _
        // Predicated region
        $region69: #{tpu_custom_call.1} parent=63 // pred_check
          %p442 = pneg %p70
        $region70: #{tpu_custom_call.1} parent=63 // pred_check_branch
          %444 = sbr.rel (%p442) target = $region72
        $region71: #{tpu_custom_call.1} parent=63 // pred_region
          %p445 = scmp.lt.s32.totalorder %s24, 1
          %s446 = scalar_select %p445, %s24, 1
          %s447 = smul.addr %s446, 4
          %s448 = smul.addr %s447, 8
          %s449 = scalar_lea.vmem %s1, %s448
        $region72: #{tpu_custom_call.1} parent=63 // pred_fallthru
          _
        // Predicated region
        $region73: #{tpu_custom_call.1} parent=63 // pred_check
          %p450 = pneg %p96
        $region74: #{tpu_custom_call.1} parent=63 // pred_check_branch
          %452 = sbr.rel (%p450) target = $region76
        $region75: #{tpu_custom_call.1} parent=63 // pred_region
          %p453 = scmp.lt.s32.totalorder %s24, 1
          %s454 = scalar_select %p453, %s24, 1
          %s455 = smul.addr %s454, 4
          %s456 = smul.addr %s455, 8
          %s457 = scalar_lea.vmem %s2, %s456
        $region76: #{tpu_custom_call.1} parent=63 // pred_fallthru
          _
      $region64: #{tpu_custom_call.1} parent=5 // pred_fallthru
        _
      %p458 = scmp.le.s32.totalorder 1, %s24
      %p459 = scmp.lt.s32.totalorder %s24, 3
      %p460 = pnand %p458, %p459
      %p461 = pneg %p460
      // Predicated region
      $region77: #{tpu_custom_call.1} parent=5 // pred_check
        _
      $region78: #{tpu_custom_call.1} parent=5 // pred_check_branch
        %463 = sbr.rel (%p460) target = $region80
      $region79: #{tpu_custom_call.1} parent=5 // pred_region
        %s464 = ssub.s32 %s24, 1
        %p465 = scmp.lt.s32.totalorder %s29, 1
        %s466 = scalar_select %p465, %s29, 1
        %s467 = smul.addr %s466, 8
        %s468 = scalar_lea.vmem %s0, %s467
        %p469 = pneg %p50
        %p470 = pneg %p47
        %p471 = scmp.lt.s32.totalorder %s29, 1
        %s472 = scalar_select %p471, %s29, 1
        %s473 = smul.addr %s472, 4
        %s474 = smul.addr %s473, 8
        %s475 = scalar_lea.vmem %s1, %s474
        %p476 = pneg %p76
        %p477 = pneg %p73
        %p478 = scmp.lt.s32.totalorder %s29, 1
        %s479 = scalar_select %p478, %s29, 1
        %s480 = smul.addr %s479, 4
        %s481 = smul.addr %s480, 8
        %s482 = scalar_lea.vmem %s2, %s481
        %p483 = pneg %p102
        %p484 = pneg %p99
        %p485 = pneg %p123
        %p486 = pneg %p120
        %p487 = pneg %p144
        %p488 = pneg %p141
        %p489 = pneg %p165
        %p490 = pneg %p162
        %p491 = pneg %p186
        %p492 = pneg %p183
        %p493 = pneg %p207
        %p494 = pneg %p204
        %p495 = pneg %p228
        %p496 = pneg %p225
        %p497 = pneg %p249
        %p498 = pneg %p246
        %p499 = pneg %p270
        %p500 = pneg %p267
        %p501 = pneg %p291
        %p502 = pneg %p288
        %p503 = pneg %p312
        %p504 = pneg %p309
        %p505 = pneg %p333
        %p506 = pneg %p330
        %p507 = pneg %p354
        %p508 = pneg %p351
        %p509 = pneg %p380
        %p510 = pneg %p377
        %s511 = sand.u32 %s367, 1
        %s512 = scalar_lea.sflag [#allocation3], %s511
        %s513 = sand.u32 %s367, 1
        %s514 = smul.addr %s513, 8
        %s515 = scalar_lea.vmem [#allocation2], %s514
        %p516 = scmp.lt.s32.totalorder %s29, 1
        %s517 = scalar_select %p516, %s29, 1
        %s518 = smul.addr %s517, 8
        %s519 = scalar_lea.vmem %s0, %s518
        %p520 = scmp.lt.s32.totalorder %s29, 1
        %s521 = scalar_select %p520, %s29, 1
        %s522 = smul.addr %s521, 4
        %s523 = smul.addr %s522, 8
        %s524 = scalar_lea.vmem %s1, %s523
        %p525 = scmp.lt.s32.totalorder %s29, 1
        %s526 = scalar_select %p525, %s29, 1
        %s527 = smul.addr %s526, 4
        %s528 = smul.addr %s527, 8
        %s529 = scalar_lea.vmem %s2, %s528
        %v530 = vld [vmem:[%s519] sm:$0xff]
        %v531 = vld [vmem:[%s524] sm:$0xff]
        %v532 = vld [vmem:[%s524 + $0x8] sm:$0xff]
        %v533 = vld [vmem:[%s524 + $0x10] sm:$0xff]
        %v534 = vld [vmem:[%s524 + $0x18] sm:$0xff]
        %v535 = vld [vmem:[%s529] sm:$0xff]
        %v536 = vld [vmem:[%s529 + $0x8] sm:$0xff]
        %v537 = vld [vmem:[%s529 + $0x10] sm:$0xff]
        %v538 = vld [vmem:[%s529 + $0x18] sm:$0xff]
        %v539 = vld [vmem:[%s3] sm:$0xff]
        %v540 = vld [vmem:[%s3 + $0x8] sm:$0xff]
        %v541 = vld [vmem:[%s3 + $0x10] sm:$0xff]
        %v542 = vld [vmem:[%s3 + $0x18] sm:$0xff]
        %v543 = vld [vmem:[%s4] sm:$0x1]
        %v545 = vperm.slane %v543, 0
        %vm547 = vcmask 261120
        %v549 = vsel %vm547, %v530, 0
        %551 = vmatpush.msra.mxu0 0.0
        %552 = vmatpush.msra.mxu0 0.0
        %553 = vmatpush.msra.mxu0 0.0
        %554 = vmatpush.msra.mxu0 0.0
        %555 = vmatpush.msra.mxu0 0.0
        %556 = vmatpush.msra.mxu0 0.0
        %557 = vmatpush.msra.mxu0 0.0
        %558 = vmatpush.msra.mxu0 0.0
        %559 = vmatpush.msra.mxu0 0.0
        %560 = vmatpush.msra.mxu0 0.0
        %561 = vmatpush.msra.mxu0 0.0
        %562 = vmatpush.msra.mxu0 0.0
        %563 = vmatpush.msra.mxu0 %v542
        %564 = vmatpush.msra.mxu0 %v541
        %565 = vmatpush.msra.mxu0 %v540
        %566 = vmatpush.msra.mxu0 %v539
        %567 = vmatmul.f32.gmra.mxu0 %v549
        %v568 = vpop.f32.mrf.mxu0
        %v569 = vadd.f32 %v545, %v568
        %570 = vdwg.mxu0
        %v571 = vld [vmem:[%s5] sm:$0xff]
        %v572 = vld [vmem:[%s5 + $0x8] sm:$0xff]
        %v573 = vld [vmem:[%s5 + $0x10] sm:$0xff]
        %v574 = vld [vmem:[%s5 + $0x18] sm:$0xff]
        %v575 = vld [vmem:[%s6] sm:$0x1]
        %v577 = vperm.slane %v575, 0
        %v580 = vsel %vm547, %v531, 0
        %v583 = vsel %vm547, %v532, 0
        %v586 = vsel %vm547, %v533, 0
        %v589 = vsel %vm547, %v534, 0
        %591 = vmatpush.msra.mxu0 0.0
        %592 = vmatpush.msra.mxu0 0.0
        %593 = vmatpush.msra.mxu0 0.0
        %594 = vmatpush.msra.mxu0 0.0
        %595 = vmatpush.msra.mxu0 0.0
        %596 = vmatpush.msra.mxu0 0.0
        %597 = vmatpush.msra.mxu0 0.0
        %598 = vmatpush.msra.mxu0 0.0
        %599 = vmatpush.msra.mxu0 0.0
        %600 = vmatpush.msra.mxu0 0.0
        %601 = vmatpush.msra.mxu0 0.0
        %602 = vmatpush.msra.mxu0 0.0
        %603 = vmatpush.msra.mxu0 %v574
        %604 = vmatpush.msra.mxu0 %v573
        %605 = vmatpush.msra.mxu0 %v572
        %606 = vmatpush.msra.mxu0 %v571
        %607 = vmatmul.f32.gmra.mxu0 %v580
        %v608 = vpop.f32.mrf.mxu0
        %v609 = vadd.f32 %v577, %v608
        %610 = vmatmul.f32.gmra.mxu0 %v583
        %v611 = vpop.f32.mrf.mxu0
        %v612 = vadd.f32 %v577, %v611
        %613 = vmatmul.f32.gmra.mxu0 %v586
        %v614 = vpop.f32.mrf.mxu0
        %v615 = vadd.f32 %v577, %v614
        %616 = vmatmul.f32.gmra.mxu0 %v589
        %v617 = vpop.f32.mrf.mxu0
        %v618 = vadd.f32 %v577, %v617
        %619 = vdwg.mxu0
        %v620 = vld [vmem:[%s7] sm:$0xff]
        %v621 = vld [vmem:[%s7 + $0x8] sm:$0xff]
        %v622 = vld [vmem:[%s7 + $0x10] sm:$0xff]
        %v623 = vld [vmem:[%s7 + $0x18] sm:$0xff]
        %v624 = vld [vmem:[%s8] sm:$0x1]
        %v626 = vperm.slane %v624, 0
        %v629 = vsel %vm547, %v535, 0
        %v632 = vsel %vm547, %v536, 0
        %v635 = vsel %vm547, %v537, 0
        %v638 = vsel %vm547, %v538, 0
        %640 = vmatpush.msra.mxu0 0.0
        %641 = vmatpush.msra.mxu0 0.0
        %642 = vmatpush.msra.mxu0 0.0
        %643 = vmatpush.msra.mxu0 0.0
        %644 = vmatpush.msra.mxu0 0.0
        %645 = vmatpush.msra.mxu0 0.0
        %646 = vmatpush.msra.mxu0 0.0
        %647 = vmatpush.msra.mxu0 0.0
        %648 = vmatpush.msra.mxu0 0.0
        %649 = vmatpush.msra.mxu0 0.0
        %650 = vmatpush.msra.mxu0 0.0
        %651 = vmatpush.msra.mxu0 0.0
        %652 = vmatpush.msra.mxu0 %v623
        %653 = vmatpush.msra.mxu0 %v622
        %654 = vmatpush.msra.mxu0 %v621
        %655 = vmatpush.msra.mxu0 %v620
        %656 = vmatmul.f32.gmra.mxu0 %v629
        %v657 = vpop.f32.mrf.mxu0
        %v658 = vadd.f32 %v626, %v657
        %659 = vmatmul.f32.gmra.mxu0 %v632
        %v660 = vpop.f32.mrf.mxu0
        %v661 = vadd.f32 %v626, %v660
        %662 = vmatmul.f32.gmra.mxu0 %v635
        %v663 = vpop.f32.mrf.mxu0
        %v664 = vadd.f32 %v626, %v663
        %665 = vmatmul.f32.gmra.mxu0 %v638
        %v666 = vpop.f32.mrf.mxu0
        %v667 = vadd.f32 %v626, %v666
        %668 = vdwg.mxu0
        %vm669 = vcmask 64512
        %v671 = vsel %vm669, %v569, 0
        %v674 = vsel %vm669, %v609, 0
        %v677 = vsel %vm669, %v612, 0
        %v680 = vsel %vm669, %v615, 0
        %v683 = vsel %vm669, %v618, 0
        %685 = vmatpush.xpose.msra.mxu0 0.0
        %686 = vmatpush.xpose.msra.mxu0 0.0
        %687 = vmatpush.xpose.msra.mxu0 0.0
        %688 = vmatpush.xpose.msra.mxu0 0.0
        %689 = vmatpush.xpose.msra.mxu0 0.0
        %690 = vmatpush.xpose.msra.mxu0 0.0
        %691 = vmatpush.xpose.msra.mxu0 0.0
        %692 = vmatpush.xpose.msra.mxu0 0.0
        %693 = vmatpush.xpose.msra.mxu0 0.0
        %694 = vmatpush.xpose.msra.mxu0 0.0
        %695 = vmatpush.xpose.msra.mxu0 0.0
        %696 = vmatpush.xpose.msra.mxu0 0.0
        %697 = vmatpush.xpose.msra.mxu0 %v683
        %698 = vmatpush.xpose.msra.mxu0 %v680
        %699 = vmatpush.xpose.msra.mxu0 %v677
        %700 = vmatpush.xpose.msra.mxu0 %v674
        %701 = vmatmul.f32.gmra.mxu0 %v671
        %v702 = vpop.f32.mrf.mxu0
        %v703 = vadd.f32 0.0, %v702
        %704 = vdwg.mxu0
        %v705 = vmul.f32 %v703, 0.35355338
        %v706 = vsel %vm547, %v705, -inf
        %707 = vmax.xlane.f32.xlu0 %v706
        %v708 = vpop.xlane.xlu0 %707
        %vm709 = vcmp.ge.f32.partialorder %v705, %v708
        %v710 = vsel %vm709, %v705, 0.0
        %v711 = vsel %vm547, %v710, -inf
        %712 = vmax.xlane.f32.xlu0 %v711
        %v713 = vpop.xlane.xlu0 %712
        %v714 = vsub.f32 %v710, %v713
        %v715 = vmul.f32 %v714, 1.442695
        %v716 = vpow.pop %v715
        %v717 = vsel %vm547, %v716, 0.0
        %718 = vadd.xlane.f32.xlu0 %v717
        %v719 = vpop.xlane.xlu0 %718
        %v720 = vrcp.pop %v719
        %v721 = vmul.f32 %v719, %v720
        %v722 = vsub.f32 1.0, %v721
        %v723 = vmul.f32 %v720, %v722
        %v724 = vadd.f32 %v720, %v723
        %vm725 = vweird.f32 %v719
        %vm726 = vweird.f32 %v720
        %vm727 = vmor %vm725, %vm726
        %v728 = vsel %vm727, %v720, %v724
        %v729 = vand.u32 2147483647, %v719
        %vm730 = vcmp.eq.f32.partialorder %v729, 8.507059e+37
        %v731 = vand.u32 %v719, 2147483648
        %v732 = vor.u32 1.1754944e-38, %v731
        %v733 = vsel %vm730, %v732, %v728
        %v734 = vmul.f32 %v716, %v733
        %v736 = vsel %vm547, %v734, 0
        %738 = vmatpush.msra.mxu0 0.0
        %739 = vmatpush.msra.mxu0 0.0
        %740 = vmatpush.msra.mxu0 0.0
        %741 = vmatpush.msra.mxu0 0.0
        %742 = vmatpush.msra.mxu0 0.0
        %743 = vmatpush.msra.mxu0 0.0
        %744 = vmatpush.msra.mxu0 0.0
        %745 = vmatpush.msra.mxu0 0.0
        %746 = vmatpush.msra.mxu0 0.0
        %747 = vmatpush.msra.mxu0 0.0
        %748 = vmatpush.msra.mxu0 0.0
        %749 = vmatpush.msra.mxu0 0.0
        %750 = vmatpush.msra.mxu0 %v667
        %751 = vmatpush.msra.mxu0 %v664
        %752 = vmatpush.msra.mxu0 %v661
        %753 = vmatpush.msra.mxu0 %v658
        %754 = vmatmul.f32.gmra.mxu0 %v736
        %v755 = vpop.f32.mrf.mxu0
        %v756 = vadd.f32 0.0, %v755
        %757 = vdwg.mxu0
        %v758 = vsel %vm669, %v756, 0.0
        %v759 = vrot.slane %v758, 4
        %v760 = vadd.f32 %v758, %v759
        %v761 = vrot.slane %v760, 2
        %v762 = vadd.f32 %v760, %v761
        %v763 = vrot.slane %v762, 1
        %v764 = vadd.f32 %v762, %v763
        %v765 = vld [vmem:[%s9] sm:$0xff]
        %s766 = scalar_lea.vmem %s3, 32
        %v767 = vld [vmem:[%s766] sm:$0xff]
        %v768 = vld [vmem:[%s766 + $0x8] sm:$0xff]
        %v769 = vld [vmem:[%s766 + $0x10] sm:$0xff]
        %v770 = vld [vmem:[%s766 + $0x18] sm:$0xff]
        %s771 = scalar_lea.vmem %s4, 1
        %v772 = vld [vmem:[%s771] sm:$0x1]
        %v774 = vperm.slane %v772, 0
        %776 = vmatpush.msra.mxu0 0.0
        %777 = vmatpush.msra.mxu0 0.0
        %778 = vmatpush.msra.mxu0 0.0
        %779 = vmatpush.msra.mxu0 0.0
        %780 = vmatpush.msra.mxu0 0.0
        %781 = vmatpush.msra.mxu0 0.0
        %782 = vmatpush.msra.mxu0 0.0
        %783 = vmatpush.msra.mxu0 0.0
        %784 = vmatpush.msra.mxu0 0.0
        %785 = vmatpush.msra.mxu0 0.0
        %786 = vmatpush.msra.mxu0 0.0
        %787 = vmatpush.msra.mxu0 0.0
        %788 = vmatpush.msra.mxu0 %v770
        %789 = vmatpush.msra.mxu0 %v769
        %790 = vmatpush.msra.mxu0 %v768
        %791 = vmatpush.msra.mxu0 %v767
        %792 = vmatmul.f32.gmra.mxu0 %v549
        %v793 = vpop.f32.mrf.mxu0
        %v794 = vadd.f32 %v774, %v793
        %795 = vdwg.mxu0
        %s796 = scalar_lea.vmem %s5, 32
        %v797 = vld [vmem:[%s796] sm:$0xff]
        %v798 = vld [vmem:[%s796 + $0x8] sm:$0xff]
        %v799 = vld [vmem:[%s796 + $0x10] sm:$0xff]
        %v800 = vld [vmem:[%s796 + $0x18] sm:$0xff]
        %s801 = scalar_lea.vmem %s6, 1
        %v802 = vld [vmem:[%s801] sm:$0x1]
        %v804 = vperm.slane %v802, 0
        %806 = vmatpush.msra.mxu0 0.0
        %807 = vmatpush.msra.mxu0 0.0
        %808 = vmatpush.msra.mxu0 0.0
        %809 = vmatpush.msra.mxu0 0.0
        %810 = vmatpush.msra.mxu0 0.0
        %811 = vmatpush.msra.mxu0 0.0
        %812 = vmatpush.msra.mxu0 0.0
        %813 = vmatpush.msra.mxu0 0.0
        %814 = vmatpush.msra.mxu0 0.0
        %815 = vmatpush.msra.mxu0 0.0
        %816 = vmatpush.msra.mxu0 0.0
        %817 = vmatpush.msra.mxu0 0.0
        %818 = vmatpush.msra.mxu0 %v800
        %819 = vmatpush.msra.mxu0 %v799
        %820 = vmatpush.msra.mxu0 %v798
        %821 = vmatpush.msra.mxu0 %v797
        %822 = vmatmul.f32.gmra.mxu0 %v580
        %v823 = vpop.f32.mrf.mxu0
        %v824 = vadd.f32 %v804, %v823
        %825 = vmatmul.f32.gmra.mxu0 %v583
        %v826 = vpop.f32.mrf.mxu0
        %v827 = vadd.f32 %v804, %v826
        %828 = vmatmul.f32.gmra.mxu0 %v586
        %v829 = vpop.f32.mrf.mxu0
        %v830 = vadd.f32 %v804, %v829
        %831 = vmatmul.f32.gmra.mxu0 %v589
        %v832 = vpop.f32.mrf.mxu0
        %v833 = vadd.f32 %v804, %v832
        %834 = vdwg.mxu0
        %s835 = scalar_lea.vmem %s7, 32
        %v836 = vld [vmem:[%s835] sm:$0xff]
        %v837 = vld [vmem:[%s835 + $0x8] sm:$0xff]
        %v838 = vld [vmem:[%s835 + $0x10] sm:$0xff]
        %v839 = vld [vmem:[%s835 + $0x18] sm:$0xff]
        %s840 = scalar_lea.vmem %s8, 1
        %v841 = vld [vmem:[%s840] sm:$0x1]
        %v843 = vperm.slane %v841, 0
        %845 = vmatpush.msra.mxu0 0.0
        %846 = vmatpush.msra.mxu0 0.0
        %847 = vmatpush.msra.mxu0 0.0
        %848 = vmatpush.msra.mxu0 0.0
        %849 = vmatpush.msra.mxu0 0.0
        %850 = vmatpush.msra.mxu0 0.0
        %851 = vmatpush.msra.mxu0 0.0
        %852 = vmatpush.msra.mxu0 0.0
        %853 = vmatpush.msra.mxu0 0.0
        %854 = vmatpush.msra.mxu0 0.0
        %855 = vmatpush.msra.mxu0 0.0
        %856 = vmatpush.msra.mxu0 0.0
        %857 = vmatpush.msra.mxu0 %v839
        %858 = vmatpush.msra.mxu0 %v838
        %859 = vmatpush.msra.mxu0 %v837
        %860 = vmatpush.msra.mxu0 %v836
        %861 = vmatmul.f32.gmra.mxu0 %v629
        %v862 = vpop.f32.mrf.mxu0
        %v863 = vadd.f32 %v843, %v862
        %864 = vmatmul.f32.gmra.mxu0 %v632
        %v865 = vpop.f32.mrf.mxu0
        %v866 = vadd.f32 %v843, %v865
        %867 = vmatmul.f32.gmra.mxu0 %v635
        %v868 = vpop.f32.mrf.mxu0
        %v869 = vadd.f32 %v843, %v868
        %870 = vmatmul.f32.gmra.mxu0 %v638
        %v871 = vpop.f32.mrf.mxu0
        %v872 = vadd.f32 %v843, %v871
        %873 = vdwg.mxu0
        %v875 = vsel %vm669, %v794, 0
        %v878 = vsel %vm669, %v824, 0
        %v881 = vsel %vm669, %v827, 0
        %v884 = vsel %vm669, %v830, 0
        %v887 = vsel %vm669, %v833, 0
        %889 = vmatpush.xpose.msra.mxu0 0.0
        %890 = vmatpush.xpose.msra.mxu0 0.0
        %891 = vmatpush.xpose.msra.mxu0 0.0
        %892 = vmatpush.xpose.msra.mxu0 0.0
        %893 = vmatpush.xpose.msra.mxu0 0.0
        %894 = vmatpush.xpose.msra.mxu0 0.0
        %895 = vmatpush.xpose.msra.mxu0 0.0
        %896 = vmatpush.xpose.msra.mxu0 0.0
        %897 = vmatpush.xpose.msra.mxu0 0.0
        %898 = vmatpush.xpose.msra.mxu0 0.0
        %899 = vmatpush.xpose.msra.mxu0 0.0
        %900 = vmatpush.xpose.msra.mxu0 0.0
        %901 = vmatpush.xpose.msra.mxu0 %v887
        %902 = vmatpush.xpose.msra.mxu0 %v884
        %903 = vmatpush.xpose.msra.mxu0 %v881
        %904 = vmatpush.xpose.msra.mxu0 %v878
        %905 = vmatmul.f32.gmra.mxu0 %v875
        %v906 = vpop.f32.mrf.mxu0
        %v907 = vadd.f32 0.0, %v906
        %908 = vdwg.mxu0
        %v909 = vmul.f32 %v907, 0.35355338
        %v910 = vsel %vm547, %v909, -inf
        %911 = vmax.xlane.f32.xlu0 %v910
        %v912 = vpop.xlane.xlu0 %911
        %vm913 = vcmp.eq.f32.partialorder %v909, %v912
        %v914 = vsel %vm913, -inf, %v909
        %v915 = vsel %vm547, %v914, -inf
        %916 = vmax.xlane.f32.xlu0 %v915
        %v917 = vpop.xlane.xlu0 %916
        %vm918 = vcmp.eq.f32.partialorder %v914, %v917
        %v919 = vsel %vm918, -inf, %v914
        %v920 = vsel %vm547, %v919, -inf
        %921 = vmax.xlane.f32.xlu0 %v920
        %v922 = vpop.xlane.xlu0 %921
        %vm923 = vcmp.eq.f32.partialorder %v919, %v922
        %v924 = vsel %vm923, -inf, %v919
        %v925 = vsel %vm547, %v924, -inf
        %926 = vmax.xlane.f32.xlu0 %v925
        %v927 = vpop.xlane.xlu0 %926
        %vm928 = vcmp.eq.f32.partialorder %v924, %v927
        %v929 = vsel %vm928, -inf, %v924
        %v930 = vsel %vm547, %v929, -inf
        %931 = vmax.xlane.f32.xlu0 %v930
        %v932 = vpop.xlane.xlu0 %931
        %vm933 = vcmp.eq.f32.partialorder %v929, %v932
        %v934 = vsel %vm933, -inf, %v929
        %v935 = vsel %vm547, %v934, -inf
        %936 = vmax.xlane.f32.xlu0 %v935
        %v937 = vpop.xlane.xlu0 %936
        %vm938 = vcmp.eq.f32.partialorder %v934, %v937
        %v939 = vsel %vm938, -inf, %v934
        %v940 = vsel %vm547, %v939, -inf
        %941 = vmax.xlane.f32.xlu0 %v940
        %v942 = vpop.xlane.xlu0 %941
        %vm943 = vcmp.eq.f32.partialorder %v939, %v942
        %v944 = vsel %vm943, -inf, %v939
        %v945 = vsel %vm547, %v944, -inf
        %946 = vmax.xlane.f32.xlu0 %v945
        %v947 = vpop.xlane.xlu0 %946
        %vm948 = vcmp.eq.f32.partialorder %v944, %v947
        %v949 = vsel %vm948, -inf, %v944
        %v950 = vsel %vm547, %v949, -inf
        %951 = vmax.xlane.f32.xlu0 %v950
        %v952 = vpop.xlane.xlu0 %951
        %vm953 = vcmp.ge.f32.partialorder %v909, %v952
        %v954 = vsel %vm953, %v909, 0.0
        %v955 = vsel %vm547, %v954, -inf
        %956 = vmax.xlane.f32.xlu0 %v955
        %v957 = vpop.xlane.xlu0 %956
        %v958 = vsub.f32 %v954, %v957
        %v959 = vmul.f32 %v958, 1.442695
        %v960 = vpow.pop %v959
        %v961 = vsel %vm547, %v960, 0.0
        %962 = vadd.xlane.f32.xlu0 %v961
        %v963 = vpop.xlane.xlu0 %962
        %v964 = vrcp.pop %v963
        %v965 = vmul.f32 %v963, %v964
        %v966 = vsub.f32 1.0, %v965
        %v967 = vmul.f32 %v964, %v966
        %v968 = vadd.f32 %v964, %v967
        %vm969 = vweird.f32 %v963
        %vm970 = vweird.f32 %v964
        %vm971 = vmor %vm969, %vm970
        %v972 = vsel %vm971, %v964, %v968
        %v973 = vand.u32 2147483647, %v963
        %vm974 = vcmp.eq.f32.partialorder %v973, 8.507059e+37
        %v975 = vand.u32 %v963, 2147483648
        %v976 = vor.u32 1.1754944e-38, %v975
        %v977 = vsel %vm974, %v976, %v972
        %v978 = vmul.f32 %v960, %v977
        %v980 = vsel %vm547, %v978, 0
        %982 = vmatpush.msra.mxu0 0.0
        %983 = vmatpush.msra.mxu0 0.0
        %984 = vmatpush.msra.mxu0 0.0
        %985 = vmatpush.msra.mxu0 0.0
        %986 = vmatpush.msra.mxu0 0.0
        %987 = vmatpush.msra.mxu0 0.0
        %988 = vmatpush.msra.mxu0 0.0
        %989 = vmatpush.msra.mxu0 0.0
        %990 = vmatpush.msra.mxu0 0.0
        %991 = vmatpush.msra.mxu0 0.0
        %992 = vmatpush.msra.mxu0 0.0
        %993 = vmatpush.msra.mxu0 0.0
        %994 = vmatpush.msra.mxu0 %v872
        %995 = vmatpush.msra.mxu0 %v869
        %996 = vmatpush.msra.mxu0 %v866
        %997 = vmatpush.msra.mxu0 %v863
        %998 = vmatmul.f32.gmra.mxu0 %v980
        %v999 = vpop.f32.mrf.mxu0
        %v1000 = vadd.f32 0.0, %v999
        %1001 = vdwg.mxu0
        %v1002 = vsel %vm669, %v1000, 0.0
        %v1003 = vrot.slane %v1002, 4
        %v1004 = vadd.f32 %v1002, %v1003
        %v1005 = vrot.slane %v1004, 2
        %v1006 = vadd.f32 %v1004, %v1005
        %v1007 = vrot.slane %v1006, 1
        %v1008 = vadd.f32 %v1006, %v1007
        %s1009 = scalar_lea.vmem %s9, 8
        %v1010 = vld [vmem:[%s1009] sm:$0xff]
        %v1012 = vsel %vm669, %v1008, 0
        %1014 = vmatpush.msra.mxu0 0.0
        %1015 = vmatpush.msra.mxu0 0.0
        %1016 = vmatpush.msra.mxu0 0.0
        %1017 = vmatpush.msra.mxu0 0.0
        %1018 = vmatpush.msra.mxu0 0.0
        %1019 = vmatpush.msra.mxu0 0.0
        %1020 = vmatpush.msra.mxu0 0.0
        %1021 = vmatpush.msra.mxu0 0.0
        %1022 = vmatpush.msra.mxu0 0.0
        %1023 = vmatpush.msra.mxu0 0.0
        %1024 = vmatpush.msra.mxu0 0.0
        %1025 = vmatpush.msra.mxu0 0.0
        %1026 = vmatpush.msra.mxu0 0.0
        %1027 = vmatpush.msra.mxu0 0.0
        %1028 = vmatpush.msra.mxu0 0.0
        %1029 = vmatpush.msra.mxu0 %v1010
        %1030 = vmatmul.f32.gmra.mxu0 %v1012
        %v1031 = vpop.f32.mrf.mxu0
        %v1032 = vadd.f32 0.0, %v1031
        %1033 = vdwg.mxu0
        %v1035 = vsel %vm669, %v764, 0
        %1037 = vmatpush.msra.mxu0 0.0
        %1038 = vmatpush.msra.mxu0 0.0
        %1039 = vmatpush.msra.mxu0 0.0
        %1040 = vmatpush.msra.mxu0 0.0
        %1041 = vmatpush.msra.mxu0 0.0
        %1042 = vmatpush.msra.mxu0 0.0
        %1043 = vmatpush.msra.mxu0 0.0
        %1044 = vmatpush.msra.mxu0 0.0
        %1045 = vmatpush.msra.mxu0 0.0
        %1046 = vmatpush.msra.mxu0 0.0
        %1047 = vmatpush.msra.mxu0 0.0
        %1048 = vmatpush.msra.mxu0 0.0
        %1049 = vmatpush.msra.mxu0 0.0
        %1050 = vmatpush.msra.mxu0 0.0
        %1051 = vmatpush.msra.mxu0 0.0
        %1052 = vmatpush.msra.mxu0 %v765
        %1053 = vmatmul.f32.gmra.mxu0 %v1035
        %v1054 = vpop.f32.mrf.mxu0
        %v1055 = vadd.f32 %v1032, %v1054
        %1056 = vdwg.mxu0
        %s1057 = scalar_lea.vmem %s3, 64
        %v1058 = vld [vmem:[%s1057] sm:$0xff]
        %v1059 = vld [vmem:[%s1057 + $0x8] sm:$0xff]
        %v1060 = vld [vmem:[%s1057 + $0x10] sm:$0xff]
        %v1061 = vld [vmem:[%s1057 + $0x18] sm:$0xff]
        %s1062 = scalar_lea.vmem %s4, 2
        %v1063 = vld [vmem:[%s1062] sm:$0x1]
        %v1065 = vperm.slane %v1063, 0
        %1067 = vmatpush.msra.mxu0 0.0
        %1068 = vmatpush.msra.mxu0 0.0
        %1069 = vmatpush.msra.mxu0 0.0
        %1070 = vmatpush.msra.mxu0 0.0
        %1071 = vmatpush.msra.mxu0 0.0
        %1072 = vmatpush.msra.mxu0 0.0
        %1073 = vmatpush.msra.mxu0 0.0
        %1074 = vmatpush.msra.mxu0 0.0
        %1075 = vmatpush.msra.mxu0 0.0
        %1076 = vmatpush.msra.mxu0 0.0
        %1077 = vmatpush.msra.mxu0 0.0
        %1078 = vmatpush.msra.mxu0 0.0
        %1079 = vmatpush.msra.mxu0 %v1061
        %1080 = vmatpush.msra.mxu0 %v1060
        %1081 = vmatpush.msra.mxu0 %v1059
        %1082 = vmatpush.msra.mxu0 %v1058
        %1083 = vmatmul.f32.gmra.mxu0 %v549
        %v1084 = vpop.f32.mrf.mxu0
        %v1085 = vadd.f32 %v1065, %v1084
        %1086 = vdwg.mxu0
        %s1087 = scalar_lea.vmem %s5, 64
        %v1088 = vld [vmem:[%s1087] sm:$0xff]
        %v1089 = vld [vmem:[%s1087 + $0x8] sm:$0xff]
        %v1090 = vld [vmem:[%s1087 + $0x10] sm:$0xff]
        %v1091 = vld [vmem:[%s1087 + $0x18] sm:$0xff]
        %s1092 = scalar_lea.vmem %s6, 2
        %v1093 = vld [vmem:[%s1092] sm:$0x1]
        %v1095 = vperm.slane %v1093, 0
        %1097 = vmatpush.msra.mxu0 0.0
        %1098 = vmatpush.msra.mxu0 0.0
        %1099 = vmatpush.msra.mxu0 0.0
        %1100 = vmatpush.msra.mxu0 0.0
        %1101 = vmatpush.msra.mxu0 0.0
        %1102 = vmatpush.msra.mxu0 0.0
        %1103 = vmatpush.msra.mxu0 0.0
        %1104 = vmatpush.msra.mxu0 0.0
        %1105 = vmatpush.msra.mxu0 0.0
        %1106 = vmatpush.msra.mxu0 0.0
        %1107 = vmatpush.msra.mxu0 0.0
        %1108 = vmatpush.msra.mxu0 0.0
        %1109 = vmatpush.msra.mxu0 %v1091
        %1110 = vmatpush.msra.mxu0 %v1090
        %1111 = vmatpush.msra.mxu0 %v1089
        %1112 = vmatpush.msra.mxu0 %v1088
        %1113 = vmatmul.f32.gmra.mxu0 %v580
        %v1114 = vpop.f32.mrf.mxu0
        %v1115 = vadd.f32 %v1095, %v1114
        %1116 = vmatmul.f32.gmra.mxu0 %v583
        %v1117 = vpop.f32.mrf.mxu0
        %v1118 = vadd.f32 %v1095, %v1117
        %1119 = vmatmul.f32.gmra.mxu0 %v586
        %v1120 = vpop.f32.mrf.mxu0
        %v1121 = vadd.f32 %v1095, %v1120
        %1122 = vmatmul.f32.gmra.mxu0 %v589
        %v1123 = vpop.f32.mrf.mxu0
        %v1124 = vadd.f32 %v1095, %v1123
        %1125 = vdwg.mxu0
        %s1126 = scalar_lea.vmem %s7, 64
        %v1127 = vld [vmem:[%s1126] sm:$0xff]
        %v1128 = vld [vmem:[%s1126 + $0x8] sm:$0xff]
        %v1129 = vld [vmem:[%s1126 + $0x10] sm:$0xff]
        %v1130 = vld [vmem:[%s1126 + $0x18] sm:$0xff]
        %s1131 = scalar_lea.vmem %s8, 2
        %v1132 = vld [vmem:[%s1131] sm:$0x1]
        %v1134 = vperm.slane %v1132, 0
        %1136 = vmatpush.msra.mxu0 0.0
        %1137 = vmatpush.msra.mxu0 0.0
        %1138 = vmatpush.msra.mxu0 0.0
        %1139 = vmatpush.msra.mxu0 0.0
        %1140 = vmatpush.msra.mxu0 0.0
        %1141 = vmatpush.msra.mxu0 0.0
        %1142 = vmatpush.msra.mxu0 0.0
        %1143 = vmatpush.msra.mxu0 0.0
        %1144 = vmatpush.msra.mxu0 0.0
        %1145 = vmatpush.msra.mxu0 0.0
        %1146 = vmatpush.msra.mxu0 0.0
        %1147 = vmatpush.msra.mxu0 0.0
        %1148 = vmatpush.msra.mxu0 %v1130
        %1149 = vmatpush.msra.mxu0 %v1129
        %1150 = vmatpush.msra.mxu0 %v1128
        %1151 = vmatpush.msra.mxu0 %v1127
        %1152 = vmatmul.f32.gmra.mxu0 %v629
        %v1153 = vpop.f32.mrf.mxu0
        %v1154 = vadd.f32 %v1134, %v1153
        %1155 = vmatmul.f32.gmra.mxu0 %v632
        %v1156 = vpop.f32.mrf.mxu0
        %v1157 = vadd.f32 %v1134, %v1156
        %1158 = vmatmul.f32.gmra.mxu0 %v635
        %v1159 = vpop.f32.mrf.mxu0
        %v1160 = vadd.f32 %v1134, %v1159
        %1161 = vmatmul.f32.gmra.mxu0 %v638
        %v1162 = vpop.f32.mrf.mxu0
        %v1163 = vadd.f32 %v1134, %v1162
        %1164 = vdwg.mxu0
        %v1166 = vsel %vm669, %v1085, 0
        %v1169 = vsel %vm669, %v1115, 0
        %v1172 = vsel %vm669, %v1118, 0
        %v1175 = vsel %vm669, %v1121, 0
        %v1178 = vsel %vm669, %v1124, 0
        %1180 = vmatpush.xpose.msra.mxu0 0.0
        %1181 = vmatpush.xpose.msra.mxu0 0.0
        %1182 = vmatpush.xpose.msra.mxu0 0.0
        %1183 = vmatpush.xpose.msra.mxu0 0.0
        %1184 = vmatpush.xpose.msra.mxu0 0.0
        %1185 = vmatpush.xpose.msra.mxu0 0.0
        %1186 = vmatpush.xpose.msra.mxu0 0.0
        %1187 = vmatpush.xpose.msra.mxu0 0.0
        %1188 = vmatpush.xpose.msra.mxu0 0.0
        %1189 = vmatpush.xpose.msra.mxu0 0.0
        %1190 = vmatpush.xpose.msra.mxu0 0.0
        %1191 = vmatpush.xpose.msra.mxu0 0.0
        %1192 = vmatpush.xpose.msra.mxu0 %v1178
        %1193 = vmatpush.xpose.msra.mxu0 %v1175
        %1194 = vmatpush.xpose.msra.mxu0 %v1172
        %1195 = vmatpush.xpose.msra.mxu0 %v1169
        %1196 = vmatmul.f32.gmra.mxu0 %v1166
        %v1197 = vpop.f32.mrf.mxu0
        %v1198 = vadd.f32 0.0, %v1197
        %1199 = vdwg.mxu0
        %v1200 = vmul.f32 %v1198, 0.35355338
        %v1201 = vsel %vm547, %v1200, -inf
        %1202 = vmax.xlane.f32.xlu0 %v1201
        %v1203 = vpop.xlane.xlu0 %1202
        %vm1204 = vcmp.eq.f32.partialorder %v1200, %v1203
        %v1205 = vsel %vm1204, -inf, %v1200
        %v1206 = vsel %vm547, %v1205, -inf
        %1207 = vmax.xlane.f32.xlu0 %v1206
        %v1208 = vpop.xlane.xlu0 %1207
        %vm1209 = vcmp.eq.f32.partialorder %v1205, %v1208
        %v1210 = vsel %vm1209, -inf, %v1205
        %v1211 = vsel %vm547, %v1210, -inf
        %1212 = vmax.xlane.f32.xlu0 %v1211
        %v1213 = vpop.xlane.xlu0 %1212
        %vm1214 = vcmp.eq.f32.partialorder %v1210, %v1213
        %v1215 = vsel %vm1214, -inf, %v1210
        %v1216 = vsel %vm547, %v1215, -inf
        %1217 = vmax.xlane.f32.xlu0 %v1216
        %v1218 = vpop.xlane.xlu0 %1217
        %vm1219 = vcmp.eq.f32.partialorder %v1215, %v1218
        %v1220 = vsel %vm1219, -inf, %v1215
        %v1221 = vsel %vm547, %v1220, -inf
        %1222 = vmax.xlane.f32.xlu0 %v1221
        %v1223 = vpop.xlane.xlu0 %1222
        %vm1224 = vcmp.eq.f32.partialorder %v1220, %v1223
        %v1225 = vsel %vm1224, -inf, %v1220
        %v1226 = vsel %vm547, %v1225, -inf
        %1227 = vmax.xlane.f32.xlu0 %v1226
        %v1228 = vpop.xlane.xlu0 %1227
        %vm1229 = vcmp.eq.f32.partialorder %v1225, %v1228
        %v1230 = vsel %vm1229, -inf, %v1225
        %v1231 = vsel %vm547, %v1230, -inf
        %1232 = vmax.xlane.f32.xlu0 %v1231
        %v1233 = vpop.xlane.xlu0 %1232
        %vm1234 = vcmp.eq.f32.partialorder %v1230, %v1233
        %v1235 = vsel %vm1234, -inf, %v1230
        %v1236 = vsel %vm547, %v1235, -inf
        %1237 = vmax.xlane.f32.xlu0 %v1236
        %v1238 = vpop.xlane.xlu0 %1237
        %vm1239 = vcmp.eq.f32.partialorder %v1235, %v1238
        %v1240 = vsel %vm1239, -inf, %v1235
        %v1241 = vsel %vm547, %v1240, -inf
        %1242 = vmax.xlane.f32.xlu0 %v1241
        %v1243 = vpop.xlane.xlu0 %1242
        %vm1244 = vcmp.eq.f32.partialorder %v1240, %v1243
        %v1245 = vsel %vm1244, -inf, %v1240
        %v1246 = vsel %vm547, %v1245, -inf
        %1247 = vmax.xlane.f32.xlu0 %v1246
        %v1248 = vpop.xlane.xlu0 %1247
        %vm1249 = vcmp.eq.f32.partialorder %v1245, %v1248
        %v1250 = vsel %vm1249, -inf, %v1245
        %v1251 = vsel %vm547, %v1250, -inf
        %1252 = vmax.xlane.f32.xlu0 %v1251
        %v1253 = vpop.xlane.xlu0 %1252
        %vm1254 = vcmp.eq.f32.partialorder %v1250, %v1253
        %v1255 = vsel %vm1254, -inf, %v1250
        %v1256 = vsel %vm547, %v1255, -inf
        %1257 = vmax.xlane.f32.xlu0 %v1256
        %v1258 = vpop.xlane.xlu0 %1257
        %vm1259 = vcmp.eq.f32.partialorder %v1255, %v1258
        %v1260 = vsel %vm1259, -inf, %v1255
        %v1261 = vsel %vm547, %v1260, -inf
        %1262 = vmax.xlane.f32.xlu0 %v1261
        %v1263 = vpop.xlane.xlu0 %1262
        %vm1264 = vcmp.eq.f32.partialorder %v1260, %v1263
        %v1265 = vsel %vm1264, -inf, %v1260
        %v1266 = vsel %vm547, %v1265, -inf
        %1267 = vmax.xlane.f32.xlu0 %v1266
        %v1268 = vpop.xlane.xlu0 %1267
        %vm1269 = vcmp.eq.f32.partialorder %v1265, %v1268
        %v1270 = vsel %vm1269, -inf, %v1265
        %v1271 = vsel %vm547, %v1270, -inf
        %1272 = vmax.xlane.f32.xlu0 %v1271
        %v1273 = vpop.xlane.xlu0 %1272
        %vm1274 = vcmp.eq.f32.partialorder %v1270, %v1273
        %v1275 = vsel %vm1274, -inf, %v1270
        %v1276 = vsel %vm547, %v1275, -inf
        %1277 = vmax.xlane.f32.xlu0 %v1276
        %v1278 = vpop.xlane.xlu0 %1277
        %vm1279 = vcmp.ge.f32.partialorder %v1200, %v1278
        %v1280 = vsel %vm1279, %v1200, 0.0
        %v1281 = vsel %vm547, %v1280, -inf
        %1282 = vmax.xlane.f32.xlu0 %v1281
        %v1283 = vpop.xlane.xlu0 %1282
        %v1284 = vsub.f32 %v1280, %v1283
        %v1285 = vmul.f32 %v1284, 1.442695
        %v1286 = vpow.pop %v1285
        %v1287 = vsel %vm547, %v1286, 0.0
        %1288 = vadd.xlane.f32.xlu0 %v1287
        %v1289 = vpop.xlane.xlu0 %1288
        %v1290 = vrcp.pop %v1289
        %v1291 = vmul.f32 %v1289, %v1290
        %v1292 = vsub.f32 1.0, %v1291
        %v1293 = vmul.f32 %v1290, %v1292
        %v1294 = vadd.f32 %v1290, %v1293
        %vm1295 = vweird.f32 %v1289
        %vm1296 = vweird.f32 %v1290
        %vm1297 = vmor %vm1295, %vm1296
        %v1298 = vsel %vm1297, %v1290, %v1294
        %v1299 = vand.u32 2147483647, %v1289
        %vm1300 = vcmp.eq.f32.partialorder %v1299, 8.507059e+37
        %v1301 = vand.u32 %v1289, 2147483648
        %v1302 = vor.u32 1.1754944e-38, %v1301
        %v1303 = vsel %vm1300, %v1302, %v1298
        %v1304 = vmul.f32 %v1286, %v1303
        %v1306 = vsel %vm547, %v1304, 0
        %1308 = vmatpush.msra.mxu0 0.0
        %1309 = vmatpush.msra.mxu0 0.0
        %1310 = vmatpush.msra.mxu0 0.0
        %1311 = vmatpush.msra.mxu0 0.0
        %1312 = vmatpush.msra.mxu0 0.0
        %1313 = vmatpush.msra.mxu0 0.0
        %1314 = vmatpush.msra.mxu0 0.0
        %1315 = vmatpush.msra.mxu0 0.0
        %1316 = vmatpush.msra.mxu0 0.0
        %1317 = vmatpush.msra.mxu0 0.0
        %1318 = vmatpush.msra.mxu0 0.0
        %1319 = vmatpush.msra.mxu0 0.0
        %1320 = vmatpush.msra.mxu0 %v1163
        %1321 = vmatpush.msra.mxu0 %v1160
        %1322 = vmatpush.msra.mxu0 %v1157
        %1323 = vmatpush.msra.mxu0 %v1154
        %1324 = vmatmul.f32.gmra.mxu0 %v1306
        %v1325 = vpop.f32.mrf.mxu0
        %v1326 = vadd.f32 0.0, %v1325
        %1327 = vdwg.mxu0
        %v1328 = vsel %vm669, %v1326, 0.0
        %v1329 = vrot.slane %v1328, 4
        %v1330 = vadd.f32 %v1328, %v1329
        %v1331 = vrot.slane %v1330, 2
        %v1332 = vadd.f32 %v1330, %v1331
        %v1333 = vrot.slane %v1332, 1
        %v1334 = vadd.f32 %v1332, %v1333
        %s1335 = scalar_lea.vmem %s9, 16
        %v1336 = vld [vmem:[%s1335] sm:$0xff]
        %v1338 = vsel %vm669, %v1334, 0
        %1340 = vmatpush.msra.mxu0 0.0
        %1341 = vmatpush.msra.mxu0 0.0
        %1342 = vmatpush.msra.mxu0 0.0
        %1343 = vmatpush.msra.mxu0 0.0
        %1344 = vmatpush.msra.mxu0 0.0
        %1345 = vmatpush.msra.mxu0 0.0
        %1346 = vmatpush.msra.mxu0 0.0
        %1347 = vmatpush.msra.mxu0 0.0
        %1348 = vmatpush.msra.mxu0 0.0
        %1349 = vmatpush.msra.mxu0 0.0
        %1350 = vmatpush.msra.mxu0 0.0
        %1351 = vmatpush.msra.mxu0 0.0
        %1352 = vmatpush.msra.mxu0 0.0
        %1353 = vmatpush.msra.mxu0 0.0
        %1354 = vmatpush.msra.mxu0 0.0
        %1355 = vmatpush.msra.mxu0 %v1336
        %1356 = vmatmul.f32.gmra.mxu0 %v1338
        %v1357 = vpop.f32.mrf.mxu0
        %v1358 = vadd.f32 0.0, %v1357
        %1359 = vdwg.mxu0
        %v1360 = vadd.f32 %v1055, %v1358
        %s1361 = scalar_lea.vmem %s3, 96
        %v1362 = vld [vmem:[%s1361] sm:$0xff]
        %v1363 = vld [vmem:[%s1361 + $0x8] sm:$0xff]
        %v1364 = vld [vmem:[%s1361 + $0x10] sm:$0xff]
        %v1365 = vld [vmem:[%s1361 + $0x18] sm:$0xff]
        %s1366 = scalar_lea.vmem %s4, 3
        %v1367 = vld [vmem:[%s1366] sm:$0x1]
        %v1369 = vperm.slane %v1367, 0
        %1371 = vmatpush.msra.mxu0 0.0
        %1372 = vmatpush.msra.mxu0 0.0
        %1373 = vmatpush.msra.mxu0 0.0
        %1374 = vmatpush.msra.mxu0 0.0
        %1375 = vmatpush.msra.mxu0 0.0
        %1376 = vmatpush.msra.mxu0 0.0
        %1377 = vmatpush.msra.mxu0 0.0
        %1378 = vmatpush.msra.mxu0 0.0
        %1379 = vmatpush.msra.mxu0 0.0
        %1380 = vmatpush.msra.mxu0 0.0
        %1381 = vmatpush.msra.mxu0 0.0
        %1382 = vmatpush.msra.mxu0 0.0
        %1383 = vmatpush.msra.mxu0 %v1365
        %1384 = vmatpush.msra.mxu0 %v1364
        %1385 = vmatpush.msra.mxu0 %v1363
        %1386 = vmatpush.msra.mxu0 %v1362
        %1387 = vmatmul.f32.gmra.mxu0 %v549
        %v1388 = vpop.f32.mrf.mxu0
        %v1389 = vadd.f32 %v1369, %v1388
        %1390 = vdwg.mxu0
        %s1391 = scalar_lea.vmem %s5, 96
        %v1392 = vld [vmem:[%s1391] sm:$0xff]
        %v1393 = vld [vmem:[%s1391 + $0x8] sm:$0xff]
        %v1394 = vld [vmem:[%s1391 + $0x10] sm:$0xff]
        %v1395 = vld [vmem:[%s1391 + $0x18] sm:$0xff]
        %s1396 = scalar_lea.vmem %s6, 3
        %v1397 = vld [vmem:[%s1396] sm:$0x1]
        %v1399 = vperm.slane %v1397, 0
        %1401 = vmatpush.msra.mxu0 0.0
        %1402 = vmatpush.msra.mxu0 0.0
        %1403 = vmatpush.msra.mxu0 0.0
        %1404 = vmatpush.msra.mxu0 0.0
        %1405 = vmatpush.msra.mxu0 0.0
        %1406 = vmatpush.msra.mxu0 0.0
        %1407 = vmatpush.msra.mxu0 0.0
        %1408 = vmatpush.msra.mxu0 0.0
        %1409 = vmatpush.msra.mxu0 0.0
        %1410 = vmatpush.msra.mxu0 0.0
        %1411 = vmatpush.msra.mxu0 0.0
        %1412 = vmatpush.msra.mxu0 0.0
        %1413 = vmatpush.msra.mxu0 %v1395
        %1414 = vmatpush.msra.mxu0 %v1394
        %1415 = vmatpush.msra.mxu0 %v1393
        %1416 = vmatpush.msra.mxu0 %v1392
        %1417 = vmatmul.f32.gmra.mxu0 %v580
        %v1418 = vpop.f32.mrf.mxu0
        %v1419 = vadd.f32 %v1399, %v1418
        %1420 = vmatmul.f32.gmra.mxu0 %v583
        %v1421 = vpop.f32.mrf.mxu0
        %v1422 = vadd.f32 %v1399, %v1421
        %1423 = vmatmul.f32.gmra.mxu0 %v586
        %v1424 = vpop.f32.mrf.mxu0
        %v1425 = vadd.f32 %v1399, %v1424
        %1426 = vmatmul.f32.gmra.mxu0 %v589
        %v1427 = vpop.f32.mrf.mxu0
        %v1428 = vadd.f32 %v1399, %v1427
        %1429 = vdwg.mxu0
        %s1430 = scalar_lea.vmem %s7, 96
        %v1431 = vld [vmem:[%s1430] sm:$0xff]
        %v1432 = vld [vmem:[%s1430 + $0x8] sm:$0xff]
        %v1433 = vld [vmem:[%s1430 + $0x10] sm:$0xff]
        %v1434 = vld [vmem:[%s1430 + $0x18] sm:$0xff]
        %s1435 = scalar_lea.vmem %s8, 3
        %v1436 = vld [vmem:[%s1435] sm:$0x1]
        %v1438 = vperm.slane %v1436, 0
        %1440 = vmatpush.msra.mxu0 0.0
        %1441 = vmatpush.msra.mxu0 0.0
        %1442 = vmatpush.msra.mxu0 0.0
        %1443 = vmatpush.msra.mxu0 0.0
        %1444 = vmatpush.msra.mxu0 0.0
        %1445 = vmatpush.msra.mxu0 0.0
        %1446 = vmatpush.msra.mxu0 0.0
        %1447 = vmatpush.msra.mxu0 0.0
        %1448 = vmatpush.msra.mxu0 0.0
        %1449 = vmatpush.msra.mxu0 0.0
        %1450 = vmatpush.msra.mxu0 0.0
        %1451 = vmatpush.msra.mxu0 0.0
        %1452 = vmatpush.msra.mxu0 %v1434
        %1453 = vmatpush.msra.mxu0 %v1433
        %1454 = vmatpush.msra.mxu0 %v1432
        %1455 = vmatpush.msra.mxu0 %v1431
        %1456 = vmatmul.f32.gmra.mxu0 %v629
        %v1457 = vpop.f32.mrf.mxu0
        %v1458 = vadd.f32 %v1438, %v1457
        %1459 = vmatmul.f32.gmra.mxu0 %v632
        %v1460 = vpop.f32.mrf.mxu0
        %v1461 = vadd.f32 %v1438, %v1460
        %1462 = vmatmul.f32.gmra.mxu0 %v635
        %v1463 = vpop.f32.mrf.mxu0
        %v1464 = vadd.f32 %v1438, %v1463
        %1465 = vmatmul.f32.gmra.mxu0 %v638
        %v1466 = vpop.f32.mrf.mxu0
        %v1467 = vadd.f32 %v1438, %v1466
        %1468 = vdwg.mxu0
        %v1470 = vsel %vm669, %v1389, 0
        %v1473 = vsel %vm669, %v1419, 0
        %v1476 = vsel %vm669, %v1422, 0
        %v1479 = vsel %vm669, %v1425, 0
        %v1482 = vsel %vm669, %v1428, 0
        %1484 = vmatpush.xpose.msra.mxu0 0.0
        %1485 = vmatpush.xpose.msra.mxu0 0.0
        %1486 = vmatpush.xpose.msra.mxu0 0.0
        %1487 = vmatpush.xpose.msra.mxu0 0.0
        %1488 = vmatpush.xpose.msra.mxu0 0.0
        %1489 = vmatpush.xpose.msra.mxu0 0.0
        %1490 = vmatpush.xpose.msra.mxu0 0.0
        %1491 = vmatpush.xpose.msra.mxu0 0.0
        %1492 = vmatpush.xpose.msra.mxu0 0.0
        %1493 = vmatpush.xpose.msra.mxu0 0.0
        %1494 = vmatpush.xpose.msra.mxu0 0.0
        %1495 = vmatpush.xpose.msra.mxu0 0.0
        %1496 = vmatpush.xpose.msra.mxu0 %v1482
        %1497 = vmatpush.xpose.msra.mxu0 %v1479
        %1498 = vmatpush.xpose.msra.mxu0 %v1476
        %1499 = vmatpush.xpose.msra.mxu0 %v1473
        %1500 = vmatmul.f32.gmra.mxu0 %v1470
        %v1501 = vpop.f32.mrf.mxu0
        %v1502 = vadd.f32 0.0, %v1501
        %1503 = vdwg.mxu0
        %v1504 = vmul.f32 %v1502, 0.35355338
        %v1505 = vsel %vm547, %v1504, -inf
        %1506 = vmax.xlane.f32.xlu0 %v1505
        %v1507 = vpop.xlane.xlu0 %1506
        %vm1508 = vcmp.eq.f32.partialorder %v1504, %v1507
        %v1509 = vsel %vm1508, -inf, %v1504
        %v1510 = vsel %vm547, %v1509, -inf
        %1511 = vmax.xlane.f32.xlu0 %v1510
        %v1512 = vpop.xlane.xlu0 %1511
        %vm1513 = vcmp.eq.f32.partialorder %v1509, %v1512
        %v1514 = vsel %vm1513, -inf, %v1509
        %v1515 = vsel %vm547, %v1514, -inf
        %1516 = vmax.xlane.f32.xlu0 %v1515
        %v1517 = vpop.xlane.xlu0 %1516
        %vm1518 = vcmp.eq.f32.partialorder %v1514, %v1517
        %v1519 = vsel %vm1518, -inf, %v1514
        %v1520 = vsel %vm547, %v1519, -inf
        %1521 = vmax.xlane.f32.xlu0 %v1520
        %v1522 = vpop.xlane.xlu0 %1521
        %vm1523 = vcmp.eq.f32.partialorder %v1519, %v1522
        %v1524 = vsel %vm1523, -inf, %v1519
        %v1525 = vsel %vm547, %v1524, -inf
        %1526 = vmax.xlane.f32.xlu0 %v1525
        %v1527 = vpop.xlane.xlu0 %1526
        %vm1528 = vcmp.eq.f32.partialorder %v1524, %v1527
        %v1529 = vsel %vm1528, -inf, %v1524
        %v1530 = vsel %vm547, %v1529, -inf
        %1531 = vmax.xlane.f32.xlu0 %v1530
        %v1532 = vpop.xlane.xlu0 %1531
        %vm1533 = vcmp.eq.f32.partialorder %v1529, %v1532
        %v1534 = vsel %vm1533, -inf, %v1529
        %v1535 = vsel %vm547, %v1534, -inf
        %1536 = vmax.xlane.f32.xlu0 %v1535
        %v1537 = vpop.xlane.xlu0 %1536
        %vm1538 = vcmp.eq.f32.partialorder %v1534, %v1537
        %v1539 = vsel %vm1538, -inf, %v1534
        %v1540 = vsel %vm547, %v1539, -inf
        %1541 = vmax.xlane.f32.xlu0 %v1540
        %v1542 = vpop.xlane.xlu0 %1541
        %vm1543 = vcmp.eq.f32.partialorder %v1539, %v1542
        %v1544 = vsel %vm1543, -inf, %v1539
        %v1545 = vsel %vm547, %v1544, -inf
        %1546 = vmax.xlane.f32.xlu0 %v1545
        %v1547 = vpop.xlane.xlu0 %1546
        %vm1548 = vcmp.eq.f32.partialorder %v1544, %v1547
        %v1549 = vsel %vm1548, -inf, %v1544
        %v1550 = vsel %vm547, %v1549, -inf
        %1551 = vmax.xlane.f32.xlu0 %v1550
        %v1552 = vpop.xlane.xlu0 %1551
        %vm1553 = vcmp.eq.f32.partialorder %v1549, %v1552
        %v1554 = vsel %vm1553, -inf, %v1549
        %v1555 = vsel %vm547, %v1554, -inf
        %1556 = vmax.xlane.f32.xlu0 %v1555
        %v1557 = vpop.xlane.xlu0 %1556
        %vm1558 = vcmp.eq.f32.partialorder %v1554, %v1557
        %v1559 = vsel %vm1558, -inf, %v1554
        %v1560 = vsel %vm547, %v1559, -inf
        %1561 = vmax.xlane.f32.xlu0 %v1560
        %v1562 = vpop.xlane.xlu0 %1561
        %vm1563 = vcmp.eq.f32.partialorder %v1559, %v1562
        %v1564 = vsel %vm1563, -inf, %v1559
        %v1565 = vsel %vm547, %v1564, -inf
        %1566 = vmax.xlane.f32.xlu0 %v1565
        %v1567 = vpop.xlane.xlu0 %1566
        %vm1568 = vcmp.eq.f32.partialorder %v1564, %v1567
        %v1569 = vsel %vm1568, -inf, %v1564
        %v1570 = vsel %vm547, %v1569, -inf
        %1571 = vmax.xlane.f32.xlu0 %v1570
        %v1572 = vpop.xlane.xlu0 %1571
        %vm1573 = vcmp.eq.f32.partialorder %v1569, %v1572
        %v1574 = vsel %vm1573, -inf, %v1569
        %v1575 = vsel %vm547, %v1574, -inf
        %1576 = vmax.xlane.f32.xlu0 %v1575
        %v1577 = vpop.xlane.xlu0 %1576
        %vm1578 = vcmp.eq.f32.partialorder %v1574, %v1577
        %v1579 = vsel %vm1578, -inf, %v1574
        %v1580 = vsel %vm547, %v1579, -inf
        %1581 = vmax.xlane.f32.xlu0 %v1580
        %v1582 = vpop.xlane.xlu0 %1581
        %vm1583 = vcmp.eq.f32.partialorder %v1579, %v1582
        %v1584 = vsel %vm1583, -inf, %v1579
        %v1585 = vsel %vm547, %v1584, -inf
        %1586 = vmax.xlane.f32.xlu0 %v1585
        %v1587 = vpop.xlane.xlu0 %1586
        %vm1588 = vcmp.eq.f32.partialorder %v1584, %v1587
        %v1589 = vsel %vm1588, -inf, %v1584
        %v1590 = vsel %vm547, %v1589, -inf
        %1591 = vmax.xlane.f32.xlu0 %v1590
        %v1592 = vpop.xlane.xlu0 %1591
        %vm1593 = vcmp.eq.f32.partialorder %v1589, %v1592
        %v1594 = vsel %vm1593, -inf, %v1589
        %v1595 = vsel %vm547, %v1594, -inf
        %1596 = vmax.xlane.f32.xlu0 %v1595
        %v1597 = vpop.xlane.xlu0 %1596
        %vm1598 = vcmp.eq.f32.partialorder %v1594, %v1597
        %v1599 = vsel %vm1598, -inf, %v1594
        %v1600 = vsel %vm547, %v1599, -inf
        %1601 = vmax.xlane.f32.xlu0 %v1600
        %v1602 = vpop.xlane.xlu0 %1601
        %vm1603 = vcmp.eq.f32.partialorder %v1599, %v1602
        %v1604 = vsel %vm1603, -inf, %v1599
        %v1605 = vsel %vm547, %v1604, -inf
        %1606 = vmax.xlane.f32.xlu0 %v1605
        %v1607 = vpop.xlane.xlu0 %1606
        %vm1608 = vcmp.eq.f32.partialorder %v1604, %v1607
        %v1609 = vsel %vm1608, -inf, %v1604
        %v1610 = vsel %vm547, %v1609, -inf
        %1611 = vmax.xlane.f32.xlu0 %v1610
        %v1612 = vpop.xlane.xlu0 %1611
        %vm1613 = vcmp.eq.f32.partialorder %v1609, %v1612
        %v1614 = vsel %vm1613, -inf, %v1609
        %v1615 = vsel %vm547, %v1614, -inf
        %1616 = vmax.xlane.f32.xlu0 %v1615
        %v1617 = vpop.xlane.xlu0 %1616
        %vm1618 = vcmp.eq.f32.partialorder %v1614, %v1617
        %v1619 = vsel %vm1618, -inf, %v1614
        %v1620 = vsel %vm547, %v1619, -inf
        %1621 = vmax.xlane.f32.xlu0 %v1620
        %v1622 = vpop.xlane.xlu0 %1621
        %vm1623 = vcmp.eq.f32.partialorder %v1619, %v1622
        %v1624 = vsel %vm1623, -inf, %v1619
        %v1625 = vsel %vm547, %v1624, -inf
        %1626 = vmax.xlane.f32.xlu0 %v1625
        %v1627 = vpop.xlane.xlu0 %1626
        %vm1628 = vcmp.ge.f32.partialorder %v1504, %v1627
        %v1629 = vsel %vm1628, %v1504, 0.0
        %v1630 = vsel %vm547, %v1629, -inf
        %1631 = vmax.xlane.f32.xlu0 %v1630
        %v1632 = vpop.xlane.xlu0 %1631
        %v1633 = vsub.f32 %v1629, %v1632
        %v1634 = vmul.f32 %v1633, 1.442695
        %v1635 = vpow.pop %v1634
        %v1636 = vsel %vm547, %v1635, 0.0
        %1637 = vadd.xlane.f32.xlu0 %v1636
        %v1638 = vpop.xlane.xlu0 %1637
        %v1639 = vrcp.pop %v1638
        %v1640 = vmul.f32 %v1638, %v1639
        %v1641 = vsub.f32 1.0, %v1640
        %v1642 = vmul.f32 %v1639, %v1641
        %v1643 = vadd.f32 %v1639, %v1642
        %vm1644 = vweird.f32 %v1638
        %vm1645 = vweird.f32 %v1639
        %vm1646 = vmor %vm1644, %vm1645
        %v1647 = vsel %vm1646, %v1639, %v1643
        %v1648 = vand.u32 2147483647, %v1638
        %vm1649 = vcmp.eq.f32.partialorder %v1648, 8.507059e+37
        %v1650 = vand.u32 %v1638, 2147483648
        %v1651 = vor.u32 1.1754944e-38, %v1650
        %v1652 = vsel %vm1649, %v1651, %v1647
        %v1653 = vmul.f32 %v1635, %v1652
        %v1655 = vsel %vm547, %v1653, 0
        %1657 = vmatpush.msra.mxu0 0.0
        %1658 = vmatpush.msra.mxu0 0.0
        %1659 = vmatpush.msra.mxu0 0.0
        %1660 = vmatpush.msra.mxu0 0.0
        %1661 = vmatpush.msra.mxu0 0.0
        %1662 = vmatpush.msra.mxu0 0.0
        %1663 = vmatpush.msra.mxu0 0.0
        %1664 = vmatpush.msra.mxu0 0.0
        %1665 = vmatpush.msra.mxu0 0.0
        %1666 = vmatpush.msra.mxu0 0.0
        %1667 = vmatpush.msra.mxu0 0.0
        %1668 = vmatpush.msra.mxu0 0.0
        %1669 = vmatpush.msra.mxu0 %v1467
        %1670 = vmatpush.msra.mxu0 %v1464
        %1671 = vmatpush.msra.mxu0 %v1461
        %1672 = vmatpush.msra.mxu0 %v1458
        %1673 = vmatmul.f32.gmra.mxu0 %v1655
        %v1674 = vpop.f32.mrf.mxu0
        %v1675 = vadd.f32 0.0, %v1674
        %1676 = vdwg.mxu0
        %v1677 = vsel %vm669, %v1675, 0.0
        %v1678 = vrot.slane %v1677, 4
        %v1679 = vadd.f32 %v1677, %v1678
        %v1680 = vrot.slane %v1679, 2
        %v1681 = vadd.f32 %v1679, %v1680
        %v1682 = vrot.slane %v1681, 1
        %v1683 = vadd.f32 %v1681, %v1682
        %s1684 = scalar_lea.vmem %s9, 24
        %v1685 = vld [vmem:[%s1684] sm:$0xff]
        %v1687 = vsel %vm669, %v1683, 0
        %1689 = vmatpush.msra.mxu0 0.0
        %1690 = vmatpush.msra.mxu0 0.0
        %1691 = vmatpush.msra.mxu0 0.0
        %1692 = vmatpush.msra.mxu0 0.0
        %1693 = vmatpush.msra.mxu0 0.0
        %1694 = vmatpush.msra.mxu0 0.0
        %1695 = vmatpush.msra.mxu0 0.0
        %1696 = vmatpush.msra.mxu0 0.0
        %1697 = vmatpush.msra.mxu0 0.0
        %1698 = vmatpush.msra.mxu0 0.0
        %1699 = vmatpush.msra.mxu0 0.0
        %1700 = vmatpush.msra.mxu0 0.0
        %1701 = vmatpush.msra.mxu0 0.0
        %1702 = vmatpush.msra.mxu0 0.0
        %1703 = vmatpush.msra.mxu0 0.0
        %1704 = vmatpush.msra.mxu0 %v1685
        %1705 = vmatmul.f32.gmra.mxu0 %v1687
        %v1706 = vpop.f32.mrf.mxu0
        %v1707 = vadd.f32 0.0, %v1706
        %1708 = vdwg.mxu0
        %v1709 = vadd.f32 %v1360, %v1707
        %v1710 = vld [vmem:[%s10] sm:$0x1]
        %v1711 = vadd.f32 %v1709, %v1710
        %vm1712 = vcmask 24576
        %v1713 = vsel %vm1712, %v1711, -inf
        %1714 = vmax.xlane.f32.xlu0 %v1713
        %v1715 = vpop.xlane.xlu0 %1714
        %v1716 = vsub.f32 %v1711, %v1715
        %v1717 = vmul.f32 %v1716, 1.442695
        %v1718 = vpow.pop %v1717
        %v1719 = vsel %vm1712, %v1718, 0.0
        %1720 = vadd.xlane.f32.xlu0 %v1719
        %v1721 = vpop.xlane.xlu0 %1720
        %v1722 = vrcp.pop %v1721
        %v1723 = vmul.f32 %v1721, %v1722
        %v1724 = vsub.f32 1.0, %v1723
        %v1725 = vmul.f32 %v1722, %v1724
        %v1726 = vadd.f32 %v1722, %v1725
        %vm1727 = vweird.f32 %v1721
        %vm1728 = vweird.f32 %v1722
        %vm1729 = vmor %vm1727, %vm1728
        %v1730 = vsel %vm1729, %v1722, %v1726
        %v1731 = vand.u32 2147483647, %v1721
        %vm1732 = vcmp.eq.f32.partialorder %v1731, 8.507059e+37
        %v1733 = vand.u32 %v1721, 2147483648
        %v1734 = vor.u32 1.1754944e-38, %v1733
        %v1735 = vsel %vm1732, %v1734, %v1730
        %v1736 = vmul.f32 %v1718, %v1735
        %s1738 = vtos %v1736
        %v1739 = vstv %s1738
        %v1741 = vmul.f32 %v756, %v1739
        %v1742 = vadd.f32 %v1741, 0.0
        %1743 = vrot.lane.b32.xlu0 %v1736, 127
        %v1744 = vpop.permute.xlu0 %1743
        %s1745 = vtos %v1744
        %v1746 = vstv %s1745
        %v1748 = vmul.f32 %v1000, %v1746
        %v1749 = vadd.f32 %v1742, %v1748
        %1750 = vrot.lane.b32.xlu0 %v1736, 126
        %v1751 = vpop.permute.xlu0 %1750
        %s1752 = vtos %v1751
        %v1753 = vstv %s1752
        %v1755 = vmul.f32 %v1326, %v1753
        %v1756 = vadd.f32 %v1749, %v1755
        %1757 = vrot.lane.b32.xlu0 %v1736, 125
        %v1758 = vpop.permute.xlu0 %1757
        %s1759 = vtos %v1758
        %v1760 = vstv %s1759
        %v1762 = vmul.f32 %v1675, %v1760
        %v1763 = vadd.f32 %v1756, %v1762
        %v1764 = vld [vmem:[%s11] sm:$0xff]
        %v1765 = vld [vmem:[%s12] sm:$0x1]
        %v1767 = vperm.slane %v1765, 0
        %v1770 = vsel %vm669, %v1763, 0
        %1772 = vmatpush.msra.mxu0 0.0
        %1773 = vmatpush.msra.mxu0 0.0
        %1774 = vmatpush.msra.mxu0 0.0
        %1775 = vmatpush.msra.mxu0 0.0
        %1776 = vmatpush.msra.mxu0 0.0
        %1777 = vmatpush.msra.mxu0 0.0
        %1778 = vmatpush.msra.mxu0 0.0
        %1779 = vmatpush.msra.mxu0 0.0
        %1780 = vmatpush.msra.mxu0 0.0
        %1781 = vmatpush.msra.mxu0 0.0
        %1782 = vmatpush.msra.mxu0 0.0
        %1783 = vmatpush.msra.mxu0 0.0
        %1784 = vmatpush.msra.mxu0 0.0
        %1785 = vmatpush.msra.mxu0 0.0
        %1786 = vmatpush.msra.mxu0 0.0
        %1787 = vmatpush.msra.mxu0 %v1764
        %1788 = vmatmul.f32.gmra.mxu0 %v1770
        %v1789 = vpop.f32.mrf.mxu0
        %v1790 = vadd.f32 %v1767, %v1789
        %1791 = vdwg.mxu0
        %v1792 = vadd.f32 %v530, %v1790
        %v1793 = vsel %vm547, %v1792, 0.0
        %1794 = vadd.xlane.f32.xlu0 %v1793
        %v1795 = vpop.xlane.xlu0 %1794
        %v1796 = vrcp.pop 32.0
        %v1797 = vmul.f32 32.0, %v1796
        %v1798 = vsub.f32 1.0, %v1797
        %v1799 = vmul.f32 %v1796, %v1798
        %v1800 = vadd.f32 %v1796, %v1799
        %vm1801 = vweird.f32 %v1796
        %v1802 = vsel %vm1801, %v1796, %v1800
        %v1803 = vmul.f32 %v1795, %v1802
        %v1804 = vsub.f32 %v1792, %v1803
        %v1805 = vmul.f32 %v1804, %v1804
        %v1806 = vsel %vm547, %v1805, 0.0
        %1807 = vadd.xlane.f32.xlu0 %v1806
        %v1808 = vpop.xlane.xlu0 %1807
        %v1809 = vmul.f32 %v1808, %v1802
        %v1810 = vadd.f32 %v1809, 1e-05
        %v1811 = vrsqrt.pop %v1810
        %v1812 = vmul.f32 %v1811, %v1810
        %v1813 = vmul.f32 %v1812, %v1811
        %v1814 = vmul.f32 0.5, %v1813
        %v1815 = vsub.f32 1.5, %v1814
        %v1816 = vmul.f32 %v1811, %v1815
        %vm1817 = vweird.f32 %v1810
        %vm1818 = vweird.f32 %v1811
        %vm1819 = vmor %vm1817, %vm1818
        %v1820 = vsel %vm1819, %v1811, %v1816
        %v1821 = vmul.f32 %v1804, %v1820
        %v1822 = vld [vmem:[%s13] sm:$0x1]
        %v1824 = vperm.slane %v1822, 0
        %v1826 = vmul.f32 %v1821, %v1824
        %v1827 = vld [vmem:[%s14] sm:$0x1]
        %v1829 = vperm.slane %v1827, 0
        %v1831 = vadd.f32 %v1826, %v1829
        %1832 = vst.msk [vmem:[%s515] sm:$0xff] %vm547, %v1831
        %s1833 = sand.u32 %s367, 1
        %s1834 = scalar_lea.sflag [#allocation3], %s1833
        %s1835 = sand.u32 %s367, 1
        %s1836 = smul.addr %s1835, 8
        %s1837 = scalar_lea.vmem [#allocation2], %s1836
        // Predicated region
        $region81: #{tpu_custom_call.1} parent=79 // pred_check
          %p1838 = pneg %p377
        $region82: #{tpu_custom_call.1} parent=79 // pred_check_branch
          %1840 = sbr.rel (%p1838) target = $region84
        $region83: #{tpu_custom_call.1} parent=79 // pred_region
          %1842 = vsyncadd %s1834, 0
          %s1843 = smul.addr %s29, 8
          %s1844 = scalar_lea.hbm %s15, %s1843
          %s1846 = sshll.u32 %s1837, 4
          %s1847 = int_to_ptr.vmem [resolvable:$true] %s1846
          %s1848 = sshll.u32 %s1844, 4
          %s1849 = int_to_ptr.hbm [resolvable:$true] %s1848
          %1851 = dma.vmem_to_hbm [thread:$0]  %s1847, 128, %s1849, %s1834
        $region84: #{tpu_custom_call.1} parent=79 // pred_fallthru
          _
      $region80: #{tpu_custom_call.1} parent=5 // pred_fallthru
        _
      %p1852 = scmp.le.s32.totalorder 2, %s24
      // Predicated region
      $region85: #{tpu_custom_call.1} parent=5 // pred_check
        %p1853 = pneg %p1852
      $region86: #{tpu_custom_call.1} parent=5 // pred_check_branch
        %1855 = sbr.rel (%p1853) target = $region88
      $region87: #{tpu_custom_call.1} parent=5 // pred_region
        %s1856 = ssub.s32 %s24, 2
        // Predicated region
        $region89: #{tpu_custom_call.1} parent=87 // pred_check
          %p1857 = pneg %p383
        $region90: #{tpu_custom_call.1} parent=87 // pred_check_branch
          %1859 = sbr.rel (%p1857) target = $region92
        $region91: #{tpu_custom_call.1} parent=87 // pred_region
          %s1860 = sand.u32 %s368, 1
          %s1861 = scalar_lea.sflag [#allocation3], %s1860
          %s1862 = sand.u32 %s368, 1
          %s1863 = smul.addr %s1862, 8
          %s1864 = scalar_lea.vmem [#allocation2], %s1863
          %1866 = dma.done %s1861, 128
        $region92: #{tpu_custom_call.1} parent=87 // pred_fallthru
          _
      $region88: #{tpu_custom_call.1} parent=5 // pred_fallthru
        _
    $region6: #{tpu_custom_call.1} parent=1 // loop_footer
      %s28 = sadd.s32 1, %s24
    $region7: #{tpu_custom_call.1} parent=1 // loop_footer_branch
      %23 = sbr.rel target = $region3
    $region8: #{tpu_custom_call.1} parent=1 // loop_exit
      _
    %1867 = vsyncpa [#allocation3], 1
    %s1868 = scalar_lea.sflag [#allocation3], 1
    %1869 = vsyncpa %s1868, 1

</llo_original>
